<compile_context>
chip_gen: v7x
topology: tpu7x:2x2x1
jax: 0.10.0
libtpu: 0.0.40
codegen_flags: <defaults>
</compile_context>

<pallas_src>
import functools

import jax
import jax.numpy as jnp
from jax import lax
from jax.experimental import pallas as pl
from jax.experimental.pallas import tpu as pltpu


# ----------------------------- rotary helpers -----------------------------

def _rotate_half(t):
    r = t.shape[-1]
    t1 = t[..., : r // 2]
    t2 = t[..., r // 2:]
    return jnp.concatenate([-t2, t1], axis=-1)


def _apply_rope(t, freqs):
    return t * jnp.cos(freqs) + _rotate_half(t) * jnp.sin(freqs)


def rotary_freqs(coords, rot_dim, min_freq=1.0 / 64, scale=32.0):
    # RotaryEmbedding(dim_head//2, scale=32).forward(coords)
    inv_freq = 1.0 / (10000.0 ** (jnp.arange(0, rot_dim, 2, dtype=jnp.float32) / rot_dim))
    t = coords.astype(jnp.float32) * (scale / min_freq)
    freqs = t[..., None] * inv_freq                       # (..., rot_dim//2)
    return jnp.concatenate([freqs, freqs], axis=-1)       # (..., rot_dim)


# ----------------------------- Pallas kernel ------------------------------

def _attn_pool_kernel(x_ref, f_ref, wqkv_ref, wout_ref, bout_ref, o_ref,
                      *, K, heads, dim_head, scale):
    """One grid step processes G pivot groups, each with K neighbors.

    x_ref   : (K, G, Cin)      bf16   features + rel-pos, neighbor-major
    f_ref   : (K, G, dim_head) f32    rotary phases [fx | fy]
    wqkv_ref: (Cin, 3*inner)   bf16
    wout_ref: (inner, dim)     bf16
    bout_ref: (1, dim)         f32
    o_ref   : (G, dim)         f32    K-mean pooled output per group
    """
    G = o_ref.shape[0]
    cin = x_ref.shape[-1]
    inner = heads * dim_head
    half = dim_head // 2
    quarter = half // 2
    KG = K * G

    # Leading-dim collapse (G multiple of sublane tile) -> zero-copy dense 2-D operands.
    x = x_ref[...].reshape(KG, cin)
    f = f_ref[...].reshape(KG, dim_head)

    # ---- fused qkv projection for all K neighbors of all G groups (MXU, bf16 -> f32 acc) ----
    qkv = jnp.dot(x, wqkv_ref[...], preferred_element_type=jnp.float32)   # (KG, 3*inner)

    # rotary phases: one cos/sin per (neighbor, group), shared across heads and q/k (EUP)
    cos = jnp.cos(f)                                                      # (KG, dim_head)
    sin = jnp.sin(f)

    def rope(t):
        # 2-D rotary: t = [t_x | t_y]; rotate_half applied within each half.
        rot = jnp.concatenate(
            [-t[:, quarter:half],    t[:, :quarter],
             -t[:, half + quarter:], t[:, half:half + quarter]], axis=-1)
        return t * cos + rot * sin

    # ---- per-head attention; the mean over the K query positions is folded into the
    # ---- attention weights (it commutes with the linear ops downstream).
    inv_k = 1.0 / K
    head_outs = []
    for h in range(heads):
        q_h = rope(qkv[:, h * dim_head:(h + 1) * dim_head])               # (KG, dim_head)
        k_h = rope(qkv[:, inner + h * dim_head: inner + (h + 1) * dim_head])
        v_h = qkv[:, 2 * inner + h * dim_head: 2 * inner + (h + 1) * dim_head]

        q_k = [q_h[kk * G:(kk + 1) * G] for kk in range(K)]               # sublane slices
        k_k = [k_h[kk * G:(kk + 1) * G] for kk in range(K)]
        v_k = [v_h[kk * G:(kk + 1) * G] for kk in range(K)]

        # w_acc[kj] = sum_kq softmax_kq[kj]   (kept as K narrow (G,1) pieces)
        w_acc = None
        for kq in range(K):
            logits = [jnp.sum(q_k[kq] * k_k[kj], axis=-1, keepdims=True) * scale
                      for kj in range(K)]
            mx = logits[0]
            for kj in range(1, K):
                mx = jnp.maximum(mx, logits[kj])
            e = [jnp.exp(l - mx) for l in logits]
            denom = e[0]
            for kj in range(1, K):
                denom = denom + e[kj]
            inv = pl.reciprocal(denom, approx=True)
            contrib = [ek * inv for ek in e]
            if w_acc is None:
                w_acc = contrib
            else:
                w_acc = [a + c for a, c in zip(w_acc, contrib)]

        out_h = (w_acc[0] * inv_k) * v_k[0]
        for kj in range(1, K):
            out_h = out_h + (w_acc[kj] * inv_k) * v_k[kj]
        head_outs.append(out_h)                                            # (G, dim_head)

    merged = jnp.concatenate(head_outs, axis=-1)                           # (G, inner)

    # output projection + bias (MXU)
    out = jnp.dot(merged.astype(wout_ref.dtype), wout_ref[...],
                  preferred_element_type=jnp.float32)                      # (G, dim)
    o_ref[...] = out + bout_ref[...]
    # TODO(synk): for dim << 128 a lane-dense output refold (or transposed store) would make the
    # final store unmasked; skipped because the in-kernel relayout would cost more than the
    # masked vst (output is a small fraction of this block's traffic).


_G_TARGET = 512   # groups per grid step; a few MiB live VMEM at K=5 -> safe for v7x's 64 MiB


def _choose_tiling(btn, target=_G_TARGET):
    """Pick group block G (multiple of 16 for bf16 sublane packing) and padded group count."""
    btn16 = -(-btn // 16) * 16
    if btn16 <= target:
        return btn16, btn16
    divs = [g for g in range(16, target + 1, 16) if btn16 % g == 0]
    if divs and divs[-1] >= target // 2:
        return divs[-1], btn16
    btn_pad = -(-btn // target) * target
    return target, btn_pad


def attn_pool_pallas(x_cat, fx, fy, w_qkv, w_out, b_out, *, heads, dim_head,
                     matmul_dtype=jnp.bfloat16):
    BTN, K, Cin = x_cat.shape
    dim = w_out.shape[1]
    inner = heads * dim_head
    scale = dim_head ** (-0.5)
    assert dim_head % 4 == 0, "rotary split requires dim_head % 4 == 0"

    G, BTN_pad = _choose_tiling(BTN)

    # Neighbor-major (K, BTN_pad, C) layout: every kernel slab is a dense 2-D block with full
    # sublane occupancy; the kernel collapses (K, G) -> K*G tile-aligned (no in-kernel copy).
    def to_k_major(a):
        a = jnp.swapaxes(a, 0, 1)                                   # (K, BTN, C)
        if BTN_pad != BTN:
            a = jnp.pad(a, ((0, 0), (0, BTN_pad - BTN), (0, 0)))
        return a

    x3 = to_k_major(x_cat).astype(matmul_dtype)                     # (K, BTN_pad, Cin)
    f3 = to_k_major(jnp.concatenate([fx, fy], axis=-1)).astype(jnp.float32)

    kernel = functools.partial(_attn_pool_kernel, K=K, heads=heads,
                               dim_head=dim_head, scale=scale)
    out = pl.pallas_call(
        kernel,
        out_shape=jax.ShapeDtypeStruct((BTN_pad, dim), jnp.float32),
        grid_spec=pltpu.PrefetchScalarGridSpec(
            num_scalar_prefetch=0,
            grid=(BTN_pad // G,),
            in_specs=[
                pl.BlockSpec((K, G, Cin), lambda i: (0, i, 0)),
                pl.BlockSpec((K, G, dim_head), lambda i: (0, i, 0)),
                pl.BlockSpec((Cin, 3 * inner), lambda i: (0, 0)),
                pl.BlockSpec((inner, dim), lambda i: (0, 0)),
                pl.BlockSpec((1, dim), lambda i: (0, 0)),
            ],
            out_specs=pl.BlockSpec((G, dim), lambda i: (i, 0)),
        ),
        compiler_params=pltpu.CompilerParams(
            # BTN axis is fully independent -> megacore-shardable.
            dimension_semantics=("parallel",),
            vmem_limit_bytes=32 * 1024 * 1024),
    )(x3, f3, w_qkv.astype(matmul_dtype), w_out.astype(matmul_dtype),
      b_out.astype(jnp.float32))
    return out[:BTN]


# ----------------------------- JAX glue (fps / knn / gather) --------------

def fps(pos, n_samples):
    # deterministic farthest point sampling, start at index 0
    # TODO(synk): torch_geometric.fps uses a random start point; deterministic start used here.
    sel0 = jnp.zeros((n_samples,), jnp.int32)
    d0 = jnp.sum((pos - pos[0]) ** 2, axis=-1)

    def body(i, carry):
        sel, dists = carry
        nxt = jnp.argmax(dists).astype(jnp.int32)
        sel = sel.at[i].set(nxt)
        dists = jnp.minimum(dists, jnp.sum((pos - pos[nxt]) ** 2, axis=-1))
        return sel, dists

    sel, _ = lax.fori_loop(1, n_samples, body, (sel0, d0))
    return sel


def knn_idx(x1, x2, k):
    # same math as the reference knn(): largest of negative squared distance
    inner = -2.0 * jnp.einsum('bmc,bnc->bmn', x1, x2)
    xx = jnp.sum(x1 ** 2, axis=-1, keepdims=True)
    yy = jnp.sum(x2 ** 2, axis=-1, keepdims=True)
    pdist = -xx - inner - jnp.swapaxes(yy, 1, 2)
    _, idx = lax.top_k(pdist, k)
    return idx


def _prepare_groups(x, pos, pooling_ratio, dim_head):
    b, t, n, c = x.shape
    n_piv = n // pooling_ratio
    k_nbr = pooling_ratio + 1

    piv_sel = jax.vmap(lambda p: fps(p, n_piv))(pos)                    # (b, n_piv)
    pivot_pos = jax.vmap(lambda p, s: p[s])(pos, piv_sel)               # (b, n_piv, 2)
    nbr = knn_idx(pivot_pos, pos, k_nbr)                                # (b, n_piv, k)

    grouped_x = jax.vmap(lambda xb, ib: xb[:, ib, :])(x, nbr)           # (b, t, n_piv, k, c)
    grouped_pos = jax.vmap(lambda pb, ib: pb[ib])(pos, nbr)             # (b, n_piv, k, 2)
    grouped_pos = grouped_pos - pivot_pos[:, :, None, :]
    gp_t = jnp.broadcast_to(grouped_pos[:, None], (b, t, n_piv, k_nbr, 2))

    x_cat = jnp.concatenate([grouped_x, gp_t], axis=-1)                 # (b,t,n_piv,k,c+2)
    BTN = b * t * n_piv
    x_cat = x_cat.reshape(BTN, k_nbr, c + 2).astype(jnp.float32)

    rot = dim_head // 2
    fx = rotary_freqs(gp_t[..., 0].reshape(BTN, k_nbr), rot)            # (BTN, k, rot)
    fy = rotary_freqs(gp_t[..., 1].reshape(BTN, k_nbr), rot)
    return x_cat, fx, fy, pivot_pos, (b, t, n_piv)


def attentive_pooling_forward(x, pos, w_qkv, w_out, b_out, *,
                              heads, dim_head, pooling_ratio):
    x_cat, fx, fy, pivot_pos, (b, t, n_piv) = _prepare_groups(x, pos, pooling_ratio, dim_head)
    out = attn_pool_pallas(x_cat, fx, fy, w_qkv, w_out, b_out,
                           heads=heads, dim_head=dim_head)
    dim = w_out.shape[1]
    return out.reshape(b, t, n_piv, dim), pivot_pos


# ----------------------------- pure-JAX reference -------------------------

def _ref_attention(x_cat, fx, fy, w_qkv, w_out, b_out, heads, dim_head):
    BTN, K, _ = x_cat.shape
    inner = heads * dim_head
    half = dim_head // 2
    scale = dim_head ** (-0.5)
    hp = lax.Precision.HIGHEST
    qkv = jnp.dot(x_cat, w_qkv, precision=hp)
    q, k, v = jnp.split(qkv, 3, axis=-1)

    def sh(t):
        return t.reshape(BTN, K, heads, dim_head).transpose(0, 2, 1, 3)

    q, k, v = sh(q), sh(k), sh(v)
    fxe, fye = fx[:, None], fy[:, None]

    def rope2d(t):
        return jnp.concatenate([_apply_rope(t[..., :half], fxe),
                                _apply_rope(t[..., half:], fye)], axis=-1)

    q, k = rope2d(q), rope2d(k)
    dots = jnp.einsum('bhkd,bhjd->bhkj', q, k, precision=hp) * scale
    attn = jax.nn.softmax(dots, axis=-1)
    out = jnp.einsum('bhkj,bhjd->bhkd', attn, v, precision=hp)
    out = out.transpose(0, 2, 1, 3).reshape(BTN, K, inner)
    out = jnp.dot(out, w_out, precision=hp) + b_out
    return out.mean(axis=1)


# ----------------------------- main ----------------------------------------

if __name__ == "__main__":
    key = jax.random.PRNGKey(0)
    b, t, n, dim = 2, 2, 16, 32
    heads, dim_head, pooling_ratio = 2, 16, 4
    inner = heads * dim_head
    c_in = dim + 2

    k1, k2, k3, k4 = jax.random.split(key, 4)
    x = jax.random.normal(k1, (b, t, n, dim), jnp.float32)
    pos = jax.random.uniform(k2, (b, n, 2), jnp.float32)

    # deterministic "xavier-normal"-ish parameter init (to_qkv has no bias; to_out has bias)
    w_qkv = jax.random.normal(k3, (c_in, 3 * inner), jnp.float32) * (2.0 / (c_in + 3 * inner)) ** 0.5
    w_out = jax.random.normal(k4, (inner, dim), jnp.float32) * (2.0 / (inner + dim)) ** 0.5
    b_out = jnp.zeros((1, dim), jnp.float32)
    # nn.Dropout(p=0.0) is an identity at inference.

    out, pivot_pos = attentive_pooling_forward(
        x, pos, w_qkv, w_out, b_out,
        heads=heads, dim_head=dim_head, pooling_ratio=pooling_ratio)
    out = jax.block_until_ready(out)
    pivot_pos = jax.block_until_ready(pivot_pos)

    # correctness check against a full-precision pure-JAX reference of the attention hot path;
    # the kernel uses bf16 MXU operands (f32 accumulation), so compare at a bf16-appropriate
    # tolerance (any logic/indexing bug produces O(1) errors and is still caught).
    x_cat, fx, fy, _, _ = _prepare_groups(x, pos, pooling_ratio, dim_head)
    ref = _ref_attention(x_cat, fx, fy, w_qkv, w_out, b_out, heads, dim_head)
    ref = ref.reshape(b, t, n // pooling_ratio, dim)
    assert out.shape == (b, t, n // pooling_ratio, dim)
    assert pivot_pos.shape == (b, n // pooling_ratio, 2)
    assert jnp.allclose(out, ref, rtol=5e-2, atol=5e-2), "Pallas kernel mismatch vs reference"

    print("KERNEL_OK")
</pallas_src>

<mosaic_0001>
module attributes {stable_mosaic.version = 11 : i64} {
  func.func @_attn_pool_kernel(%arg0: i32, %arg1: memref<5x16x34xbf16, #tpu.memory_space<vmem>>, %arg2: memref<5x16x16xf32, #tpu.memory_space<vmem>>, %arg3: memref<34x96xbf16, #tpu.memory_space<vmem>>, %arg4: memref<32x32xbf16, #tpu.memory_space<vmem>>, %arg5: memref<1x32xf32, #tpu.memory_space<vmem>>, %arg6: memref<16x32xf32, #tpu.memory_space<vmem>>) attributes {dimension_semantics = [#tpu.dimension_semantics<parallel>], iteration_bounds = array<i64: 1>, scalar_prefetch = 0 : i64, scratch_operands = 0 : i64, tpu.core_type = #tpu.core_type<tc>, window_params = [{transform_indices = @transform_0, window_bounds = array<i64: 5, 16, 34>}, {transform_indices = @transform_1, window_bounds = array<i64: 5, 16, 16>}, {pipeline_mode = #tpu.pipeline_mode<synchronous>, transform_indices = @transform_2, window_bounds = array<i64: 34, 96>}, {pipeline_mode = #tpu.pipeline_mode<synchronous>, transform_indices = @transform_3, window_bounds = array<i64: 32, 32>}, {pipeline_mode = #tpu.pipeline_mode<synchronous>, transform_indices = @transform_4, window_bounds = array<i64: 1, 32>}, {transform_indices = @transform_5, window_bounds = array<i64: 16, 32>}]} {
    %c0 = arith.constant 0 : index
    %c0_0 = arith.constant 0 : index
    %c0_1 = arith.constant 0 : index
    %0 = vector.load %arg1[%c0, %c0_0, %c0_1] : memref<5x16x34xbf16, #tpu.memory_space<vmem>>, vector<5x16x34xbf16>
    %1 = vector.shape_cast %0 : vector<5x16x34xbf16> to vector<80x34xbf16>
    %c0_2 = arith.constant 0 : index
    %c0_3 = arith.constant 0 : index
    %c0_4 = arith.constant 0 : index
    %2 = vector.load %arg2[%c0_2, %c0_3, %c0_4] : memref<5x16x16xf32, #tpu.memory_space<vmem>>, vector<5x16x16xf32>
    %3 = vector.shape_cast %2 : vector<5x16x16xf32> to vector<80x16xf32>
    %c0_5 = arith.constant 0 : index
    %c0_6 = arith.constant 0 : index
    %4 = vector.load %arg3[%c0_5, %c0_6] : memref<34x96xbf16, #tpu.memory_space<vmem>>, vector<34x96xbf16>
    %cst = arith.constant dense<0.000000e+00> : vector<80x96xf32>
    %5 = tpu.matmul %1, %4, %cst {dimension_numbers = #tpu.dot_dimension_numbers<[1], [0], [0], [1], [0, 0, 1, 1], [], []>} : vector<80x34xbf16>, vector<34x96xbf16>, vector<80x96xf32> -> vector<80x96xf32>
    %6 = math.cos %3 : vector<80x16xf32>
    %7 = math.sin %3 : vector<80x16xf32>
    %8 = vector.extract_strided_slice %5 {offsets = [0, 0], sizes = [80, 16], strides = [1, 1]} : vector<80x96xf32> to vector<80x16xf32>
    %9 = vector.extract_strided_slice %8 {offsets = [0, 4], sizes = [80, 4], strides = [1, 1]} : vector<80x16xf32> to vector<80x4xf32>
    %cst_7 = arith.constant 0.000000e+00 : f32
    %10 = vector.broadcast %cst_7 : f32 to vector<80x4xf32>
    %11 = arith.subf %10, %9 : vector<80x4xf32>
    %12 = vector.extract_strided_slice %8 {offsets = [0, 0], sizes = [80, 4], strides = [1, 1]} : vector<80x16xf32> to vector<80x4xf32>
    %13 = vector.extract_strided_slice %8 {offsets = [0, 12], sizes = [80, 4], strides = [1, 1]} : vector<80x16xf32> to vector<80x4xf32>
    %cst_8 = arith.constant 0.000000e+00 : f32
    %14 = vector.broadcast %cst_8 : f32 to vector<80x4xf32>
    %15 = arith.subf %14, %13 : vector<80x4xf32>
    %16 = vector.extract_strided_slice %8 {offsets = [0, 8], sizes = [80, 4], strides = [1, 1]} : vector<80x16xf32> to vector<80x4xf32>
    %17 = tpu.concatenate %11, %12, %15, %16 in 1 : vector<80x4xf32>, vector<80x4xf32>, vector<80x4xf32>, vector<80x4xf32> -> vector<80x16xf32>
    %18 = arith.mulf %8, %6 : vector<80x16xf32>
    %19 = arith.mulf %17, %7 : vector<80x16xf32>
    %20 = arith.addf %18, %19 : vector<80x16xf32>
    %21 = vector.extract_strided_slice %5 {offsets = [0, 32], sizes = [80, 16], strides = [1, 1]} : vector<80x96xf32> to vector<80x16xf32>
    %22 = vector.extract_strided_slice %21 {offsets = [0, 4], sizes = [80, 4], strides = [1, 1]} : vector<80x16xf32> to vector<80x4xf32>
    %cst_9 = arith.constant 0.000000e+00 : f32
    %23 = vector.broadcast %cst_9 : f32 to vector<80x4xf32>
    %24 = arith.subf %23, %22 : vector<80x4xf32>
    %25 = vector.extract_strided_slice %21 {offsets = [0, 0], sizes = [80, 4], strides = [1, 1]} : vector<80x16xf32> to vector<80x4xf32>
    %26 = vector.extract_strided_slice %21 {offsets = [0, 12], sizes = [80, 4], strides = [1, 1]} : vector<80x16xf32> to vector<80x4xf32>
    %cst_10 = arith.constant 0.000000e+00 : f32
    %27 = vector.broadcast %cst_10 : f32 to vector<80x4xf32>
    %28 = arith.subf %27, %26 : vector<80x4xf32>
    %29 = vector.extract_strided_slice %21 {offsets = [0, 8], sizes = [80, 4], strides = [1, 1]} : vector<80x16xf32> to vector<80x4xf32>
    %30 = tpu.concatenate %24, %25, %28, %29 in 1 : vector<80x4xf32>, vector<80x4xf32>, vector<80x4xf32>, vector<80x4xf32> -> vector<80x16xf32>
    %31 = arith.mulf %21, %6 : vector<80x16xf32>
    %32 = arith.mulf %30, %7 : vector<80x16xf32>
    %33 = arith.addf %31, %32 : vector<80x16xf32>
    %34 = vector.extract_strided_slice %5 {offsets = [0, 64], sizes = [80, 16], strides = [1, 1]} : vector<80x96xf32> to vector<80x16xf32>
    %35 = vector.extract_strided_slice %20 {offsets = [0, 0], sizes = [16, 16], strides = [1, 1]} : vector<80x16xf32> to vector<16x16xf32>
    %36 = vector.extract_strided_slice %20 {offsets = [16, 0], sizes = [16, 16], strides = [1, 1]} : vector<80x16xf32> to vector<16x16xf32>
    %37 = vector.extract_strided_slice %20 {offsets = [32, 0], sizes = [16, 16], strides = [1, 1]} : vector<80x16xf32> to vector<16x16xf32>
    %38 = vector.extract_strided_slice %20 {offsets = [48, 0], sizes = [16, 16], strides = [1, 1]} : vector<80x16xf32> to vector<16x16xf32>
    %39 = vector.extract_strided_slice %20 {offsets = [64, 0], sizes = [16, 16], strides = [1, 1]} : vector<80x16xf32> to vector<16x16xf32>
    %40 = vector.extract_strided_slice %33 {offsets = [0, 0], sizes = [16, 16], strides = [1, 1]} : vector<80x16xf32> to vector<16x16xf32>
    %41 = vector.extract_strided_slice %33 {offsets = [16, 0], sizes = [16, 16], strides = [1, 1]} : vector<80x16xf32> to vector<16x16xf32>
    %42 = vector.extract_strided_slice %33 {offsets = [32, 0], sizes = [16, 16], strides = [1, 1]} : vector<80x16xf32> to vector<16x16xf32>
    %43 = vector.extract_strided_slice %33 {offsets = [48, 0], sizes = [16, 16], strides = [1, 1]} : vector<80x16xf32> to vector<16x16xf32>
    %44 = vector.extract_strided_slice %33 {offsets = [64, 0], sizes = [16, 16], strides = [1, 1]} : vector<80x16xf32> to vector<16x16xf32>
    %45 = vector.extract_strided_slice %34 {offsets = [0, 0], sizes = [16, 16], strides = [1, 1]} : vector<80x16xf32> to vector<16x16xf32>
    %46 = vector.extract_strided_slice %34 {offsets = [16, 0], sizes = [16, 16], strides = [1, 1]} : vector<80x16xf32> to vector<16x16xf32>
    %47 = vector.extract_strided_slice %34 {offsets = [32, 0], sizes = [16, 16], strides = [1, 1]} : vector<80x16xf32> to vector<16x16xf32>
    %48 = vector.extract_strided_slice %34 {offsets = [48, 0], sizes = [16, 16], strides = [1, 1]} : vector<80x16xf32> to vector<16x16xf32>
    %49 = vector.extract_strided_slice %34 {offsets = [64, 0], sizes = [16, 16], strides = [1, 1]} : vector<80x16xf32> to vector<16x16xf32>
    %50 = arith.mulf %35, %40 : vector<16x16xf32>
    %cst_11 = arith.constant dense<0.000000e+00> : vector<16xf32>
    %51 = vector.multi_reduction <add>, %50, %cst_11 [1] : vector<16x16xf32> to vector<16xf32>
    %52 = vector.shape_cast %51 : vector<16xf32> to vector<16x1xf32>
    %cst_12 = arith.constant 2.500000e-01 : f32
    %53 = vector.broadcast %cst_12 : f32 to vector<16x1xf32>
    %54 = arith.mulf %52, %53 : vector<16x1xf32>
    %55 = arith.mulf %35, %41 : vector<16x16xf32>
    %cst_13 = arith.constant dense<0.000000e+00> : vector<16xf32>
    %56 = vector.multi_reduction <add>, %55, %cst_13 [1] : vector<16x16xf32> to vector<16xf32>
    %57 = vector.shape_cast %56 : vector<16xf32> to vector<16x1xf32>
    %cst_14 = arith.constant 2.500000e-01 : f32
    %58 = vector.broadcast %cst_14 : f32 to vector<16x1xf32>
    %59 = arith.mulf %57, %58 : vector<16x1xf32>
    %60 = arith.mulf %35, %42 : vector<16x16xf32>
    %cst_15 = arith.constant dense<0.000000e+00> : vector<16xf32>
    %61 = vector.multi_reduction <add>, %60, %cst_15 [1] : vector<16x16xf32> to vector<16xf32>
    %62 = vector.shape_cast %61 : vector<16xf32> to vector<16x1xf32>
    %cst_16 = arith.constant 2.500000e-01 : f32
    %63 = vector.broadcast %cst_16 : f32 to vector<16x1xf32>
    %64 = arith.mulf %62, %63 : vector<16x1xf32>
    %65 = arith.mulf %35, %43 : vector<16x16xf32>
    %cst_17 = arith.constant dense<0.000000e+00> : vector<16xf32>
    %66 = vector.multi_reduction <add>, %65, %cst_17 [1] : vector<16x16xf32> to vector<16xf32>
    %67 = vector.shape_cast %66 : vector<16xf32> to vector<16x1xf32>
    %cst_18 = arith.constant 2.500000e-01 : f32
    %68 = vector.broadcast %cst_18 : f32 to vector<16x1xf32>
    %69 = arith.mulf %67, %68 : vector<16x1xf32>
    %70 = arith.mulf %35, %44 : vector<16x16xf32>
    %cst_19 = arith.constant dense<0.000000e+00> : vector<16xf32>
    %71 = vector.multi_reduction <add>, %70, %cst_19 [1] : vector<16x16xf32> to vector<16xf32>
    %72 = vector.shape_cast %71 : vector<16xf32> to vector<16x1xf32>
    %cst_20 = arith.constant 2.500000e-01 : f32
    %73 = vector.broadcast %cst_20 : f32 to vector<16x1xf32>
    %74 = arith.mulf %72, %73 : vector<16x1xf32>
    %75 = arith.maximumf %54, %59 : vector<16x1xf32>
    %76 = arith.maximumf %75, %64 : vector<16x1xf32>
    %77 = arith.maximumf %76, %69 : vector<16x1xf32>
    %78 = arith.maximumf %77, %74 : vector<16x1xf32>
    %79 = arith.subf %54, %78 : vector<16x1xf32>
    %80 = math.exp %79 : vector<16x1xf32>
    %81 = arith.subf %59, %78 : vector<16x1xf32>
    %82 = math.exp %81 : vector<16x1xf32>
    %83 = arith.subf %64, %78 : vector<16x1xf32>
    %84 = math.exp %83 : vector<16x1xf32>
    %85 = arith.subf %69, %78 : vector<16x1xf32>
    %86 = math.exp %85 : vector<16x1xf32>
    %87 = arith.subf %74, %78 : vector<16x1xf32>
    %88 = math.exp %87 : vector<16x1xf32>
    %89 = arith.addf %80, %82 : vector<16x1xf32>
    %90 = arith.addf %89, %84 : vector<16x1xf32>
    %91 = arith.addf %90, %86 : vector<16x1xf32>
    %92 = arith.addf %91, %88 : vector<16x1xf32>
    %93 = tpu.reciprocal %92 {approx = true} : vector<16x1xf32> -> vector<16x1xf32>
    %94 = arith.mulf %80, %93 : vector<16x1xf32>
    %95 = arith.mulf %82, %93 : vector<16x1xf32>
    %96 = arith.mulf %84, %93 : vector<16x1xf32>
    %97 = arith.mulf %86, %93 : vector<16x1xf32>
    %98 = arith.mulf %88, %93 : vector<16x1xf32>
    %99 = arith.mulf %36, %40 : vector<16x16xf32>
    %cst_21 = arith.constant dense<0.000000e+00> : vector<16xf32>
    %100 = vector.multi_reduction <add>, %99, %cst_21 [1] : vector<16x16xf32> to vector<16xf32>
    %101 = vector.shape_cast %100 : vector<16xf32> to vector<16x1xf32>
    %cst_22 = arith.constant 2.500000e-01 : f32
    %102 = vector.broadcast %cst_22 : f32 to vector<16x1xf32>
    %103 = arith.mulf %101, %102 : vector<16x1xf32>
    %104 = arith.mulf %36, %41 : vector<16x16xf32>
    %cst_23 = arith.constant dense<0.000000e+00> : vector<16xf32>
    %105 = vector.multi_reduction <add>, %104, %cst_23 [1] : vector<16x16xf32> to vector<16xf32>
    %106 = vector.shape_cast %105 : vector<16xf32> to vector<16x1xf32>
    %cst_24 = arith.constant 2.500000e-01 : f32
    %107 = vector.broadcast %cst_24 : f32 to vector<16x1xf32>
    %108 = arith.mulf %106, %107 : vector<16x1xf32>
    %109 = arith.mulf %36, %42 : vector<16x16xf32>
    %cst_25 = arith.constant dense<0.000000e+00> : vector<16xf32>
    %110 = vector.multi_reduction <add>, %109, %cst_25 [1] : vector<16x16xf32> to vector<16xf32>
    %111 = vector.shape_cast %110 : vector<16xf32> to vector<16x1xf32>
    %cst_26 = arith.constant 2.500000e-01 : f32
    %112 = vector.broadcast %cst_26 : f32 to vector<16x1xf32>
    %113 = arith.mulf %111, %112 : vector<16x1xf32>
    %114 = arith.mulf %36, %43 : vector<16x16xf32>
    %cst_27 = arith.constant dense<0.000000e+00> : vector<16xf32>
    %115 = vector.multi_reduction <add>, %114, %cst_27 [1] : vector<16x16xf32> to vector<16xf32>
    %116 = vector.shape_cast %115 : vector<16xf32> to vector<16x1xf32>
    %cst_28 = arith.constant 2.500000e-01 : f32
    %117 = vector.broadcast %cst_28 : f32 to vector<16x1xf32>
    %118 = arith.mulf %116, %117 : vector<16x1xf32>
    %119 = arith.mulf %36, %44 : vector<16x16xf32>
    %cst_29 = arith.constant dense<0.000000e+00> : vector<16xf32>
    %120 = vector.multi_reduction <add>, %119, %cst_29 [1] : vector<16x16xf32> to vector<16xf32>
    %121 = vector.shape_cast %120 : vector<16xf32> to vector<16x1xf32>
    %cst_30 = arith.constant 2.500000e-01 : f32
    %122 = vector.broadcast %cst_30 : f32 to vector<16x1xf32>
    %123 = arith.mulf %121, %122 : vector<16x1xf32>
    %124 = arith.maximumf %103, %108 : vector<16x1xf32>
    %125 = arith.maximumf %124, %113 : vector<16x1xf32>
    %126 = arith.maximumf %125, %118 : vector<16x1xf32>
    %127 = arith.maximumf %126, %123 : vector<16x1xf32>
    %128 = arith.subf %103, %127 : vector<16x1xf32>
    %129 = math.exp %128 : vector<16x1xf32>
    %130 = arith.subf %108, %127 : vector<16x1xf32>
    %131 = math.exp %130 : vector<16x1xf32>
    %132 = arith.subf %113, %127 : vector<16x1xf32>
    %133 = math.exp %132 : vector<16x1xf32>
    %134 = arith.subf %118, %127 : vector<16x1xf32>
    %135 = math.exp %134 : vector<16x1xf32>
    %136 = arith.subf %123, %127 : vector<16x1xf32>
    %137 = math.exp %136 : vector<16x1xf32>
    %138 = arith.addf %129, %131 : vector<16x1xf32>
    %139 = arith.addf %138, %133 : vector<16x1xf32>
    %140 = arith.addf %139, %135 : vector<16x1xf32>
    %141 = arith.addf %140, %137 : vector<16x1xf32>
    %142 = tpu.reciprocal %141 {approx = true} : vector<16x1xf32> -> vector<16x1xf32>
    %143 = arith.mulf %129, %142 : vector<16x1xf32>
    %144 = arith.mulf %131, %142 : vector<16x1xf32>
    %145 = arith.mulf %133, %142 : vector<16x1xf32>
    %146 = arith.mulf %135, %142 : vector<16x1xf32>
    %147 = arith.mulf %137, %142 : vector<16x1xf32>
    %148 = arith.addf %94, %143 : vector<16x1xf32>
    %149 = arith.addf %95, %144 : vector<16x1xf32>
    %150 = arith.addf %96, %145 : vector<16x1xf32>
    %151 = arith.addf %97, %146 : vector<16x1xf32>
    %152 = arith.addf %98, %147 : vector<16x1xf32>
    %153 = arith.mulf %37, %40 : vector<16x16xf32>
    %cst_31 = arith.constant dense<0.000000e+00> : vector<16xf32>
    %154 = vector.multi_reduction <add>, %153, %cst_31 [1] : vector<16x16xf32> to vector<16xf32>
    %155 = vector.shape_cast %154 : vector<16xf32> to vector<16x1xf32>
    %cst_32 = arith.constant 2.500000e-01 : f32
    %156 = vector.broadcast %cst_32 : f32 to vector<16x1xf32>
    %157 = arith.mulf %155, %156 : vector<16x1xf32>
    %158 = arith.mulf %37, %41 : vector<16x16xf32>
    %cst_33 = arith.constant dense<0.000000e+00> : vector<16xf32>
    %159 = vector.multi_reduction <add>, %158, %cst_33 [1] : vector<16x16xf32> to vector<16xf32>
    %160 = vector.shape_cast %159 : vector<16xf32> to vector<16x1xf32>
    %cst_34 = arith.constant 2.500000e-01 : f32
    %161 = vector.broadcast %cst_34 : f32 to vector<16x1xf32>
    %162 = arith.mulf %160, %161 : vector<16x1xf32>
    %163 = arith.mulf %37, %42 : vector<16x16xf32>
    %cst_35 = arith.constant dense<0.000000e+00> : vector<16xf32>
    %164 = vector.multi_reduction <add>, %163, %cst_35 [1] : vector<16x16xf32> to vector<16xf32>
    %165 = vector.shape_cast %164 : vector<16xf32> to vector<16x1xf32>
    %cst_36 = arith.constant 2.500000e-01 : f32
    %166 = vector.broadcast %cst_36 : f32 to vector<16x1xf32>
    %167 = arith.mulf %165, %166 : vector<16x1xf32>
    %168 = arith.mulf %37, %43 : vector<16x16xf32>
    %cst_37 = arith.constant dense<0.000000e+00> : vector<16xf32>
    %169 = vector.multi_reduction <add>, %168, %cst_37 [1] : vector<16x16xf32> to vector<16xf32>
    %170 = vector.shape_cast %169 : vector<16xf32> to vector<16x1xf32>
    %cst_38 = arith.constant 2.500000e-01 : f32
    %171 = vector.broadcast %cst_38 : f32 to vector<16x1xf32>
    %172 = arith.mulf %170, %171 : vector<16x1xf32>
    %173 = arith.mulf %37, %44 : vector<16x16xf32>
    %cst_39 = arith.constant dense<0.000000e+00> : vector<16xf32>
    %174 = vector.multi_reduction <add>, %173, %cst_39 [1] : vector<16x16xf32> to vector<16xf32>
    %175 = vector.shape_cast %174 : vector<16xf32> to vector<16x1xf32>
    %cst_40 = arith.constant 2.500000e-01 : f32
    %176 = vector.broadcast %cst_40 : f32 to vector<16x1xf32>
    %177 = arith.mulf %175, %176 : vector<16x1xf32>
    %178 = arith.maximumf %157, %162 : vector<16x1xf32>
    %179 = arith.maximumf %178, %167 : vector<16x1xf32>
    %180 = arith.maximumf %179, %172 : vector<16x1xf32>
    %181 = arith.maximumf %180, %177 : vector<16x1xf32>
    %182 = arith.subf %157, %181 : vector<16x1xf32>
    %183 = math.exp %182 : vector<16x1xf32>
    %184 = arith.subf %162, %181 : vector<16x1xf32>
    %185 = math.exp %184 : vector<16x1xf32>
    %186 = arith.subf %167, %181 : vector<16x1xf32>
    %187 = math.exp %186 : vector<16x1xf32>
    %188 = arith.subf %172, %181 : vector<16x1xf32>
    %189 = math.exp %188 : vector<16x1xf32>
    %190 = arith.subf %177, %181 : vector<16x1xf32>
    %191 = math.exp %190 : vector<16x1xf32>
    %192 = arith.addf %183, %185 : vector<16x1xf32>
    %193 = arith.addf %192, %187 : vector<16x1xf32>
    %194 = arith.addf %193, %189 : vector<16x1xf32>
    %195 = arith.addf %194, %191 : vector<16x1xf32>
    %196 = tpu.reciprocal %195 {approx = true} : vector<16x1xf32> -> vector<16x1xf32>
    %197 = arith.mulf %183, %196 : vector<16x1xf32>
    %198 = arith.mulf %185, %196 : vector<16x1xf32>
    %199 = arith.mulf %187, %196 : vector<16x1xf32>
    %200 = arith.mulf %189, %196 : vector<16x1xf32>
    %201 = arith.mulf %191, %196 : vector<16x1xf32>
    %202 = arith.addf %148, %197 : vector<16x1xf32>
    %203 = arith.addf %149, %198 : vector<16x1xf32>
    %204 = arith.addf %150, %199 : vector<16x1xf32>
    %205 = arith.addf %151, %200 : vector<16x1xf32>
    %206 = arith.addf %152, %201 : vector<16x1xf32>
    %207 = arith.mulf %38, %40 : vector<16x16xf32>
    %cst_41 = arith.constant dense<0.000000e+00> : vector<16xf32>
    %208 = vector.multi_reduction <add>, %207, %cst_41 [1] : vector<16x16xf32> to vector<16xf32>
    %209 = vector.shape_cast %208 : vector<16xf32> to vector<16x1xf32>
    %cst_42 = arith.constant 2.500000e-01 : f32
    %210 = vector.broadcast %cst_42 : f32 to vector<16x1xf32>
    %211 = arith.mulf %209, %210 : vector<16x1xf32>
    %212 = arith.mulf %38, %41 : vector<16x16xf32>
    %cst_43 = arith.constant dense<0.000000e+00> : vector<16xf32>
    %213 = vector.multi_reduction <add>, %212, %cst_43 [1] : vector<16x16xf32> to vector<16xf32>
    %214 = vector.shape_cast %213 : vector<16xf32> to vector<16x1xf32>
    %cst_44 = arith.constant 2.500000e-01 : f32
    %215 = vector.broadcast %cst_44 : f32 to vector<16x1xf32>
    %216 = arith.mulf %214, %215 : vector<16x1xf32>
    %217 = arith.mulf %38, %42 : vector<16x16xf32>
    %cst_45 = arith.constant dense<0.000000e+00> : vector<16xf32>
    %218 = vector.multi_reduction <add>, %217, %cst_45 [1] : vector<16x16xf32> to vector<16xf32>
    %219 = vector.shape_cast %218 : vector<16xf32> to vector<16x1xf32>
    %cst_46 = arith.constant 2.500000e-01 : f32
    %220 = vector.broadcast %cst_46 : f32 to vector<16x1xf32>
    %221 = arith.mulf %219, %220 : vector<16x1xf32>
    %222 = arith.mulf %38, %43 : vector<16x16xf32>
    %cst_47 = arith.constant dense<0.000000e+00> : vector<16xf32>
    %223 = vector.multi_reduction <add>, %222, %cst_47 [1] : vector<16x16xf32> to vector<16xf32>
    %224 = vector.shape_cast %223 : vector<16xf32> to vector<16x1xf32>
    %cst_48 = arith.constant 2.500000e-01 : f32
    %225 = vector.broadcast %cst_48 : f32 to vector<16x1xf32>
    %226 = arith.mulf %224, %225 : vector<16x1xf32>
    %227 = arith.mulf %38, %44 : vector<16x16xf32>
    %cst_49 = arith.constant dense<0.000000e+00> : vector<16xf32>
    %228 = vector.multi_reduction <add>, %227, %cst_49 [1] : vector<16x16xf32> to vector<16xf32>
    %229 = vector.shape_cast %228 : vector<16xf32> to vector<16x1xf32>
    %cst_50 = arith.constant 2.500000e-01 : f32
    %230 = vector.broadcast %cst_50 : f32 to vector<16x1xf32>
    %231 = arith.mulf %229, %230 : vector<16x1xf32>
    %232 = arith.maximumf %211, %216 : vector<16x1xf32>
    %233 = arith.maximumf %232, %221 : vector<16x1xf32>
    %234 = arith.maximumf %233, %226 : vector<16x1xf32>
    %235 = arith.maximumf %234, %231 : vector<16x1xf32>
    %236 = arith.subf %211, %235 : vector<16x1xf32>
    %237 = math.exp %236 : vector<16x1xf32>
    %238 = arith.subf %216, %235 : vector<16x1xf32>
    %239 = math.exp %238 : vector<16x1xf32>
    %240 = arith.subf %221, %235 : vector<16x1xf32>
    %241 = math.exp %240 : vector<16x1xf32>
    %242 = arith.subf %226, %235 : vector<16x1xf32>
    %243 = math.exp %242 : vector<16x1xf32>
    %244 = arith.subf %231, %235 : vector<16x1xf32>
    %245 = math.exp %244 : vector<16x1xf32>
    %246 = arith.addf %237, %239 : vector<16x1xf32>
    %247 = arith.addf %246, %241 : vector<16x1xf32>
    %248 = arith.addf %247, %243 : vector<16x1xf32>
    %249 = arith.addf %248, %245 : vector<16x1xf32>
    %250 = tpu.reciprocal %249 {approx = true} : vector<16x1xf32> -> vector<16x1xf32>
    %251 = arith.mulf %237, %250 : vector<16x1xf32>
    %252 = arith.mulf %239, %250 : vector<16x1xf32>
    %253 = arith.mulf %241, %250 : vector<16x1xf32>
    %254 = arith.mulf %243, %250 : vector<16x1xf32>
    %255 = arith.mulf %245, %250 : vector<16x1xf32>
    %256 = arith.addf %202, %251 : vector<16x1xf32>
    %257 = arith.addf %203, %252 : vector<16x1xf32>
    %258 = arith.addf %204, %253 : vector<16x1xf32>
    %259 = arith.addf %205, %254 : vector<16x1xf32>
    %260 = arith.addf %206, %255 : vector<16x1xf32>
    %261 = arith.mulf %39, %40 : vector<16x16xf32>
    %cst_51 = arith.constant dense<0.000000e+00> : vector<16xf32>
    %262 = vector.multi_reduction <add>, %261, %cst_51 [1] : vector<16x16xf32> to vector<16xf32>
    %263 = vector.shape_cast %262 : vector<16xf32> to vector<16x1xf32>
    %cst_52 = arith.constant 2.500000e-01 : f32
    %264 = vector.broadcast %cst_52 : f32 to vector<16x1xf32>
    %265 = arith.mulf %263, %264 : vector<16x1xf32>
    %266 = arith.mulf %39, %41 : vector<16x16xf32>
    %cst_53 = arith.constant dense<0.000000e+00> : vector<16xf32>
    %267 = vector.multi_reduction <add>, %266, %cst_53 [1] : vector<16x16xf32> to vector<16xf32>
    %268 = vector.shape_cast %267 : vector<16xf32> to vector<16x1xf32>
    %cst_54 = arith.constant 2.500000e-01 : f32
    %269 = vector.broadcast %cst_54 : f32 to vector<16x1xf32>
    %270 = arith.mulf %268, %269 : vector<16x1xf32>
    %271 = arith.mulf %39, %42 : vector<16x16xf32>
    %cst_55 = arith.constant dense<0.000000e+00> : vector<16xf32>
    %272 = vector.multi_reduction <add>, %271, %cst_55 [1] : vector<16x16xf32> to vector<16xf32>
    %273 = vector.shape_cast %272 : vector<16xf32> to vector<16x1xf32>
    %cst_56 = arith.constant 2.500000e-01 : f32
    %274 = vector.broadcast %cst_56 : f32 to vector<16x1xf32>
    %275 = arith.mulf %273, %274 : vector<16x1xf32>
    %276 = arith.mulf %39, %43 : vector<16x16xf32>
    %cst_57 = arith.constant dense<0.000000e+00> : vector<16xf32>
    %277 = vector.multi_reduction <add>, %276, %cst_57 [1] : vector<16x16xf32> to vector<16xf32>
    %278 = vector.shape_cast %277 : vector<16xf32> to vector<16x1xf32>
    %cst_58 = arith.constant 2.500000e-01 : f32
    %279 = vector.broadcast %cst_58 : f32 to vector<16x1xf32>
    %280 = arith.mulf %278, %279 : vector<16x1xf32>
    %281 = arith.mulf %39, %44 : vector<16x16xf32>
    %cst_59 = arith.constant dense<0.000000e+00> : vector<16xf32>
    %282 = vector.multi_reduction <add>, %281, %cst_59 [1] : vector<16x16xf32> to vector<16xf32>
    %283 = vector.shape_cast %282 : vector<16xf32> to vector<16x1xf32>
    %cst_60 = arith.constant 2.500000e-01 : f32
    %284 = vector.broadcast %cst_60 : f32 to vector<16x1xf32>
    %285 = arith.mulf %283, %284 : vector<16x1xf32>
    %286 = arith.maximumf %265, %270 : vector<16x1xf32>
    %287 = arith.maximumf %286, %275 : vector<16x1xf32>
    %288 = arith.maximumf %287, %280 : vector<16x1xf32>
    %289 = arith.maximumf %288, %285 : vector<16x1xf32>
    %290 = arith.subf %265, %289 : vector<16x1xf32>
    %291 = math.exp %290 : vector<16x1xf32>
    %292 = arith.subf %270, %289 : vector<16x1xf32>
    %293 = math.exp %292 : vector<16x1xf32>
    %294 = arith.subf %275, %289 : vector<16x1xf32>
    %295 = math.exp %294 : vector<16x1xf32>
    %296 = arith.subf %280, %289 : vector<16x1xf32>
    %297 = math.exp %296 : vector<16x1xf32>
    %298 = arith.subf %285, %289 : vector<16x1xf32>
    %299 = math.exp %298 : vector<16x1xf32>
    %300 = arith.addf %291, %293 : vector<16x1xf32>
    %301 = arith.addf %300, %295 : vector<16x1xf32>
    %302 = arith.addf %301, %297 : vector<16x1xf32>
    %303 = arith.addf %302, %299 : vector<16x1xf32>
    %304 = tpu.reciprocal %303 {approx = true} : vector<16x1xf32> -> vector<16x1xf32>
    %305 = arith.mulf %291, %304 : vector<16x1xf32>
    %306 = arith.mulf %293, %304 : vector<16x1xf32>
    %307 = arith.mulf %295, %304 : vector<16x1xf32>
    %308 = arith.mulf %297, %304 : vector<16x1xf32>
    %309 = arith.mulf %299, %304 : vector<16x1xf32>
    %310 = arith.addf %256, %305 : vector<16x1xf32>
    %311 = arith.addf %257, %306 : vector<16x1xf32>
    %312 = arith.addf %258, %307 : vector<16x1xf32>
    %313 = arith.addf %259, %308 : vector<16x1xf32>
    %314 = arith.addf %260, %309 : vector<16x1xf32>
    %cst_61 = arith.constant 2.000000e-01 : f32
    %315 = vector.broadcast %cst_61 : f32 to vector<16x1xf32>
    %316 = arith.mulf %310, %315 : vector<16x1xf32>
    %317 = vector.broadcast %316 : vector<16x1xf32> to vector<16x16xf32>
    %318 = arith.mulf %317, %45 : vector<16x16xf32>
    %cst_62 = arith.constant 2.000000e-01 : f32
    %319 = vector.broadcast %cst_62 : f32 to vector<16x1xf32>
    %320 = arith.mulf %311, %319 : vector<16x1xf32>
    %321 = vector.broadcast %320 : vector<16x1xf32> to vector<16x16xf32>
    %322 = arith.mulf %321, %46 : vector<16x16xf32>
    %323 = arith.addf %318, %322 : vector<16x16xf32>
    %cst_63 = arith.constant 2.000000e-01 : f32
    %324 = vector.broadcast %cst_63 : f32 to vector<16x1xf32>
    %325 = arith.mulf %312, %324 : vector<16x1xf32>
    %326 = vector.broadcast %325 : vector<16x1xf32> to vector<16x16xf32>
    %327 = arith.mulf %326, %47 : vector<16x16xf32>
    %328 = arith.addf %323, %327 : vector<16x16xf32>
    %cst_64 = arith.constant 2.000000e-01 : f32
    %329 = vector.broadcast %cst_64 : f32 to vector<16x1xf32>
    %330 = arith.mulf %313, %329 : vector<16x1xf32>
    %331 = vector.broadcast %330 : vector<16x1xf32> to vector<16x16xf32>
    %332 = arith.mulf %331, %48 : vector<16x16xf32>
    %333 = arith.addf %328, %332 : vector<16x16xf32>
    %cst_65 = arith.constant 2.000000e-01 : f32
    %334 = vector.broadcast %cst_65 : f32 to vector<16x1xf32>
    %335 = arith.mulf %314, %334 : vector<16x1xf32>
    %336 = vector.broadcast %335 : vector<16x1xf32> to vector<16x16xf32>
    %337 = arith.mulf %336, %49 : vector<16x16xf32>
    %338 = arith.addf %333, %337 : vector<16x16xf32>
    %339 = vector.extract_strided_slice %5 {offsets = [0, 16], sizes = [80, 16], strides = [1, 1]} : vector<80x96xf32> to vector<80x16xf32>
    %340 = vector.extract_strided_slice %339 {offsets = [0, 4], sizes = [80, 4], strides = [1, 1]} : vector<80x16xf32> to vector<80x4xf32>
    %cst_66 = arith.constant 0.000000e+00 : f32
    %341 = vector.broadcast %cst_66 : f32 to vector<80x4xf32>
    %342 = arith.subf %341, %340 : vector<80x4xf32>
    %343 = vector.extract_strided_slice %339 {offsets = [0, 0], sizes = [80, 4], strides = [1, 1]} : vector<80x16xf32> to vector<80x4xf32>
    %344 = vector.extract_strided_slice %339 {offsets = [0, 12], sizes = [80, 4], strides = [1, 1]} : vector<80x16xf32> to vector<80x4xf32>
    %cst_67 = arith.constant 0.000000e+00 : f32
    %345 = vector.broadcast %cst_67 : f32 to vector<80x4xf32>
    %346 = arith.subf %345, %344 : vector<80x4xf32>
    %347 = vector.extract_strided_slice %339 {offsets = [0, 8], sizes = [80, 4], strides = [1, 1]} : vector<80x16xf32> to vector<80x4xf32>
    %348 = tpu.concatenate %342, %343, %346, %347 in 1 : vector<80x4xf32>, vector<80x4xf32>, vector<80x4xf32>, vector<80x4xf32> -> vector<80x16xf32>
    %349 = arith.mulf %339, %6 : vector<80x16xf32>
    %350 = arith.mulf %348, %7 : vector<80x16xf32>
    %351 = arith.addf %349, %350 : vector<80x16xf32>
    %352 = vector.extract_strided_slice %5 {offsets = [0, 48], sizes = [80, 16], strides = [1, 1]} : vector<80x96xf32> to vector<80x16xf32>
    %353 = vector.extract_strided_slice %352 {offsets = [0, 4], sizes = [80, 4], strides = [1, 1]} : vector<80x16xf32> to vector<80x4xf32>
    %cst_68 = arith.constant 0.000000e+00 : f32
    %354 = vector.broadcast %cst_68 : f32 to vector<80x4xf32>
    %355 = arith.subf %354, %353 : vector<80x4xf32>
    %356 = vector.extract_strided_slice %352 {offsets = [0, 0], sizes = [80, 4], strides = [1, 1]} : vector<80x16xf32> to vector<80x4xf32>
    %357 = vector.extract_strided_slice %352 {offsets = [0, 12], sizes = [80, 4], strides = [1, 1]} : vector<80x16xf32> to vector<80x4xf32>
    %cst_69 = arith.constant 0.000000e+00 : f32
    %358 = vector.broadcast %cst_69 : f32 to vector<80x4xf32>
    %359 = arith.subf %358, %357 : vector<80x4xf32>
    %360 = vector.extract_strided_slice %352 {offsets = [0, 8], sizes = [80, 4], strides = [1, 1]} : vector<80x16xf32> to vector<80x4xf32>
    %361 = tpu.concatenate %355, %356, %359, %360 in 1 : vector<80x4xf32>, vector<80x4xf32>, vector<80x4xf32>, vector<80x4xf32> -> vector<80x16xf32>
    %362 = arith.mulf %352, %6 : vector<80x16xf32>
    %363 = arith.mulf %361, %7 : vector<80x16xf32>
    %364 = arith.addf %362, %363 : vector<80x16xf32>
    %365 = vector.extract_strided_slice %5 {offsets = [0, 80], sizes = [80, 16], strides = [1, 1]} : vector<80x96xf32> to vector<80x16xf32>
    %366 = vector.extract_strided_slice %351 {offsets = [0, 0], sizes = [16, 16], strides = [1, 1]} : vector<80x16xf32> to vector<16x16xf32>
    %367 = vector.extract_strided_slice %351 {offsets = [16, 0], sizes = [16, 16], strides = [1, 1]} : vector<80x16xf32> to vector<16x16xf32>
    %368 = vector.extract_strided_slice %351 {offsets = [32, 0], sizes = [16, 16], strides = [1, 1]} : vector<80x16xf32> to vector<16x16xf32>
    %369 = vector.extract_strided_slice %351 {offsets = [48, 0], sizes = [16, 16], strides = [1, 1]} : vector<80x16xf32> to vector<16x16xf32>
    %370 = vector.extract_strided_slice %351 {offsets = [64, 0], sizes = [16, 16], strides = [1, 1]} : vector<80x16xf32> to vector<16x16xf32>
    %371 = vector.extract_strided_slice %364 {offsets = [0, 0], sizes = [16, 16], strides = [1, 1]} : vector<80x16xf32> to vector<16x16xf32>
    %372 = vector.extract_strided_slice %364 {offsets = [16, 0], sizes = [16, 16], strides = [1, 1]} : vector<80x16xf32> to vector<16x16xf32>
    %373 = vector.extract_strided_slice %364 {offsets = [32, 0], sizes = [16, 16], strides = [1, 1]} : vector<80x16xf32> to vector<16x16xf32>
    %374 = vector.extract_strided_slice %364 {offsets = [48, 0], sizes = [16, 16], strides = [1, 1]} : vector<80x16xf32> to vector<16x16xf32>
    %375 = vector.extract_strided_slice %364 {offsets = [64, 0], sizes = [16, 16], strides = [1, 1]} : vector<80x16xf32> to vector<16x16xf32>
    %376 = vector.extract_strided_slice %365 {offsets = [0, 0], sizes = [16, 16], strides = [1, 1]} : vector<80x16xf32> to vector<16x16xf32>
    %377 = vector.extract_strided_slice %365 {offsets = [16, 0], sizes = [16, 16], strides = [1, 1]} : vector<80x16xf32> to vector<16x16xf32>
    %378 = vector.extract_strided_slice %365 {offsets = [32, 0], sizes = [16, 16], strides = [1, 1]} : vector<80x16xf32> to vector<16x16xf32>
    %379 = vector.extract_strided_slice %365 {offsets = [48, 0], sizes = [16, 16], strides = [1, 1]} : vector<80x16xf32> to vector<16x16xf32>
    %380 = vector.extract_strided_slice %365 {offsets = [64, 0], sizes = [16, 16], strides = [1, 1]} : vector<80x16xf32> to vector<16x16xf32>
    %381 = arith.mulf %366, %371 : vector<16x16xf32>
    %cst_70 = arith.constant dense<0.000000e+00> : vector<16xf32>
    %382 = vector.multi_reduction <add>, %381, %cst_70 [1] : vector<16x16xf32> to vector<16xf32>
    %383 = vector.shape_cast %382 : vector<16xf32> to vector<16x1xf32>
    %cst_71 = arith.constant 2.500000e-01 : f32
    %384 = vector.broadcast %cst_71 : f32 to vector<16x1xf32>
    %385 = arith.mulf %383, %384 : vector<16x1xf32>
    %386 = arith.mulf %366, %372 : vector<16x16xf32>
    %cst_72 = arith.constant dense<0.000000e+00> : vector<16xf32>
    %387 = vector.multi_reduction <add>, %386, %cst_72 [1] : vector<16x16xf32> to vector<16xf32>
    %388 = vector.shape_cast %387 : vector<16xf32> to vector<16x1xf32>
    %cst_73 = arith.constant 2.500000e-01 : f32
    %389 = vector.broadcast %cst_73 : f32 to vector<16x1xf32>
    %390 = arith.mulf %388, %389 : vector<16x1xf32>
    %391 = arith.mulf %366, %373 : vector<16x16xf32>
    %cst_74 = arith.constant dense<0.000000e+00> : vector<16xf32>
    %392 = vector.multi_reduction <add>, %391, %cst_74 [1] : vector<16x16xf32> to vector<16xf32>
    %393 = vector.shape_cast %392 : vector<16xf32> to vector<16x1xf32>
    %cst_75 = arith.constant 2.500000e-01 : f32
    %394 = vector.broadcast %cst_75 : f32 to vector<16x1xf32>
    %395 = arith.mulf %393, %394 : vector<16x1xf32>
    %396 = arith.mulf %366, %374 : vector<16x16xf32>
    %cst_76 = arith.constant dense<0.000000e+00> : vector<16xf32>
    %397 = vector.multi_reduction <add>, %396, %cst_76 [1] : vector<16x16xf32> to vector<16xf32>
    %398 = vector.shape_cast %397 : vector<16xf32> to vector<16x1xf32>
    %cst_77 = arith.constant 2.500000e-01 : f32
    %399 = vector.broadcast %cst_77 : f32 to vector<16x1xf32>
    %400 = arith.mulf %398, %399 : vector<16x1xf32>
    %401 = arith.mulf %366, %375 : vector<16x16xf32>
    %cst_78 = arith.constant dense<0.000000e+00> : vector<16xf32>
    %402 = vector.multi_reduction <add>, %401, %cst_78 [1] : vector<16x16xf32> to vector<16xf32>
    %403 = vector.shape_cast %402 : vector<16xf32> to vector<16x1xf32>
    %cst_79 = arith.constant 2.500000e-01 : f32
    %404 = vector.broadcast %cst_79 : f32 to vector<16x1xf32>
    %405 = arith.mulf %403, %404 : vector<16x1xf32>
    %406 = arith.maximumf %385, %390 : vector<16x1xf32>
    %407 = arith.maximumf %406, %395 : vector<16x1xf32>
    %408 = arith.maximumf %407, %400 : vector<16x1xf32>
    %409 = arith.maximumf %408, %405 : vector<16x1xf32>
    %410 = arith.subf %385, %409 : vector<16x1xf32>
    %411 = math.exp %410 : vector<16x1xf32>
    %412 = arith.subf %390, %409 : vector<16x1xf32>
    %413 = math.exp %412 : vector<16x1xf32>
    %414 = arith.subf %395, %409 : vector<16x1xf32>
    %415 = math.exp %414 : vector<16x1xf32>
    %416 = arith.subf %400, %409 : vector<16x1xf32>
    %417 = math.exp %416 : vector<16x1xf32>
    %418 = arith.subf %405, %409 : vector<16x1xf32>
    %419 = math.exp %418 : vector<16x1xf32>
    %420 = arith.addf %411, %413 : vector<16x1xf32>
    %421 = arith.addf %420, %415 : vector<16x1xf32>
    %422 = arith.addf %421, %417 : vector<16x1xf32>
    %423 = arith.addf %422, %419 : vector<16x1xf32>
    %424 = tpu.reciprocal %423 {approx = true} : vector<16x1xf32> -> vector<16x1xf32>
    %425 = arith.mulf %411, %424 : vector<16x1xf32>
    %426 = arith.mulf %413, %424 : vector<16x1xf32>
    %427 = arith.mulf %415, %424 : vector<16x1xf32>
    %428 = arith.mulf %417, %424 : vector<16x1xf32>
    %429 = arith.mulf %419, %424 : vector<16x1xf32>
    %430 = arith.mulf %367, %371 : vector<16x16xf32>
    %cst_80 = arith.constant dense<0.000000e+00> : vector<16xf32>
    %431 = vector.multi_reduction <add>, %430, %cst_80 [1] : vector<16x16xf32> to vector<16xf32>
    %432 = vector.shape_cast %431 : vector<16xf32> to vector<16x1xf32>
    %cst_81 = arith.constant 2.500000e-01 : f32
    %433 = vector.broadcast %cst_81 : f32 to vector<16x1xf32>
    %434 = arith.mulf %432, %433 : vector<16x1xf32>
    %435 = arith.mulf %367, %372 : vector<16x16xf32>
    %cst_82 = arith.constant dense<0.000000e+00> : vector<16xf32>
    %436 = vector.multi_reduction <add>, %435, %cst_82 [1] : vector<16x16xf32> to vector<16xf32>
    %437 = vector.shape_cast %436 : vector<16xf32> to vector<16x1xf32>
    %cst_83 = arith.constant 2.500000e-01 : f32
    %438 = vector.broadcast %cst_83 : f32 to vector<16x1xf32>
    %439 = arith.mulf %437, %438 : vector<16x1xf32>
    %440 = arith.mulf %367, %373 : vector<16x16xf32>
    %cst_84 = arith.constant dense<0.000000e+00> : vector<16xf32>
    %441 = vector.multi_reduction <add>, %440, %cst_84 [1] : vector<16x16xf32> to vector<16xf32>
    %442 = vector.shape_cast %441 : vector<16xf32> to vector<16x1xf32>
    %cst_85 = arith.constant 2.500000e-01 : f32
    %443 = vector.broadcast %cst_85 : f32 to vector<16x1xf32>
    %444 = arith.mulf %442, %443 : vector<16x1xf32>
    %445 = arith.mulf %367, %374 : vector<16x16xf32>
    %cst_86 = arith.constant dense<0.000000e+00> : vector<16xf32>
    %446 = vector.multi_reduction <add>, %445, %cst_86 [1] : vector<16x16xf32> to vector<16xf32>
    %447 = vector.shape_cast %446 : vector<16xf32> to vector<16x1xf32>
    %cst_87 = arith.constant 2.500000e-01 : f32
    %448 = vector.broadcast %cst_87 : f32 to vector<16x1xf32>
    %449 = arith.mulf %447, %448 : vector<16x1xf32>
    %450 = arith.mulf %367, %375 : vector<16x16xf32>
    %cst_88 = arith.constant dense<0.000000e+00> : vector<16xf32>
    %451 = vector.multi_reduction <add>, %450, %cst_88 [1] : vector<16x16xf32> to vector<16xf32>
    %452 = vector.shape_cast %451 : vector<16xf32> to vector<16x1xf32>
    %cst_89 = arith.constant 2.500000e-01 : f32
    %453 = vector.broadcast %cst_89 : f32 to vector<16x1xf32>
    %454 = arith.mulf %452, %453 : vector<16x1xf32>
    %455 = arith.maximumf %434, %439 : vector<16x1xf32>
    %456 = arith.maximumf %455, %444 : vector<16x1xf32>
    %457 = arith.maximumf %456, %449 : vector<16x1xf32>
    %458 = arith.maximumf %457, %454 : vector<16x1xf32>
    %459 = arith.subf %434, %458 : vector<16x1xf32>
    %460 = math.exp %459 : vector<16x1xf32>
    %461 = arith.subf %439, %458 : vector<16x1xf32>
    %462 = math.exp %461 : vector<16x1xf32>
    %463 = arith.subf %444, %458 : vector<16x1xf32>
    %464 = math.exp %463 : vector<16x1xf32>
    %465 = arith.subf %449, %458 : vector<16x1xf32>
    %466 = math.exp %465 : vector<16x1xf32>
    %467 = arith.subf %454, %458 : vector<16x1xf32>
    %468 = math.exp %467 : vector<16x1xf32>
    %469 = arith.addf %460, %462 : vector<16x1xf32>
    %470 = arith.addf %469, %464 : vector<16x1xf32>
    %471 = arith.addf %470, %466 : vector<16x1xf32>
    %472 = arith.addf %471, %468 : vector<16x1xf32>
    %473 = tpu.reciprocal %472 {approx = true} : vector<16x1xf32> -> vector<16x1xf32>
    %474 = arith.mulf %460, %473 : vector<16x1xf32>
    %475 = arith.mulf %462, %473 : vector<16x1xf32>
    %476 = arith.mulf %464, %473 : vector<16x1xf32>
    %477 = arith.mulf %466, %473 : vector<16x1xf32>
    %478 = arith.mulf %468, %473 : vector<16x1xf32>
    %479 = arith.addf %425, %474 : vector<16x1xf32>
    %480 = arith.addf %426, %475 : vector<16x1xf32>
    %481 = arith.addf %427, %476 : vector<16x1xf32>
    %482 = arith.addf %428, %477 : vector<16x1xf32>
    %483 = arith.addf %429, %478 : vector<16x1xf32>
    %484 = arith.mulf %368, %371 : vector<16x16xf32>
    %cst_90 = arith.constant dense<0.000000e+00> : vector<16xf32>
    %485 = vector.multi_reduction <add>, %484, %cst_90 [1] : vector<16x16xf32> to vector<16xf32>
    %486 = vector.shape_cast %485 : vector<16xf32> to vector<16x1xf32>
    %cst_91 = arith.constant 2.500000e-01 : f32
    %487 = vector.broadcast %cst_91 : f32 to vector<16x1xf32>
    %488 = arith.mulf %486, %487 : vector<16x1xf32>
    %489 = arith.mulf %368, %372 : vector<16x16xf32>
    %cst_92 = arith.constant dense<0.000000e+00> : vector<16xf32>
    %490 = vector.multi_reduction <add>, %489, %cst_92 [1] : vector<16x16xf32> to vector<16xf32>
    %491 = vector.shape_cast %490 : vector<16xf32> to vector<16x1xf32>
    %cst_93 = arith.constant 2.500000e-01 : f32
    %492 = vector.broadcast %cst_93 : f32 to vector<16x1xf32>
    %493 = arith.mulf %491, %492 : vector<16x1xf32>
    %494 = arith.mulf %368, %373 : vector<16x16xf32>
    %cst_94 = arith.constant dense<0.000000e+00> : vector<16xf32>
    %495 = vector.multi_reduction <add>, %494, %cst_94 [1] : vector<16x16xf32> to vector<16xf32>
    %496 = vector.shape_cast %495 : vector<16xf32> to vector<16x1xf32>
    %cst_95 = arith.constant 2.500000e-01 : f32
    %497 = vector.broadcast %cst_95 : f32 to vector<16x1xf32>
    %498 = arith.mulf %496, %497 : vector<16x1xf32>
    %499 = arith.mulf %368, %374 : vector<16x16xf32>
    %cst_96 = arith.constant dense<0.000000e+00> : vector<16xf32>
    %500 = vector.multi_reduction <add>, %499, %cst_96 [1] : vector<16x16xf32> to vector<16xf32>
    %501 = vector.shape_cast %500 : vector<16xf32> to vector<16x1xf32>
    %cst_97 = arith.constant 2.500000e-01 : f32
    %502 = vector.broadcast %cst_97 : f32 to vector<16x1xf32>
    %503 = arith.mulf %501, %502 : vector<16x1xf32>
    %504 = arith.mulf %368, %375 : vector<16x16xf32>
    %cst_98 = arith.constant dense<0.000000e+00> : vector<16xf32>
    %505 = vector.multi_reduction <add>, %504, %cst_98 [1] : vector<16x16xf32> to vector<16xf32>
    %506 = vector.shape_cast %505 : vector<16xf32> to vector<16x1xf32>
    %cst_99 = arith.constant 2.500000e-01 : f32
    %507 = vector.broadcast %cst_99 : f32 to vector<16x1xf32>
    %508 = arith.mulf %506, %507 : vector<16x1xf32>
    %509 = arith.maximumf %488, %493 : vector<16x1xf32>
    %510 = arith.maximumf %509, %498 : vector<16x1xf32>
    %511 = arith.maximumf %510, %503 : vector<16x1xf32>
    %512 = arith.maximumf %511, %508 : vector<16x1xf32>
    %513 = arith.subf %488, %512 : vector<16x1xf32>
    %514 = math.exp %513 : vector<16x1xf32>
    %515 = arith.subf %493, %512 : vector<16x1xf32>
    %516 = math.exp %515 : vector<16x1xf32>
    %517 = arith.subf %498, %512 : vector<16x1xf32>
    %518 = math.exp %517 : vector<16x1xf32>
    %519 = arith.subf %503, %512 : vector<16x1xf32>
    %520 = math.exp %519 : vector<16x1xf32>
    %521 = arith.subf %508, %512 : vector<16x1xf32>
    %522 = math.exp %521 : vector<16x1xf32>
    %523 = arith.addf %514, %516 : vector<16x1xf32>
    %524 = arith.addf %523, %518 : vector<16x1xf32>
    %525 = arith.addf %524, %520 : vector<16x1xf32>
    %526 = arith.addf %525, %522 : vector<16x1xf32>
    %527 = tpu.reciprocal %526 {approx = true} : vector<16x1xf32> -> vector<16x1xf32>
    %528 = arith.mulf %514, %527 : vector<16x1xf32>
    %529 = arith.mulf %516, %527 : vector<16x1xf32>
    %530 = arith.mulf %518, %527 : vector<16x1xf32>
    %531 = arith.mulf %520, %527 : vector<16x1xf32>
    %532 = arith.mulf %522, %527 : vector<16x1xf32>
    %533 = arith.addf %479, %528 : vector<16x1xf32>
    %534 = arith.addf %480, %529 : vector<16x1xf32>
    %535 = arith.addf %481, %530 : vector<16x1xf32>
    %536 = arith.addf %482, %531 : vector<16x1xf32>
    %537 = arith.addf %483, %532 : vector<16x1xf32>
    %538 = arith.mulf %369, %371 : vector<16x16xf32>
    %cst_100 = arith.constant dense<0.000000e+00> : vector<16xf32>
    %539 = vector.multi_reduction <add>, %538, %cst_100 [1] : vector<16x16xf32> to vector<16xf32>
    %540 = vector.shape_cast %539 : vector<16xf32> to vector<16x1xf32>
    %cst_101 = arith.constant 2.500000e-01 : f32
    %541 = vector.broadcast %cst_101 : f32 to vector<16x1xf32>
    %542 = arith.mulf %540, %541 : vector<16x1xf32>
    %543 = arith.mulf %369, %372 : vector<16x16xf32>
    %cst_102 = arith.constant dense<0.000000e+00> : vector<16xf32>
    %544 = vector.multi_reduction <add>, %543, %cst_102 [1] : vector<16x16xf32> to vector<16xf32>
    %545 = vector.shape_cast %544 : vector<16xf32> to vector<16x1xf32>
    %cst_103 = arith.constant 2.500000e-01 : f32
    %546 = vector.broadcast %cst_103 : f32 to vector<16x1xf32>
    %547 = arith.mulf %545, %546 : vector<16x1xf32>
    %548 = arith.mulf %369, %373 : vector<16x16xf32>
    %cst_104 = arith.constant dense<0.000000e+00> : vector<16xf32>
    %549 = vector.multi_reduction <add>, %548, %cst_104 [1] : vector<16x16xf32> to vector<16xf32>
    %550 = vector.shape_cast %549 : vector<16xf32> to vector<16x1xf32>
    %cst_105 = arith.constant 2.500000e-01 : f32
    %551 = vector.broadcast %cst_105 : f32 to vector<16x1xf32>
    %552 = arith.mulf %550, %551 : vector<16x1xf32>
    %553 = arith.mulf %369, %374 : vector<16x16xf32>
    %cst_106 = arith.constant dense<0.000000e+00> : vector<16xf32>
    %554 = vector.multi_reduction <add>, %553, %cst_106 [1] : vector<16x16xf32> to vector<16xf32>
    %555 = vector.shape_cast %554 : vector<16xf32> to vector<16x1xf32>
    %cst_107 = arith.constant 2.500000e-01 : f32
    %556 = vector.broadcast %cst_107 : f32 to vector<16x1xf32>
    %557 = arith.mulf %555, %556 : vector<16x1xf32>
    %558 = arith.mulf %369, %375 : vector<16x16xf32>
    %cst_108 = arith.constant dense<0.000000e+00> : vector<16xf32>
    %559 = vector.multi_reduction <add>, %558, %cst_108 [1] : vector<16x16xf32> to vector<16xf32>
    %560 = vector.shape_cast %559 : vector<16xf32> to vector<16x1xf32>
    %cst_109 = arith.constant 2.500000e-01 : f32
    %561 = vector.broadcast %cst_109 : f32 to vector<16x1xf32>
    %562 = arith.mulf %560, %561 : vector<16x1xf32>
    %563 = arith.maximumf %542, %547 : vector<16x1xf32>
    %564 = arith.maximumf %563, %552 : vector<16x1xf32>
    %565 = arith.maximumf %564, %557 : vector<16x1xf32>
    %566 = arith.maximumf %565, %562 : vector<16x1xf32>
    %567 = arith.subf %542, %566 : vector<16x1xf32>
    %568 = math.exp %567 : vector<16x1xf32>
    %569 = arith.subf %547, %566 : vector<16x1xf32>
    %570 = math.exp %569 : vector<16x1xf32>
    %571 = arith.subf %552, %566 : vector<16x1xf32>
    %572 = math.exp %571 : vector<16x1xf32>
    %573 = arith.subf %557, %566 : vector<16x1xf32>
    %574 = math.exp %573 : vector<16x1xf32>
    %575 = arith.subf %562, %566 : vector<16x1xf32>
    %576 = math.exp %575 : vector<16x1xf32>
    %577 = arith.addf %568, %570 : vector<16x1xf32>
    %578 = arith.addf %577, %572 : vector<16x1xf32>
    %579 = arith.addf %578, %574 : vector<16x1xf32>
    %580 = arith.addf %579, %576 : vector<16x1xf32>
    %581 = tpu.reciprocal %580 {approx = true} : vector<16x1xf32> -> vector<16x1xf32>
    %582 = arith.mulf %568, %581 : vector<16x1xf32>
    %583 = arith.mulf %570, %581 : vector<16x1xf32>
    %584 = arith.mulf %572, %581 : vector<16x1xf32>
    %585 = arith.mulf %574, %581 : vector<16x1xf32>
    %586 = arith.mulf %576, %581 : vector<16x1xf32>
    %587 = arith.addf %533, %582 : vector<16x1xf32>
    %588 = arith.addf %534, %583 : vector<16x1xf32>
    %589 = arith.addf %535, %584 : vector<16x1xf32>
    %590 = arith.addf %536, %585 : vector<16x1xf32>
    %591 = arith.addf %537, %586 : vector<16x1xf32>
    %592 = arith.mulf %370, %371 : vector<16x16xf32>
    %cst_110 = arith.constant dense<0.000000e+00> : vector<16xf32>
    %593 = vector.multi_reduction <add>, %592, %cst_110 [1] : vector<16x16xf32> to vector<16xf32>
    %594 = vector.shape_cast %593 : vector<16xf32> to vector<16x1xf32>
    %cst_111 = arith.constant 2.500000e-01 : f32
    %595 = vector.broadcast %cst_111 : f32 to vector<16x1xf32>
    %596 = arith.mulf %594, %595 : vector<16x1xf32>
    %597 = arith.mulf %370, %372 : vector<16x16xf32>
    %cst_112 = arith.constant dense<0.000000e+00> : vector<16xf32>
    %598 = vector.multi_reduction <add>, %597, %cst_112 [1] : vector<16x16xf32> to vector<16xf32>
    %599 = vector.shape_cast %598 : vector<16xf32> to vector<16x1xf32>
    %cst_113 = arith.constant 2.500000e-01 : f32
    %600 = vector.broadcast %cst_113 : f32 to vector<16x1xf32>
    %601 = arith.mulf %599, %600 : vector<16x1xf32>
    %602 = arith.mulf %370, %373 : vector<16x16xf32>
    %cst_114 = arith.constant dense<0.000000e+00> : vector<16xf32>
    %603 = vector.multi_reduction <add>, %602, %cst_114 [1] : vector<16x16xf32> to vector<16xf32>
    %604 = vector.shape_cast %603 : vector<16xf32> to vector<16x1xf32>
    %cst_115 = arith.constant 2.500000e-01 : f32
    %605 = vector.broadcast %cst_115 : f32 to vector<16x1xf32>
    %606 = arith.mulf %604, %605 : vector<16x1xf32>
    %607 = arith.mulf %370, %374 : vector<16x16xf32>
    %cst_116 = arith.constant dense<0.000000e+00> : vector<16xf32>
    %608 = vector.multi_reduction <add>, %607, %cst_116 [1] : vector<16x16xf32> to vector<16xf32>
    %609 = vector.shape_cast %608 : vector<16xf32> to vector<16x1xf32>
    %cst_117 = arith.constant 2.500000e-01 : f32
    %610 = vector.broadcast %cst_117 : f32 to vector<16x1xf32>
    %611 = arith.mulf %609, %610 : vector<16x1xf32>
    %612 = arith.mulf %370, %375 : vector<16x16xf32>
    %cst_118 = arith.constant dense<0.000000e+00> : vector<16xf32>
    %613 = vector.multi_reduction <add>, %612, %cst_118 [1] : vector<16x16xf32> to vector<16xf32>
    %614 = vector.shape_cast %613 : vector<16xf32> to vector<16x1xf32>
    %cst_119 = arith.constant 2.500000e-01 : f32
    %615 = vector.broadcast %cst_119 : f32 to vector<16x1xf32>
    %616 = arith.mulf %614, %615 : vector<16x1xf32>
    %617 = arith.maximumf %596, %601 : vector<16x1xf32>
    %618 = arith.maximumf %617, %606 : vector<16x1xf32>
    %619 = arith.maximumf %618, %611 : vector<16x1xf32>
    %620 = arith.maximumf %619, %616 : vector<16x1xf32>
    %621 = arith.subf %596, %620 : vector<16x1xf32>
    %622 = math.exp %621 : vector<16x1xf32>
    %623 = arith.subf %601, %620 : vector<16x1xf32>
    %624 = math.exp %623 : vector<16x1xf32>
    %625 = arith.subf %606, %620 : vector<16x1xf32>
    %626 = math.exp %625 : vector<16x1xf32>
    %627 = arith.subf %611, %620 : vector<16x1xf32>
    %628 = math.exp %627 : vector<16x1xf32>
    %629 = arith.subf %616, %620 : vector<16x1xf32>
    %630 = math.exp %629 : vector<16x1xf32>
    %631 = arith.addf %622, %624 : vector<16x1xf32>
    %632 = arith.addf %631, %626 : vector<16x1xf32>
    %633 = arith.addf %632, %628 : vector<16x1xf32>
    %634 = arith.addf %633, %630 : vector<16x1xf32>
    %635 = tpu.reciprocal %634 {approx = true} : vector<16x1xf32> -> vector<16x1xf32>
    %636 = arith.mulf %622, %635 : vector<16x1xf32>
    %637 = arith.mulf %624, %635 : vector<16x1xf32>
    %638 = arith.mulf %626, %635 : vector<16x1xf32>
    %639 = arith.mulf %628, %635 : vector<16x1xf32>
    %640 = arith.mulf %630, %635 : vector<16x1xf32>
    %641 = arith.addf %587, %636 : vector<16x1xf32>
    %642 = arith.addf %588, %637 : vector<16x1xf32>
    %643 = arith.addf %589, %638 : vector<16x1xf32>
    %644 = arith.addf %590, %639 : vector<16x1xf32>
    %645 = arith.addf %591, %640 : vector<16x1xf32>
    %cst_120 = arith.constant 2.000000e-01 : f32
    %646 = vector.broadcast %cst_120 : f32 to vector<16x1xf32>
    %647 = arith.mulf %641, %646 : vector<16x1xf32>
    %648 = vector.broadcast %647 : vector<16x1xf32> to vector<16x16xf32>
    %649 = arith.mulf %648, %376 : vector<16x16xf32>
    %cst_121 = arith.constant 2.000000e-01 : f32
    %650 = vector.broadcast %cst_121 : f32 to vector<16x1xf32>
    %651 = arith.mulf %642, %650 : vector<16x1xf32>
    %652 = vector.broadcast %651 : vector<16x1xf32> to vector<16x16xf32>
    %653 = arith.mulf %652, %377 : vector<16x16xf32>
    %654 = arith.addf %649, %653 : vector<16x16xf32>
    %cst_122 = arith.constant 2.000000e-01 : f32
    %655 = vector.broadcast %cst_122 : f32 to vector<16x1xf32>
    %656 = arith.mulf %643, %655 : vector<16x1xf32>
    %657 = vector.broadcast %656 : vector<16x1xf32> to vector<16x16xf32>
    %658 = arith.mulf %657, %378 : vector<16x16xf32>
    %659 = arith.addf %654, %658 : vector<16x16xf32>
    %cst_123 = arith.constant 2.000000e-01 : f32
    %660 = vector.broadcast %cst_123 : f32 to vector<16x1xf32>
    %661 = arith.mulf %644, %660 : vector<16x1xf32>
    %662 = vector.broadcast %661 : vector<16x1xf32> to vector<16x16xf32>
    %663 = arith.mulf %662, %379 : vector<16x16xf32>
    %664 = arith.addf %659, %663 : vector<16x16xf32>
    %cst_124 = arith.constant 2.000000e-01 : f32
    %665 = vector.broadcast %cst_124 : f32 to vector<16x1xf32>
    %666 = arith.mulf %645, %665 : vector<16x1xf32>
    %667 = vector.broadcast %666 : vector<16x1xf32> to vector<16x16xf32>
    %668 = arith.mulf %667, %380 : vector<16x16xf32>
    %669 = arith.addf %664, %668 : vector<16x16xf32>
    %670 = tpu.concatenate %338, %669 in 1 : vector<16x16xf32>, vector<16x16xf32> -> vector<16x32xf32>
    %671 = arith.truncf %670 : vector<16x32xf32> to vector<16x32xbf16>
    %c0_125 = arith.constant 0 : index
    %c0_126 = arith.constant 0 : index
    %672 = vector.load %arg4[%c0_125, %c0_126] : memref<32x32xbf16, #tpu.memory_space<vmem>>, vector<32x32xbf16>
    %cst_127 = arith.constant dense<0.000000e+00> : vector<16x32xf32>
    %673 = tpu.matmul %671, %672, %cst_127 {dimension_numbers = #tpu.dot_dimension_numbers<[1], [0], [0], [1], [0, 0, 1, 1], [], []>} : vector<16x32xbf16>, vector<32x32xbf16>, vector<16x32xf32> -> vector<16x32xf32>
    %c0_128 = arith.constant 0 : index
    %c0_129 = arith.constant 0 : index
    %674 = vector.load %arg5[%c0_128, %c0_129] : memref<1x32xf32, #tpu.memory_space<vmem>>, vector<1x32xf32>
    %675 = vector.broadcast %674 : vector<1x32xf32> to vector<16x32xf32>
    %676 = arith.addf %673, %675 : vector<16x32xf32>
    %c0_130 = arith.constant 0 : index
    %c0_131 = arith.constant 0 : index
    %677 = vector.load %arg6[%c0_130, %c0_131] : memref<16x32xf32, #tpu.memory_space<vmem>>, vector<16x32xf32>
    tpu.vector_store %arg6[%c0_130, %c0_131], %676 {strides = array<i32>} : memref<16x32xf32, #tpu.memory_space<vmem>>, vector<16x32xf32>,
    return
  }
  func.func @transform_0(%arg0: i32) -> (i32, i32, i32) {
    %c0_i32 = arith.constant 0 : i32
    %c0_i32_0 = arith.constant 0 : i32
    %c0_i32_1 = arith.constant 0 : i32
    return %c0_i32, %arg0, %c0_i32_0 : i32, i32, i32
  }
  func.func @transform_1(%arg0: i32) -> (i32, i32, i32) {
    %c0_i32 = arith.constant 0 : i32
    %c0_i32_0 = arith.constant 0 : i32
    %c0_i32_1 = arith.constant 0 : i32
    return %c0_i32, %arg0, %c0_i32_0 : i32, i32, i32
  }
  func.func @transform_2(%arg0: i32) -> (i32, i32) {
    %c0_i32 = arith.constant 0 : i32
    %c0_i32_0 = arith.constant 0 : i32
    %c0_i32_1 = arith.constant 0 : i32
    return %c0_i32, %c0_i32_0 : i32, i32
  }
  func.func @transform_3(%arg0: i32) -> (i32, i32) {
    %c0_i32 = arith.constant 0 : i32
    %c0_i32_0 = arith.constant 0 : i32
    %c0_i32_1 = arith.constant 0 : i32
    return %c0_i32, %c0_i32_0 : i32, i32
  }
  func.func @transform_4(%arg0: i32) -> (i32, i32) {
    %c0_i32 = arith.constant 0 : i32
    %c0_i32_0 = arith.constant 0 : i32
    %c0_i32_1 = arith.constant 0 : i32
    return %c0_i32, %c0_i32_0 : i32, i32
  }
  func.func @transform_5(%arg0: i32) -> (i32, i32) {
    %c0_i32 = arith.constant 0 : i32
    %c0_i32_0 = arith.constant 0 : i32
    return %arg0, %c0_i32 : i32, i32
  }
}

</mosaic_0001>

<llo_original>
// kernel: tpu_custom_call.1
$region0: #{tpu_custom_call.1}
  #allocation0 [shape = 'u32[]', space=smem, size = 0x4, offset = 0x4, fixed_abs, tag = 'smem constant byte address 0x4 - core index']
  #allocation1 [shape = 'u32[144,128]{1,0:T(1,128)}', space=vmem, size = 0x12000, scoped, tag = 'internal scratch']
  %s0 = inlined_call_operand.hbm [shape: bf16[5,16,34], index: 0, kind: input, shape index: {}]
  %s1 = inlined_call_operand.hbm [shape: f32[5,16,16], index: 1, kind: input, shape index: {}]
  %s2 = inlined_call_operand.hbm [shape: bf16[34,96], index: 2, kind: input, shape index: {}]
  %s3 = inlined_call_operand.hbm [shape: bf16[32,32], index: 3, kind: input, shape index: {}]
  %s4 = inlined_call_operand.vmem [shape: f32[1,32], index: 4, kind: input, shape index: {}]
  %s5 = inlined_call_operand.hbm [shape: f32[16,32], index: 5, kind: output, shape index: {}]
  %s6 = sld [smem:[#allocation0]]
  $region46: #{tpu_custom_call.1} parent=0
    _
  %s8 = ssub.s32 1, %s6
  %s9 = scalar_select 0, %s8, %s6
  $region1: #{tpu_custom_call.1} parent=0
    #allocation2 [shape = 'u8[20480]{0}', space=vmem, size = 0x5000, scoped, tag = 'input window, operand 0, single buffered']
    #allocation3 [shape = 's32[1]{0}', space=sflag, size = 0x4, scoped, tag = 'scoped memory for tpu_custom_call.1']
    #allocation4 [shape = 's32[1]{0}', space=sflag, size = 0x4, scoped, tag = 'scoped memory for tpu_custom_call.1']
    #allocation5 [shape = 'u8[40960]{0}', space=vmem, size = 0xa000, scoped, tag = 'input window, operand 1, single buffered']
    #allocation6 [shape = 's32[1]{0}', space=sflag, size = 0x4, scoped, tag = 'scoped memory for tpu_custom_call.1']
    #allocation7 [shape = 'u8[10240]{0}', space=vmem, size = 0x2800, scoped, tag = 'input window, operand 2, single buffered']
    #allocation8 [shape = 'u8[8192]{0}', space=vmem, size = 0x2000, scoped, tag = 'input window, operand 3, single buffered']
    #allocation9 [shape = 's32[1]{0}', space=sflag, size = 0x4, scoped, tag = 'scoped memory for tpu_custom_call.1']
    #allocation10 [shape = 'u8[8192]{0}', space=vmem, size = 0x2000, scoped, tag = 'output window, operand 0, single buffered']
    %10 = vsyncpa [#allocation3], 0
    %11 = vsyncpa [#allocation6], 0
    %12 = vsyncpa [#allocation9], 0
    %13 = vsyncpa [#allocation4], 0
    // Predicated region
    $region2: #{tpu_custom_call.1} parent=1 // pred_check
      _
    $region3: #{tpu_custom_call.1} parent=1 // pred_check_branch
      %15 = sbr.rel (0) target = $region5
    $region4: #{tpu_custom_call.1} parent=1 // pred_region
      %s17 = ssub.s32 640, 640
      %18 = vsyncadd [#allocation3], %s17
      %s19 = sshll.u32 [#allocation2], 4
      %s20 = int_to_ptr.vmem [resolvable:$true] %s19
      %25 = dma.hbm_to_vmem [thread:$0]  %s0, 640, %s20, [#allocation3], 64, 64, 4
    $region5: #{tpu_custom_call.1} parent=1 // pred_fallthru
      _
    // Predicated region
    $region6: #{tpu_custom_call.1} parent=1 // pred_check
      _
    $region7: #{tpu_custom_call.1} parent=1 // pred_check_branch
      %27 = sbr.rel (0) target = $region9
    $region8: #{tpu_custom_call.1} parent=1 // pred_region
      %s29 = ssub.s32 1280, 1280
      %30 = vsyncadd [#allocation6], %s29
      %s31 = sshll.u32 [#allocation5], 4
      %s32 = int_to_ptr.vmem [resolvable:$true] %s31
      %37 = dma.hbm_to_vmem [thread:$0]  %s1, 1280, %s32, [#allocation6], 128, 128, 8
    $region9: #{tpu_custom_call.1} parent=1 // pred_fallthru
      _
    // Predicated region
    $region10: #{tpu_custom_call.1} parent=1 // pred_check
      _
    $region11: #{tpu_custom_call.1} parent=1 // pred_check_branch
      %39 = sbr.rel (0) target = $region13
    $region12: #{tpu_custom_call.1} parent=1 // pred_region
      %s41 = ssub.s32 320, 320
      %42 = vsyncadd [#allocation6], %s41
      %s43 = sshll.u32 [#allocation7], 4
      %s44 = int_to_ptr.vmem [resolvable:$true] %s43
      %49 = dma.hbm_to_vmem [thread:$0]  %s2, 320, %s44, [#allocation6], 64, 64, 4
    $region13: #{tpu_custom_call.1} parent=1 // pred_fallthru
      _
    // Predicated region
    $region14: #{tpu_custom_call.1} parent=1 // pred_check
      _
    $region15: #{tpu_custom_call.1} parent=1 // pred_check_branch
      %51 = sbr.rel (0) target = $region17
    $region16: #{tpu_custom_call.1} parent=1 // pred_region
      %s53 = ssub.s32 256, 256
      %54 = vsyncadd [#allocation9], %s53
      %s55 = sshll.u32 [#allocation8], 4
      %s56 = int_to_ptr.vmem [resolvable:$true] %s55
      %61 = dma.hbm_to_vmem [thread:$0]  %s3, 256, %s56, [#allocation9], 64, 64, 4
    $region17: #{tpu_custom_call.1} parent=1 // pred_fallthru
      _
    // Predicated region
    $region18: #{tpu_custom_call.1} parent=1 // pred_check
      _
    $region19: #{tpu_custom_call.1} parent=1 // pred_check_branch
      %63 = sbr.rel (0) target = $region21
    $region20: #{tpu_custom_call.1} parent=1 // pred_region
      _
    $region21: #{tpu_custom_call.1} parent=1 // pred_fallthru
      _
    // Predicated region
    $region22: #{tpu_custom_call.1} parent=1 // pred_check
      _
    $region23: #{tpu_custom_call.1} parent=1 // pred_check_branch
      %65 = sbr.rel (0) target = $region25
    $region24: #{tpu_custom_call.1} parent=1 // pred_region
      %66 = dma.done [#allocation3], 640
    $region25: #{tpu_custom_call.1} parent=1 // pred_fallthru
      _
    // Predicated region
    $region26: #{tpu_custom_call.1} parent=1 // pred_check
      _
    $region27: #{tpu_custom_call.1} parent=1 // pred_check_branch
      %68 = sbr.rel (0) target = $region29
    $region28: #{tpu_custom_call.1} parent=1 // pred_region
      %69 = dma.done [#allocation6], 1280
    $region29: #{tpu_custom_call.1} parent=1 // pred_fallthru
      _
    // Predicated region
    $region30: #{tpu_custom_call.1} parent=1 // pred_check
      _
    $region31: #{tpu_custom_call.1} parent=1 // pred_check_branch
      %71 = sbr.rel (0) target = $region33
    $region32: #{tpu_custom_call.1} parent=1 // pred_region
      %72 = dma.done [#allocation6], 320
    $region33: #{tpu_custom_call.1} parent=1 // pred_fallthru
      _
    // Predicated region
    $region34: #{tpu_custom_call.1} parent=1 // pred_check
      _
    $region35: #{tpu_custom_call.1} parent=1 // pred_check_branch
      %74 = sbr.rel (0) target = $region37
    $region36: #{tpu_custom_call.1} parent=1 // pred_region
      %75 = dma.done [#allocation9], 256
    $region37: #{tpu_custom_call.1} parent=1 // pred_fallthru
      _
    %v77 = vld [vmem:[#allocation2] sm:$0xf]
    %v78 = vld [vmem:[#allocation2 + $0x4] sm:$0xf]
    %v79 = vld [vmem:[#allocation2 + $0x8] sm:$0xf]
    %v80 = vld [vmem:[#allocation2 + $0xc] sm:$0xf]
    %v81 = vld [vmem:[#allocation2 + $0x10] sm:$0xf]
    %v82 = vld [vmem:[#allocation2 + $0x14] sm:$0xf]
    %v83 = vld [vmem:[#allocation2 + $0x18] sm:$0xf]
    %v84 = vld [vmem:[#allocation2 + $0x1c] sm:$0xf]
    %v85 = vld [vmem:[#allocation2 + $0x20] sm:$0xf]
    %v86 = vld [vmem:[#allocation2 + $0x24] sm:$0xf]
    %v87 = vld [vmem:[#allocation5] sm:$0xff]
    %v88 = vld [vmem:[#allocation5 + $0x8] sm:$0xff]
    %v89 = vld [vmem:[#allocation5 + $0x10] sm:$0xff]
    %v90 = vld [vmem:[#allocation5 + $0x18] sm:$0xff]
    %v91 = vld [vmem:[#allocation5 + $0x20] sm:$0xff]
    %v92 = vld [vmem:[#allocation5 + $0x28] sm:$0xff]
    %v93 = vld [vmem:[#allocation5 + $0x30] sm:$0xff]
    %v94 = vld [vmem:[#allocation5 + $0x38] sm:$0xff]
    %v95 = vld [vmem:[#allocation5 + $0x40] sm:$0xff]
    %v96 = vld [vmem:[#allocation5 + $0x48] sm:$0xff]
    %v97 = vld [vmem:[#allocation7] sm:$0xf]
    %v98 = vld [vmem:[#allocation7 + $0x4] sm:$0xf]
    %v99 = vld [vmem:[#allocation7 + $0x8] sm:$0xf]
    %v100 = vld [vmem:[#allocation7 + $0xc] sm:$0xf]
    %v101 = vld [vmem:[#allocation7 + $0x10] sm:$0x1]
    %v112 = vunpack.c.l.b16 %v77
    %v113 = vunpack.c.l.b16 %v78
    %v114 = vunpack.c.l.b16 %v79
    %v115 = vunpack.c.l.b16 %v80
    %v116 = vunpack.c.l.b16 %v81
    %v117 = vunpack.c.l.b16 %v82
    %v118 = vunpack.c.l.b16 %v83
    %v119 = vunpack.c.l.b16 %v84
    %v120 = vunpack.c.l.b16 %v85
    %v121 = vunpack.c.l.b16 %v86
    %v122 = vpack.c.b16 %v113, %v112
    %v123 = vpack.c.b16 %v115, %v114
    %v124 = vpack.c.b16 %v117, %v116
    %v125 = vpack.c.b16 %v119, %v118
    %v126 = vpack.c.b16 %v121, %v120
    %v132 = vunpack.c.l.b16 %v97
    %v133 = vunpack.c.l.b16 %v98
    %v134 = vunpack.c.l.b16 %v99
    %v135 = vunpack.c.l.b16 %v100
    %v136 = vunpack.c.l.b16 %v101
    %v137 = vpack.c.b16 %v133, %v132
    %v138 = vpack.c.b16 %v135, %v134
    %v139 = vpack.c.b16 %v136, %v136
    %vm142 = vcmask 277504
    %v144 = vsel %vm142, %v122, 0
    %v147 = vsel %vm142, %v123, 0
    %v150 = vsel %vm142, %v124, 0
    %v153 = vsel %vm142, %v125, 0
    %v156 = vsel %vm142, %v126, 0
    %vm158 = vcmask 1040384
    %v160 = vsel %vm158, %v139, 0
    %162 = vmatprep.subr.bf16.mxu0 0
    %163 = vmatpush1.bf16.msra.mxu0 %v137
    %164 = vmatprep.subr.bf16.mxu0 0
    %165 = vmatpush1.bf16.msra.mxu0 %v138
    %166 = vmatprep.subr.bf16.mxu0 0
    %167 = vmatpush1.bf16.msra.mxu0 %v160
    %168 = vmatprep.subr.bf16.mxu0 0
    %169 = vmatpush1.bf16.msra.mxu0 0
    %170 = vmatprep.subr.bf16.mxu0 0
    %171 = vmatpush1.bf16.msra.mxu0 0
    %172 = vmatprep.subr.bf16.mxu0 0
    %173 = vmatpush1.bf16.msra.mxu0 0
    %174 = vmatprep.subr.bf16.mxu0 0
    %175 = vmatpush1.bf16.msra.mxu0 0
    %176 = vmatprep.subr.bf16.mxu0 0
    %177 = vmatpush1.bf16.msra.mxu0 0
    %178 = vmatprep.subr.bf16.mxu0 0
    %179 = vmatpush1.bf16.msra.mxu0 0
    %180 = vmatprep.subr.bf16.mxu0 0
    %181 = vmatpush1.bf16.msra.mxu0 0
    %182 = vmatprep.subr.bf16.mxu0 0
    %183 = vmatpush1.bf16.msra.mxu0 0
    %184 = vmatprep.subr.bf16.mxu0 0
    %185 = vmatpush1.bf16.msra.mxu0 0
    %186 = vmatprep.subr.bf16.mxu0 0
    %187 = vmatpush1.bf16.msra.mxu0 0
    %188 = vmatprep.subr.bf16.mxu0 0
    %189 = vmatpush1.bf16.msra.mxu0 0
    %190 = vmatprep.subr.bf16.mxu0 0
    %191 = vmatpush1.bf16.msra.mxu0 0
    %192 = vmatprep.subr.bf16.mxu0 0
    %193 = vmatpush1.bf16.msra.mxu0 0
    %194 = vmatprep.mubr.bf16.mxu0 0
    %195 = vmatmul.mubr.bf16.gmra.mrb[0].mxu0 %v144
    %v196 = vpop.f32.mrb[0].mxu0
    %v197 = vadd.f32 0.0, %v196
    %v198 = vpop.f32.mrb[0].mxu0
    %v199 = vpop.f32.mrb[0].mxu0
    %v200 = vadd.f32 0.0, %v199
    %v201 = vpop.f32.mrb[0].mxu0
    %202 = vmatprep.mubr.bf16.mxu0 0
    %203 = vmatmul.mubr.bf16.gmra.mrb[0].mxu0 %v147
    %v204 = vpop.f32.mrb[0].mxu0
    %v205 = vadd.f32 0.0, %v204
    %v206 = vpop.f32.mrb[0].mxu0
    %v207 = vpop.f32.mrb[0].mxu0
    %v208 = vadd.f32 0.0, %v207
    %v209 = vpop.f32.mrb[0].mxu0
    %210 = vmatprep.mubr.bf16.mxu0 0
    %211 = vmatmul.mubr.bf16.gmra.mrb[0].mxu0 %v150
    %v212 = vpop.f32.mrb[0].mxu0
    %v213 = vadd.f32 0.0, %v212
    %v214 = vpop.f32.mrb[0].mxu0
    %v215 = vpop.f32.mrb[0].mxu0
    %v216 = vadd.f32 0.0, %v215
    %v217 = vpop.f32.mrb[0].mxu0
    %218 = vmatprep.mubr.bf16.mxu0 0
    %219 = vmatmul.mubr.bf16.gmra.mrb[0].mxu0 %v153
    %v220 = vpop.f32.mrb[0].mxu0
    %v221 = vadd.f32 0.0, %v220
    %v222 = vpop.f32.mrb[0].mxu0
    %v223 = vpop.f32.mrb[0].mxu0
    %v224 = vadd.f32 0.0, %v223
    %v225 = vpop.f32.mrb[0].mxu0
    %226 = vmatprep.mubr.bf16.mxu0 0
    %227 = vmatmul.mubr.bf16.gmra.mrb[0].mxu0 %v156
    %v228 = vpop.f32.mrb[0].mxu0
    %v229 = vadd.f32 0.0, %v228
    %v230 = vpop.f32.mrb[0].mxu0
    %v231 = vpop.f32.mrb[0].mxu0
    %v232 = vadd.f32 0.0, %v231
    %v233 = vpop.f32.mrb[0].mxu0
    %234 = vdwg.mxu0
    %v235 = vand.u32 2147483647, %v87
    %vm236 = vcmp.le.f32.partialorder %v235, 0.7853982
    %vm237 = vcmp.lt.s32.totalorder %v87, 0
    %v238 = vand.u32 %v87, 2139095040
    %v239 = vshrl.u32 %v238, 23
    %v240 = vsub.s32 %v239, 127
    %v241 = vand.u32 2147483647, %v87
    %v242 = vand.u32 %v241, 8388607
    %v243 = vor.u32 %v242, 8388608
    %v244 = vsub.s32 0, %v243
    %v245 = vadd.s32 %v240, 1
    %vm246 = vcmp.gt.s32.totalorder %v245, 0
    %v247 = vsel %vm246, %v245, 0
    %v248 = vshrl.u32 %v247, 5
    %v249 = vand.u32 %v247, 31
    %v250 = vsub.s32 32, %v249
    %v251 = vshrl.u32 683565275, %v250
    %v252 = vshll.u32 683565275, %v249
    %v253 = vshrl.u32 2475754826, %v250
    %v254 = vor.u32 %v252, %v253
    %v255 = vshll.u32 2475754826, %v249
    %v256 = vshrl.u32 2131351028, %v250
    %v257 = vor.u32 %v255, %v256
    %v258 = vshll.u32 2131351028, %v249
    %v259 = vshrl.u32 2102212464, %v250
    %v260 = vor.u32 %v258, %v259
    %v261 = vshll.u32 2102212464, %v249
    %v262 = vshrl.u32 920167782, %v250
    %v263 = vor.u32 %v261, %v262
    %v264 = vshll.u32 920167782, %v249
    %v265 = vshrl.u32 1326507024, %v250
    %v266 = vor.u32 %v264, %v265
    %vm267 = vcmp.lt.s32.totalorder %v248, 1
    %vm268 = vcmp.lt.s32.totalorder %v248, 2
    %vm269 = vcmp.lt.s32.totalorder %v248, 3
    %vm270 = vcmp.lt.s32.totalorder %v248, 4
    %v271 = vsel %vm267, %v251, %v254
    %v272 = vsel %vm270, %v260, 2102212464
    %v273 = vsel %vm269, %v257, %v272
    %v274 = vsel %vm268, %v271, %v273
    %v275 = vsel %vm267, %v254, %v257
    %v276 = vsel %vm270, %v263, 920167782
    %v277 = vsel %vm269, %v260, %v276
    %v278 = vsel %vm268, %v275, %v277
    %v279 = vsel %vm267, %v257, %v260
    %v280 = vsel %vm270, %v266, 1326507024
    %v281 = vsel %vm269, %v263, %v280
    %v282 = vsel %vm268, %v279, %v281
    %v283 = vshll.u32 %v243, 8
    %v284 = vmul.u32.u64.compose %v283, %v282
    %v285 = vextract.low.u32 %v284
    %v286 = vextract.high.u32 %v284
    %v287 = vmul.u32.u64.compose %v283, %v278
    %v288 = vextract.low.u32 %v287
    %v289 = vextract.high.u32 %v287
    %v290 = vmul.u32 %v283, %v274
    %v291 = vadd.s32 %v286, %v288
    %vm292 = vc.u32 %v286, %v288
    %v293 = vadd.s32 %v289, 1
    %v294 = vsel %vm292, %v293, %v289
    %v295 = vadd.s32 %v290, %v294
    %v296 = vadd.s32 %v295, 536870912
    %v297 = vshrl.u32 %v296, 30
    %v298 = vshll.u32 %v297, 30
    %v299 = vsub.s32 %v295, %v298
    %vm300 = vcmp.lt.s32.totalorder %v299, 0
    %v301 = vsub.s32 0, %v299
    %v302 = vsel %vm300, %v301, %v299
    %v303 = vclz %v302
    %v304 = vsub.s32 %v303, 2
    %vm305 = vcmp.gt.s32.totalorder 0, %v304
    %v306 = vsel %vm305, 0, %v304
    %v307 = vsub.s32 32, %v306
    %v308 = vshll.u32 %v299, %v306
    %v309 = vshrl.u32 %v291, %v307
    %v310 = vor.u32 %v308, %v309
    %v311 = vsub.s32 4294967266, %v306
    %v312 = vadd.s32 %v311, 127
    %v313 = vshll.u32 %v312, 23
    %v314 = vor.u32 4788187, %v313
    %v315 = vand.u32 2147483647, %v314
    %v317 = vcvt.s32.f32 %v310
    %v318 = vmul.f32 %v317, %v315
    %v319 = vxor.u32 %v318, 2147483648
    %v320 = vsel %vm237, %v319, %v318
    %v321 = vsub.s32 4, %v297
    %v322 = vsel %vm237, %v321, %v297
    %v323 = vsel %vm236, %v87, %v320
    %v324 = vsel %vm236, 0, %v322
    %v325 = vcosq.f32.pop %v323
    %v326 = vsinq.f32.pop %v323
    %vm327 = vweird.f32 %v87
    %v328 = vand.u32 %v324, 3
    %vm329 = vcmp.lt.s32.totalorder %v328, 2
    %vm330 = vcmp.eq.s32.totalorder %v328, 0
    %v331 = vxor.u32 %v326, 2147483648
    %v332 = vsel %vm330, %v325, %v331
    %vm333 = vcmp.eq.s32.totalorder %v328, 2
    %v334 = vxor.u32 %v325, 2147483648
    %v335 = vsel %vm333, %v334, %v326
    %v336 = vsel %vm329, %v332, %v335
    %v337 = vsel %vm327, nan, %v336
    %v338 = vand.u32 2147483647, %v88
    %vm339 = vcmp.le.f32.partialorder %v338, 0.7853982
    %vm340 = vcmp.lt.s32.totalorder %v88, 0
    %v341 = vand.u32 %v88, 2139095040
    %v342 = vshrl.u32 %v341, 23
    %v343 = vsub.s32 %v342, 127
    %v344 = vand.u32 2147483647, %v88
    %v345 = vand.u32 %v344, 8388607
    %v346 = vor.u32 %v345, 8388608
    %v347 = vsub.s32 0, %v346
    %v348 = vadd.s32 %v343, 1
    %vm349 = vcmp.gt.s32.totalorder %v348, 0
    %v350 = vsel %vm349, %v348, 0
    %v351 = vshrl.u32 %v350, 5
    %v352 = vand.u32 %v350, 31
    %v353 = vsub.s32 32, %v352
    %v354 = vshrl.u32 683565275, %v353
    %v355 = vshll.u32 683565275, %v352
    %v356 = vshrl.u32 2475754826, %v353
    %v357 = vor.u32 %v355, %v356
    %v358 = vshll.u32 2475754826, %v352
    %v359 = vshrl.u32 2131351028, %v353
    %v360 = vor.u32 %v358, %v359
    %v361 = vshll.u32 2131351028, %v352
    %v362 = vshrl.u32 2102212464, %v353
    %v363 = vor.u32 %v361, %v362
    %v364 = vshll.u32 2102212464, %v352
    %v365 = vshrl.u32 920167782, %v353
    %v366 = vor.u32 %v364, %v365
    %v367 = vshll.u32 920167782, %v352
    %v368 = vshrl.u32 1326507024, %v353
    %v369 = vor.u32 %v367, %v368
    %vm370 = vcmp.lt.s32.totalorder %v351, 1
    %vm371 = vcmp.lt.s32.totalorder %v351, 2
    %vm372 = vcmp.lt.s32.totalorder %v351, 3
    %vm373 = vcmp.lt.s32.totalorder %v351, 4
    %v374 = vsel %vm370, %v354, %v357
    %v375 = vsel %vm373, %v363, 2102212464
    %v376 = vsel %vm372, %v360, %v375
    %v377 = vsel %vm371, %v374, %v376
    %v378 = vsel %vm370, %v357, %v360
    %v379 = vsel %vm373, %v366, 920167782
    %v380 = vsel %vm372, %v363, %v379
    %v381 = vsel %vm371, %v378, %v380
    %v382 = vsel %vm370, %v360, %v363
    %v383 = vsel %vm373, %v369, 1326507024
    %v384 = vsel %vm372, %v366, %v383
    %v385 = vsel %vm371, %v382, %v384
    %v386 = vshll.u32 %v346, 8
    %v387 = vmul.u32.u64.compose %v386, %v385
    %v388 = vextract.low.u32 %v387
    %v389 = vextract.high.u32 %v387
    %v390 = vmul.u32.u64.compose %v386, %v381
    %v391 = vextract.low.u32 %v390
    %v392 = vextract.high.u32 %v390
    %v393 = vmul.u32 %v386, %v377
    %v394 = vadd.s32 %v389, %v391
    %vm395 = vc.u32 %v389, %v391
    %v396 = vadd.s32 %v392, 1
    %v397 = vsel %vm395, %v396, %v392
    %v398 = vadd.s32 %v393, %v397
    %v399 = vadd.s32 %v398, 536870912
    %v400 = vshrl.u32 %v399, 30
    %v401 = vshll.u32 %v400, 30
    %v402 = vsub.s32 %v398, %v401
    %vm403 = vcmp.lt.s32.totalorder %v402, 0
    %v404 = vsub.s32 0, %v402
    %v405 = vsel %vm403, %v404, %v402
    %v406 = vclz %v405
    %v407 = vsub.s32 %v406, 2
    %vm408 = vcmp.gt.s32.totalorder 0, %v407
    %v409 = vsel %vm408, 0, %v407
    %v410 = vsub.s32 32, %v409
    %v411 = vshll.u32 %v402, %v409
    %v412 = vshrl.u32 %v394, %v410
    %v413 = vor.u32 %v411, %v412
    %v414 = vsub.s32 4294967266, %v409
    %v415 = vadd.s32 %v414, 127
    %v416 = vshll.u32 %v415, 23
    %v417 = vor.u32 4788187, %v416
    %v418 = vand.u32 2147483647, %v417
    %v420 = vcvt.s32.f32 %v413
    %v421 = vmul.f32 %v420, %v418
    %v422 = vxor.u32 %v421, 2147483648
    %v423 = vsel %vm340, %v422, %v421
    %v424 = vsub.s32 4, %v400
    %v425 = vsel %vm340, %v424, %v400
    %v426 = vsel %vm339, %v88, %v423
    %v427 = vsel %vm339, 0, %v425
    %v428 = vcosq.f32.pop %v426
    %v429 = vsinq.f32.pop %v426
    %vm430 = vweird.f32 %v88
    %v431 = vand.u32 %v427, 3
    %vm432 = vcmp.lt.s32.totalorder %v431, 2
    %vm433 = vcmp.eq.s32.totalorder %v431, 0
    %v434 = vxor.u32 %v429, 2147483648
    %v435 = vsel %vm433, %v428, %v434
    %vm436 = vcmp.eq.s32.totalorder %v431, 2
    %v437 = vxor.u32 %v428, 2147483648
    %v438 = vsel %vm436, %v437, %v429
    %v439 = vsel %vm432, %v435, %v438
    %v440 = vsel %vm430, nan, %v439
    %v441 = vand.u32 2147483647, %v89
    %vm442 = vcmp.le.f32.partialorder %v441, 0.7853982
    %vm443 = vcmp.lt.s32.totalorder %v89, 0
    %v444 = vand.u32 %v89, 2139095040
    %v445 = vshrl.u32 %v444, 23
    %v446 = vsub.s32 %v445, 127
    %v447 = vand.u32 2147483647, %v89
    %v448 = vand.u32 %v447, 8388607
    %v449 = vor.u32 %v448, 8388608
    %v450 = vsub.s32 0, %v449
    %v451 = vadd.s32 %v446, 1
    %vm452 = vcmp.gt.s32.totalorder %v451, 0
    %v453 = vsel %vm452, %v451, 0
    %v454 = vshrl.u32 %v453, 5
    %v455 = vand.u32 %v453, 31
    %v456 = vsub.s32 32, %v455
    %v457 = vshrl.u32 683565275, %v456
    %v458 = vshll.u32 683565275, %v455
    %v459 = vshrl.u32 2475754826, %v456
    %v460 = vor.u32 %v458, %v459
    %v461 = vshll.u32 2475754826, %v455
    %v462 = vshrl.u32 2131351028, %v456
    %v463 = vor.u32 %v461, %v462
    %v464 = vshll.u32 2131351028, %v455
    %v465 = vshrl.u32 2102212464, %v456
    %v466 = vor.u32 %v464, %v465
    %v467 = vshll.u32 2102212464, %v455
    %v468 = vshrl.u32 920167782, %v456
    %v469 = vor.u32 %v467, %v468
    %v470 = vshll.u32 920167782, %v455
    %v471 = vshrl.u32 1326507024, %v456
    %v472 = vor.u32 %v470, %v471
    %vm473 = vcmp.lt.s32.totalorder %v454, 1
    %vm474 = vcmp.lt.s32.totalorder %v454, 2
    %vm475 = vcmp.lt.s32.totalorder %v454, 3
    %vm476 = vcmp.lt.s32.totalorder %v454, 4
    %v477 = vsel %vm473, %v457, %v460
    %v478 = vsel %vm476, %v466, 2102212464
    %v479 = vsel %vm475, %v463, %v478
    %v480 = vsel %vm474, %v477, %v479
    %v481 = vsel %vm473, %v460, %v463
    %v482 = vsel %vm476, %v469, 920167782
    %v483 = vsel %vm475, %v466, %v482
    %v484 = vsel %vm474, %v481, %v483
    %v485 = vsel %vm473, %v463, %v466
    %v486 = vsel %vm476, %v472, 1326507024
    %v487 = vsel %vm475, %v469, %v486
    %v488 = vsel %vm474, %v485, %v487
    %v489 = vshll.u32 %v449, 8
    %v490 = vmul.u32.u64.compose %v489, %v488
    %v491 = vextract.low.u32 %v490
    %v492 = vextract.high.u32 %v490
    %v493 = vmul.u32.u64.compose %v489, %v484
    %v494 = vextract.low.u32 %v493
    %v495 = vextract.high.u32 %v493
    %v496 = vmul.u32 %v489, %v480
    %v497 = vadd.s32 %v492, %v494
    %vm498 = vc.u32 %v492, %v494
    %v499 = vadd.s32 %v495, 1
    %v500 = vsel %vm498, %v499, %v495
    %v501 = vadd.s32 %v496, %v500
    %v502 = vadd.s32 %v501, 536870912
    %v503 = vshrl.u32 %v502, 30
    %v504 = vshll.u32 %v503, 30
    %v505 = vsub.s32 %v501, %v504
    %vm506 = vcmp.lt.s32.totalorder %v505, 0
    %v507 = vsub.s32 0, %v505
    %v508 = vsel %vm506, %v507, %v505
    %v509 = vclz %v508
    %v510 = vsub.s32 %v509, 2
    %vm511 = vcmp.gt.s32.totalorder 0, %v510
    %v512 = vsel %vm511, 0, %v510
    %v513 = vsub.s32 32, %v512
    %v514 = vshll.u32 %v505, %v512
    %v515 = vshrl.u32 %v497, %v513
    %v516 = vor.u32 %v514, %v515
    %v517 = vsub.s32 4294967266, %v512
    %v518 = vadd.s32 %v517, 127
    %v519 = vshll.u32 %v518, 23
    %v520 = vor.u32 4788187, %v519
    %v521 = vand.u32 2147483647, %v520
    %v523 = vcvt.s32.f32 %v516
    %v524 = vmul.f32 %v523, %v521
    %v525 = vxor.u32 %v524, 2147483648
    %v526 = vsel %vm443, %v525, %v524
    %v527 = vsub.s32 4, %v503
    %v528 = vsel %vm443, %v527, %v503
    %v529 = vsel %vm442, %v89, %v526
    %v530 = vsel %vm442, 0, %v528
    %v531 = vcosq.f32.pop %v529
    %v532 = vsinq.f32.pop %v529
    %vm533 = vweird.f32 %v89
    %v534 = vand.u32 %v530, 3
    %vm535 = vcmp.lt.s32.totalorder %v534, 2
    %vm536 = vcmp.eq.s32.totalorder %v534, 0
    %v537 = vxor.u32 %v532, 2147483648
    %v538 = vsel %vm536, %v531, %v537
    %vm539 = vcmp.eq.s32.totalorder %v534, 2
    %v540 = vxor.u32 %v531, 2147483648
    %v541 = vsel %vm539, %v540, %v532
    %v542 = vsel %vm535, %v538, %v541
    %v543 = vsel %vm533, nan, %v542
    %v544 = vand.u32 2147483647, %v90
    %vm545 = vcmp.le.f32.partialorder %v544, 0.7853982
    %vm546 = vcmp.lt.s32.totalorder %v90, 0
    %v547 = vand.u32 %v90, 2139095040
    %v548 = vshrl.u32 %v547, 23
    %v549 = vsub.s32 %v548, 127
    %v550 = vand.u32 2147483647, %v90
    %v551 = vand.u32 %v550, 8388607
    %v552 = vor.u32 %v551, 8388608
    %v553 = vsub.s32 0, %v552
    %v554 = vadd.s32 %v549, 1
    %vm555 = vcmp.gt.s32.totalorder %v554, 0
    %v556 = vsel %vm555, %v554, 0
    %v557 = vshrl.u32 %v556, 5
    %v558 = vand.u32 %v556, 31
    %v559 = vsub.s32 32, %v558
    %v560 = vshrl.u32 683565275, %v559
    %v561 = vshll.u32 683565275, %v558
    %v562 = vshrl.u32 2475754826, %v559
    %v563 = vor.u32 %v561, %v562
    %v564 = vshll.u32 2475754826, %v558
    %v565 = vshrl.u32 2131351028, %v559
    %v566 = vor.u32 %v564, %v565
    %v567 = vshll.u32 2131351028, %v558
    %v568 = vshrl.u32 2102212464, %v559
    %v569 = vor.u32 %v567, %v568
    %v570 = vshll.u32 2102212464, %v558
    %v571 = vshrl.u32 920167782, %v559
    %v572 = vor.u32 %v570, %v571
    %v573 = vshll.u32 920167782, %v558
    %v574 = vshrl.u32 1326507024, %v559
    %v575 = vor.u32 %v573, %v574
    %vm576 = vcmp.lt.s32.totalorder %v557, 1
    %vm577 = vcmp.lt.s32.totalorder %v557, 2
    %vm578 = vcmp.lt.s32.totalorder %v557, 3
    %vm579 = vcmp.lt.s32.totalorder %v557, 4
    %v580 = vsel %vm576, %v560, %v563
    %v581 = vsel %vm579, %v569, 2102212464
    %v582 = vsel %vm578, %v566, %v581
    %v583 = vsel %vm577, %v580, %v582
    %v584 = vsel %vm576, %v563, %v566
    %v585 = vsel %vm579, %v572, 920167782
    %v586 = vsel %vm578, %v569, %v585
    %v587 = vsel %vm577, %v584, %v586
    %v588 = vsel %vm576, %v566, %v569
    %v589 = vsel %vm579, %v575, 1326507024
    %v590 = vsel %vm578, %v572, %v589
    %v591 = vsel %vm577, %v588, %v590
    %v592 = vshll.u32 %v552, 8
    %v593 = vmul.u32.u64.compose %v592, %v591
    %v594 = vextract.low.u32 %v593
    %v595 = vextract.high.u32 %v593
    %v596 = vmul.u32.u64.compose %v592, %v587
    %v597 = vextract.low.u32 %v596
    %v598 = vextract.high.u32 %v596
    %v599 = vmul.u32 %v592, %v583
    %v600 = vadd.s32 %v595, %v597
    %vm601 = vc.u32 %v595, %v597
    %v602 = vadd.s32 %v598, 1
    %v603 = vsel %vm601, %v602, %v598
    %v604 = vadd.s32 %v599, %v603
    %v605 = vadd.s32 %v604, 536870912
    %v606 = vshrl.u32 %v605, 30
    %v607 = vshll.u32 %v606, 30
    %v608 = vsub.s32 %v604, %v607
    %vm609 = vcmp.lt.s32.totalorder %v608, 0
    %v610 = vsub.s32 0, %v608
    %v611 = vsel %vm609, %v610, %v608
    %v612 = vclz %v611
    %v613 = vsub.s32 %v612, 2
    %vm614 = vcmp.gt.s32.totalorder 0, %v613
    %v615 = vsel %vm614, 0, %v613
    %v616 = vsub.s32 32, %v615
    %v617 = vshll.u32 %v608, %v615
    %v618 = vshrl.u32 %v600, %v616
    %v619 = vor.u32 %v617, %v618
    %v620 = vsub.s32 4294967266, %v615
    %v621 = vadd.s32 %v620, 127
    %v622 = vshll.u32 %v621, 23
    %v623 = vor.u32 4788187, %v622
    %v624 = vand.u32 2147483647, %v623
    %v626 = vcvt.s32.f32 %v619
    %v627 = vmul.f32 %v626, %v624
    %v628 = vxor.u32 %v627, 2147483648
    %v629 = vsel %vm546, %v628, %v627
    %v630 = vsub.s32 4, %v606
    %v631 = vsel %vm546, %v630, %v606
    %v632 = vsel %vm545, %v90, %v629
    %v633 = vsel %vm545, 0, %v631
    %v634 = vcosq.f32.pop %v632
    %v635 = vsinq.f32.pop %v632
    %vm636 = vweird.f32 %v90
    %v637 = vand.u32 %v633, 3
    %vm638 = vcmp.lt.s32.totalorder %v637, 2
    %vm639 = vcmp.eq.s32.totalorder %v637, 0
    %v640 = vxor.u32 %v635, 2147483648
    %v641 = vsel %vm639, %v634, %v640
    %vm642 = vcmp.eq.s32.totalorder %v637, 2
    %v643 = vxor.u32 %v634, 2147483648
    %v644 = vsel %vm642, %v643, %v635
    %v645 = vsel %vm638, %v641, %v644
    %v646 = vsel %vm636, nan, %v645
    %v647 = vand.u32 2147483647, %v91
    %vm648 = vcmp.le.f32.partialorder %v647, 0.7853982
    %vm649 = vcmp.lt.s32.totalorder %v91, 0
    %v650 = vand.u32 %v91, 2139095040
    %v651 = vshrl.u32 %v650, 23
    %v652 = vsub.s32 %v651, 127
    %v653 = vand.u32 2147483647, %v91
    %v654 = vand.u32 %v653, 8388607
    %v655 = vor.u32 %v654, 8388608
    %v656 = vsub.s32 0, %v655
    %v657 = vadd.s32 %v652, 1
    %vm658 = vcmp.gt.s32.totalorder %v657, 0
    %v659 = vsel %vm658, %v657, 0
    %v660 = vshrl.u32 %v659, 5
    %v661 = vand.u32 %v659, 31
    %v662 = vsub.s32 32, %v661
    %v663 = vshrl.u32 683565275, %v662
    %v664 = vshll.u32 683565275, %v661
    %v665 = vshrl.u32 2475754826, %v662
    %v666 = vor.u32 %v664, %v665
    %v667 = vshll.u32 2475754826, %v661
    %v668 = vshrl.u32 2131351028, %v662
    %v669 = vor.u32 %v667, %v668
    %v670 = vshll.u32 2131351028, %v661
    %v671 = vshrl.u32 2102212464, %v662
    %v672 = vor.u32 %v670, %v671
    %v673 = vshll.u32 2102212464, %v661
    %v674 = vshrl.u32 920167782, %v662
    %v675 = vor.u32 %v673, %v674
    %v676 = vshll.u32 920167782, %v661
    %v677 = vshrl.u32 1326507024, %v662
    %v678 = vor.u32 %v676, %v677
    %vm679 = vcmp.lt.s32.totalorder %v660, 1
    %vm680 = vcmp.lt.s32.totalorder %v660, 2
    %vm681 = vcmp.lt.s32.totalorder %v660, 3
    %vm682 = vcmp.lt.s32.totalorder %v660, 4
    %v683 = vsel %vm679, %v663, %v666
    %v684 = vsel %vm682, %v672, 2102212464
    %v685 = vsel %vm681, %v669, %v684
    %v686 = vsel %vm680, %v683, %v685
    %v687 = vsel %vm679, %v666, %v669
    %v688 = vsel %vm682, %v675, 920167782
    %v689 = vsel %vm681, %v672, %v688
    %v690 = vsel %vm680, %v687, %v689
    %v691 = vsel %vm679, %v669, %v672
    %v692 = vsel %vm682, %v678, 1326507024
    %v693 = vsel %vm681, %v675, %v692
    %v694 = vsel %vm680, %v691, %v693
    %v695 = vshll.u32 %v655, 8
    %v696 = vmul.u32.u64.compose %v695, %v694
    %v697 = vextract.low.u32 %v696
    %v698 = vextract.high.u32 %v696
    %v699 = vmul.u32.u64.compose %v695, %v690
    %v700 = vextract.low.u32 %v699
    %v701 = vextract.high.u32 %v699
    %v702 = vmul.u32 %v695, %v686
    %v703 = vadd.s32 %v698, %v700
    %vm704 = vc.u32 %v698, %v700
    %v705 = vadd.s32 %v701, 1
    %v706 = vsel %vm704, %v705, %v701
    %v707 = vadd.s32 %v702, %v706
    %v708 = vadd.s32 %v707, 536870912
    %v709 = vshrl.u32 %v708, 30
    %v710 = vshll.u32 %v709, 30
    %v711 = vsub.s32 %v707, %v710
    %vm712 = vcmp.lt.s32.totalorder %v711, 0
    %v713 = vsub.s32 0, %v711
    %v714 = vsel %vm712, %v713, %v711
    %v715 = vclz %v714
    %v716 = vsub.s32 %v715, 2
    %vm717 = vcmp.gt.s32.totalorder 0, %v716
    %v718 = vsel %vm717, 0, %v716
    %v719 = vsub.s32 32, %v718
    %v720 = vshll.u32 %v711, %v718
    %v721 = vshrl.u32 %v703, %v719
    %v722 = vor.u32 %v720, %v721
    %v723 = vsub.s32 4294967266, %v718
    %v724 = vadd.s32 %v723, 127
    %v725 = vshll.u32 %v724, 23
    %v726 = vor.u32 4788187, %v725
    %v727 = vand.u32 2147483647, %v726
    %v729 = vcvt.s32.f32 %v722
    %v730 = vmul.f32 %v729, %v727
    %v731 = vxor.u32 %v730, 2147483648
    %v732 = vsel %vm649, %v731, %v730
    %v733 = vsub.s32 4, %v709
    %v734 = vsel %vm649, %v733, %v709
    %v735 = vsel %vm648, %v91, %v732
    %v736 = vsel %vm648, 0, %v734
    %v737 = vcosq.f32.pop %v735
    %v738 = vsinq.f32.pop %v735
    %vm739 = vweird.f32 %v91
    %v740 = vand.u32 %v736, 3
    %vm741 = vcmp.lt.s32.totalorder %v740, 2
    %vm742 = vcmp.eq.s32.totalorder %v740, 0
    %v743 = vxor.u32 %v738, 2147483648
    %v744 = vsel %vm742, %v737, %v743
    %vm745 = vcmp.eq.s32.totalorder %v740, 2
    %v746 = vxor.u32 %v737, 2147483648
    %v747 = vsel %vm745, %v746, %v738
    %v748 = vsel %vm741, %v744, %v747
    %v749 = vsel %vm739, nan, %v748
    %v750 = vand.u32 2147483647, %v92
    %vm751 = vcmp.le.f32.partialorder %v750, 0.7853982
    %vm752 = vcmp.lt.s32.totalorder %v92, 0
    %v753 = vand.u32 %v92, 2139095040
    %v754 = vshrl.u32 %v753, 23
    %v755 = vsub.s32 %v754, 127
    %v756 = vand.u32 2147483647, %v92
    %v757 = vand.u32 %v756, 8388607
    %v758 = vor.u32 %v757, 8388608
    %v759 = vsub.s32 0, %v758
    %v760 = vadd.s32 %v755, 1
    %vm761 = vcmp.gt.s32.totalorder %v760, 0
    %v762 = vsel %vm761, %v760, 0
    %v763 = vshrl.u32 %v762, 5
    %v764 = vand.u32 %v762, 31
    %v765 = vsub.s32 32, %v764
    %v766 = vshrl.u32 683565275, %v765
    %v767 = vshll.u32 683565275, %v764
    %v768 = vshrl.u32 2475754826, %v765
    %v769 = vor.u32 %v767, %v768
    %v770 = vshll.u32 2475754826, %v764
    %v771 = vshrl.u32 2131351028, %v765
    %v772 = vor.u32 %v770, %v771
    %v773 = vshll.u32 2131351028, %v764
    %v774 = vshrl.u32 2102212464, %v765
    %v775 = vor.u32 %v773, %v774
    %v776 = vshll.u32 2102212464, %v764
    %v777 = vshrl.u32 920167782, %v765
    %v778 = vor.u32 %v776, %v777
    %v779 = vshll.u32 920167782, %v764
    %v780 = vshrl.u32 1326507024, %v765
    %v781 = vor.u32 %v779, %v780
    %vm782 = vcmp.lt.s32.totalorder %v763, 1
    %vm783 = vcmp.lt.s32.totalorder %v763, 2
    %vm784 = vcmp.lt.s32.totalorder %v763, 3
    %vm785 = vcmp.lt.s32.totalorder %v763, 4
    %v786 = vsel %vm782, %v766, %v769
    %v787 = vsel %vm785, %v775, 2102212464
    %v788 = vsel %vm784, %v772, %v787
    %v789 = vsel %vm783, %v786, %v788
    %v790 = vsel %vm782, %v769, %v772
    %v791 = vsel %vm785, %v778, 920167782
    %v792 = vsel %vm784, %v775, %v791
    %v793 = vsel %vm783, %v790, %v792
    %v794 = vsel %vm782, %v772, %v775
    %v795 = vsel %vm785, %v781, 1326507024
    %v796 = vsel %vm784, %v778, %v795
    %v797 = vsel %vm783, %v794, %v796
    %v798 = vshll.u32 %v758, 8
    %v799 = vmul.u32.u64.compose %v798, %v797
    %v800 = vextract.low.u32 %v799
    %v801 = vextract.high.u32 %v799
    %v802 = vmul.u32.u64.compose %v798, %v793
    %v803 = vextract.low.u32 %v802
    %v804 = vextract.high.u32 %v802
    %v805 = vmul.u32 %v798, %v789
    %v806 = vadd.s32 %v801, %v803
    %vm807 = vc.u32 %v801, %v803
    %v808 = vadd.s32 %v804, 1
    %v809 = vsel %vm807, %v808, %v804
    %v810 = vadd.s32 %v805, %v809
    %v811 = vadd.s32 %v810, 536870912
    %v812 = vshrl.u32 %v811, 30
    %v813 = vshll.u32 %v812, 30
    %v814 = vsub.s32 %v810, %v813
    %vm815 = vcmp.lt.s32.totalorder %v814, 0
    %v816 = vsub.s32 0, %v814
    %v817 = vsel %vm815, %v816, %v814
    %v818 = vclz %v817
    %v819 = vsub.s32 %v818, 2
    %vm820 = vcmp.gt.s32.totalorder 0, %v819
    %v821 = vsel %vm820, 0, %v819
    %v822 = vsub.s32 32, %v821
    %v823 = vshll.u32 %v814, %v821
    %v824 = vshrl.u32 %v806, %v822
    %v825 = vor.u32 %v823, %v824
    %v826 = vsub.s32 4294967266, %v821
    %v827 = vadd.s32 %v826, 127
    %v828 = vshll.u32 %v827, 23
    %v829 = vor.u32 4788187, %v828
    %v830 = vand.u32 2147483647, %v829
    %v832 = vcvt.s32.f32 %v825
    %v833 = vmul.f32 %v832, %v830
    %v834 = vxor.u32 %v833, 2147483648
    %v835 = vsel %vm752, %v834, %v833
    %v836 = vsub.s32 4, %v812
    %v837 = vsel %vm752, %v836, %v812
    %v838 = vsel %vm751, %v92, %v835
    %v839 = vsel %vm751, 0, %v837
    %v840 = vcosq.f32.pop %v838
    %v841 = vsinq.f32.pop %v838
    %vm842 = vweird.f32 %v92
    %v843 = vand.u32 %v839, 3
    %vm844 = vcmp.lt.s32.totalorder %v843, 2
    %vm845 = vcmp.eq.s32.totalorder %v843, 0
    %v846 = vxor.u32 %v841, 2147483648
    %v847 = vsel %vm845, %v840, %v846
    %vm848 = vcmp.eq.s32.totalorder %v843, 2
    %v849 = vxor.u32 %v840, 2147483648
    %v850 = vsel %vm848, %v849, %v841
    %v851 = vsel %vm844, %v847, %v850
    %v852 = vsel %vm842, nan, %v851
    %v853 = vand.u32 2147483647, %v93
    %vm854 = vcmp.le.f32.partialorder %v853, 0.7853982
    %vm855 = vcmp.lt.s32.totalorder %v93, 0
    %v856 = vand.u32 %v93, 2139095040
    %v857 = vshrl.u32 %v856, 23
    %v858 = vsub.s32 %v857, 127
    %v859 = vand.u32 2147483647, %v93
    %v860 = vand.u32 %v859, 8388607
    %v861 = vor.u32 %v860, 8388608
    %v862 = vsub.s32 0, %v861
    %v863 = vadd.s32 %v858, 1
    %vm864 = vcmp.gt.s32.totalorder %v863, 0
    %v865 = vsel %vm864, %v863, 0
    %v866 = vshrl.u32 %v865, 5
    %v867 = vand.u32 %v865, 31
    %v868 = vsub.s32 32, %v867
    %v869 = vshrl.u32 683565275, %v868
    %v870 = vshll.u32 683565275, %v867
    %v871 = vshrl.u32 2475754826, %v868
    %v872 = vor.u32 %v870, %v871
    %v873 = vshll.u32 2475754826, %v867
    %v874 = vshrl.u32 2131351028, %v868
    %v875 = vor.u32 %v873, %v874
    %v876 = vshll.u32 2131351028, %v867
    %v877 = vshrl.u32 2102212464, %v868
    %v878 = vor.u32 %v876, %v877
    %v879 = vshll.u32 2102212464, %v867
    %v880 = vshrl.u32 920167782, %v868
    %v881 = vor.u32 %v879, %v880
    %v882 = vshll.u32 920167782, %v867
    %v883 = vshrl.u32 1326507024, %v868
    %v884 = vor.u32 %v882, %v883
    %vm885 = vcmp.lt.s32.totalorder %v866, 1
    %vm886 = vcmp.lt.s32.totalorder %v866, 2
    %vm887 = vcmp.lt.s32.totalorder %v866, 3
    %vm888 = vcmp.lt.s32.totalorder %v866, 4
    %v889 = vsel %vm885, %v869, %v872
    %v890 = vsel %vm888, %v878, 2102212464
    %v891 = vsel %vm887, %v875, %v890
    %v892 = vsel %vm886, %v889, %v891
    %v893 = vsel %vm885, %v872, %v875
    %v894 = vsel %vm888, %v881, 920167782
    %v895 = vsel %vm887, %v878, %v894
    %v896 = vsel %vm886, %v893, %v895
    %v897 = vsel %vm885, %v875, %v878
    %v898 = vsel %vm888, %v884, 1326507024
    %v899 = vsel %vm887, %v881, %v898
    %v900 = vsel %vm886, %v897, %v899
    %v901 = vshll.u32 %v861, 8
    %v902 = vmul.u32.u64.compose %v901, %v900
    %v903 = vextract.low.u32 %v902
    %v904 = vextract.high.u32 %v902
    %v905 = vmul.u32.u64.compose %v901, %v896
    %v906 = vextract.low.u32 %v905
    %v907 = vextract.high.u32 %v905
    %v908 = vmul.u32 %v901, %v892
    %v909 = vadd.s32 %v904, %v906
    %vm910 = vc.u32 %v904, %v906
    %v911 = vadd.s32 %v907, 1
    %v912 = vsel %vm910, %v911, %v907
    %v913 = vadd.s32 %v908, %v912
    %v914 = vadd.s32 %v913, 536870912
    %v915 = vshrl.u32 %v914, 30
    %v916 = vshll.u32 %v915, 30
    %v917 = vsub.s32 %v913, %v916
    %vm918 = vcmp.lt.s32.totalorder %v917, 0
    %v919 = vsub.s32 0, %v917
    %v920 = vsel %vm918, %v919, %v917
    %v921 = vclz %v920
    %v922 = vsub.s32 %v921, 2
    %vm923 = vcmp.gt.s32.totalorder 0, %v922
    %v924 = vsel %vm923, 0, %v922
    %v925 = vsub.s32 32, %v924
    %v926 = vshll.u32 %v917, %v924
    %v927 = vshrl.u32 %v909, %v925
    %v928 = vor.u32 %v926, %v927
    %v929 = vsub.s32 4294967266, %v924
    %v930 = vadd.s32 %v929, 127
    %v931 = vshll.u32 %v930, 23
    %v932 = vor.u32 4788187, %v931
    %v933 = vand.u32 2147483647, %v932
    %v935 = vcvt.s32.f32 %v928
    %v936 = vmul.f32 %v935, %v933
    %v937 = vxor.u32 %v936, 2147483648
    %v938 = vsel %vm855, %v937, %v936
    %v939 = vsub.s32 4, %v915
    %v940 = vsel %vm855, %v939, %v915
    %v941 = vsel %vm854, %v93, %v938
    %v942 = vsel %vm854, 0, %v940
    %v943 = vcosq.f32.pop %v941
    %v944 = vsinq.f32.pop %v941
    %vm945 = vweird.f32 %v93
    %v946 = vand.u32 %v942, 3
    %vm947 = vcmp.lt.s32.totalorder %v946, 2
    %vm948 = vcmp.eq.s32.totalorder %v946, 0
    %v949 = vxor.u32 %v944, 2147483648
    %v950 = vsel %vm948, %v943, %v949
    %vm951 = vcmp.eq.s32.totalorder %v946, 2
    %v952 = vxor.u32 %v943, 2147483648
    %v953 = vsel %vm951, %v952, %v944
    %v954 = vsel %vm947, %v950, %v953
    %v955 = vsel %vm945, nan, %v954
    %v956 = vand.u32 2147483647, %v94
    %vm957 = vcmp.le.f32.partialorder %v956, 0.7853982
    %vm958 = vcmp.lt.s32.totalorder %v94, 0
    %v959 = vand.u32 %v94, 2139095040
    %v960 = vshrl.u32 %v959, 23
    %v961 = vsub.s32 %v960, 127
    %v962 = vand.u32 2147483647, %v94
    %v963 = vand.u32 %v962, 8388607
    %v964 = vor.u32 %v963, 8388608
    %v965 = vsub.s32 0, %v964
    %v966 = vadd.s32 %v961, 1
    %vm967 = vcmp.gt.s32.totalorder %v966, 0
    %v968 = vsel %vm967, %v966, 0
    %v969 = vshrl.u32 %v968, 5
    %v970 = vand.u32 %v968, 31
    %v971 = vsub.s32 32, %v970
    %v972 = vshrl.u32 683565275, %v971
    %v973 = vshll.u32 683565275, %v970
    %v974 = vshrl.u32 2475754826, %v971
    %v975 = vor.u32 %v973, %v974
    %v976 = vshll.u32 2475754826, %v970
    %v977 = vshrl.u32 2131351028, %v971
    %v978 = vor.u32 %v976, %v977
    %v979 = vshll.u32 2131351028, %v970
    %v980 = vshrl.u32 2102212464, %v971
    %v981 = vor.u32 %v979, %v980
    %v982 = vshll.u32 2102212464, %v970
    %v983 = vshrl.u32 920167782, %v971
    %v984 = vor.u32 %v982, %v983
    %v985 = vshll.u32 920167782, %v970
    %v986 = vshrl.u32 1326507024, %v971
    %v987 = vor.u32 %v985, %v986
    %vm988 = vcmp.lt.s32.totalorder %v969, 1
    %vm989 = vcmp.lt.s32.totalorder %v969, 2
    %vm990 = vcmp.lt.s32.totalorder %v969, 3
    %vm991 = vcmp.lt.s32.totalorder %v969, 4
    %v992 = vsel %vm988, %v972, %v975
    %v993 = vsel %vm991, %v981, 2102212464
    %v994 = vsel %vm990, %v978, %v993
    %v995 = vsel %vm989, %v992, %v994
    %v996 = vsel %vm988, %v975, %v978
    %v997 = vsel %vm991, %v984, 920167782
    %v998 = vsel %vm990, %v981, %v997
    %v999 = vsel %vm989, %v996, %v998
    %v1000 = vsel %vm988, %v978, %v981
    %v1001 = vsel %vm991, %v987, 1326507024
    %v1002 = vsel %vm990, %v984, %v1001
    %v1003 = vsel %vm989, %v1000, %v1002
    %v1004 = vshll.u32 %v964, 8
    %v1005 = vmul.u32.u64.compose %v1004, %v1003
    %v1006 = vextract.low.u32 %v1005
    %v1007 = vextract.high.u32 %v1005
    %v1008 = vmul.u32.u64.compose %v1004, %v999
    %v1009 = vextract.low.u32 %v1008
    %v1010 = vextract.high.u32 %v1008
    %v1011 = vmul.u32 %v1004, %v995
    %v1012 = vadd.s32 %v1007, %v1009
    %vm1013 = vc.u32 %v1007, %v1009
    %v1014 = vadd.s32 %v1010, 1
    %v1015 = vsel %vm1013, %v1014, %v1010
    %v1016 = vadd.s32 %v1011, %v1015
    %v1017 = vadd.s32 %v1016, 536870912
    %v1018 = vshrl.u32 %v1017, 30
    %v1019 = vshll.u32 %v1018, 30
    %v1020 = vsub.s32 %v1016, %v1019
    %vm1021 = vcmp.lt.s32.totalorder %v1020, 0
    %v1022 = vsub.s32 0, %v1020
    %v1023 = vsel %vm1021, %v1022, %v1020
    %v1024 = vclz %v1023
    %v1025 = vsub.s32 %v1024, 2
    %vm1026 = vcmp.gt.s32.totalorder 0, %v1025
    %v1027 = vsel %vm1026, 0, %v1025
    %v1028 = vsub.s32 32, %v1027
    %v1029 = vshll.u32 %v1020, %v1027
    %v1030 = vshrl.u32 %v1012, %v1028
    %v1031 = vor.u32 %v1029, %v1030
    %v1032 = vsub.s32 4294967266, %v1027
    %v1033 = vadd.s32 %v1032, 127
    %v1034 = vshll.u32 %v1033, 23
    %v1035 = vor.u32 4788187, %v1034
    %v1036 = vand.u32 2147483647, %v1035
    %v1038 = vcvt.s32.f32 %v1031
    %v1039 = vmul.f32 %v1038, %v1036
    %v1040 = vxor.u32 %v1039, 2147483648
    %v1041 = vsel %vm958, %v1040, %v1039
    %v1042 = vsub.s32 4, %v1018
    %v1043 = vsel %vm958, %v1042, %v1018
    %v1044 = vsel %vm957, %v94, %v1041
    %v1045 = vsel %vm957, 0, %v1043
    %v1046 = vcosq.f32.pop %v1044
    %v1047 = vsinq.f32.pop %v1044
    %vm1048 = vweird.f32 %v94
    %v1049 = vand.u32 %v1045, 3
    %vm1050 = vcmp.lt.s32.totalorder %v1049, 2
    %vm1051 = vcmp.eq.s32.totalorder %v1049, 0
    %v1052 = vxor.u32 %v1047, 2147483648
    %v1053 = vsel %vm1051, %v1046, %v1052
    %vm1054 = vcmp.eq.s32.totalorder %v1049, 2
    %v1055 = vxor.u32 %v1046, 2147483648
    %v1056 = vsel %vm1054, %v1055, %v1047
    %v1057 = vsel %vm1050, %v1053, %v1056
    %v1058 = vsel %vm1048, nan, %v1057
    %v1059 = vand.u32 2147483647, %v95
    %vm1060 = vcmp.le.f32.partialorder %v1059, 0.7853982
    %vm1061 = vcmp.lt.s32.totalorder %v95, 0
    %v1062 = vand.u32 %v95, 2139095040
    %v1063 = vshrl.u32 %v1062, 23
    %v1064 = vsub.s32 %v1063, 127
    %v1065 = vand.u32 2147483647, %v95
    %v1066 = vand.u32 %v1065, 8388607
    %v1067 = vor.u32 %v1066, 8388608
    %v1068 = vsub.s32 0, %v1067
    %v1069 = vadd.s32 %v1064, 1
    %vm1070 = vcmp.gt.s32.totalorder %v1069, 0
    %v1071 = vsel %vm1070, %v1069, 0
    %v1072 = vshrl.u32 %v1071, 5
    %v1073 = vand.u32 %v1071, 31
    %v1074 = vsub.s32 32, %v1073
    %v1075 = vshrl.u32 683565275, %v1074
    %v1076 = vshll.u32 683565275, %v1073
    %v1077 = vshrl.u32 2475754826, %v1074
    %v1078 = vor.u32 %v1076, %v1077
    %v1079 = vshll.u32 2475754826, %v1073
    %v1080 = vshrl.u32 2131351028, %v1074
    %v1081 = vor.u32 %v1079, %v1080
    %v1082 = vshll.u32 2131351028, %v1073
    %v1083 = vshrl.u32 2102212464, %v1074
    %v1084 = vor.u32 %v1082, %v1083
    %v1085 = vshll.u32 2102212464, %v1073
    %v1086 = vshrl.u32 920167782, %v1074
    %v1087 = vor.u32 %v1085, %v1086
    %v1088 = vshll.u32 920167782, %v1073
    %v1089 = vshrl.u32 1326507024, %v1074
    %v1090 = vor.u32 %v1088, %v1089
    %vm1091 = vcmp.lt.s32.totalorder %v1072, 1
    %vm1092 = vcmp.lt.s32.totalorder %v1072, 2
    %vm1093 = vcmp.lt.s32.totalorder %v1072, 3
    %vm1094 = vcmp.lt.s32.totalorder %v1072, 4
    %v1095 = vsel %vm1091, %v1075, %v1078
    %v1096 = vsel %vm1094, %v1084, 2102212464
    %v1097 = vsel %vm1093, %v1081, %v1096
    %v1098 = vsel %vm1092, %v1095, %v1097
    %v1099 = vsel %vm1091, %v1078, %v1081
    %v1100 = vsel %vm1094, %v1087, 920167782
    %v1101 = vsel %vm1093, %v1084, %v1100
    %v1102 = vsel %vm1092, %v1099, %v1101
    %v1103 = vsel %vm1091, %v1081, %v1084
    %v1104 = vsel %vm1094, %v1090, 1326507024
    %v1105 = vsel %vm1093, %v1087, %v1104
    %v1106 = vsel %vm1092, %v1103, %v1105
    %v1107 = vshll.u32 %v1067, 8
    %v1108 = vmul.u32.u64.compose %v1107, %v1106
    %v1109 = vextract.low.u32 %v1108
    %v1110 = vextract.high.u32 %v1108
    %v1111 = vmul.u32.u64.compose %v1107, %v1102
    %v1112 = vextract.low.u32 %v1111
    %v1113 = vextract.high.u32 %v1111
    %v1114 = vmul.u32 %v1107, %v1098
    %v1115 = vadd.s32 %v1110, %v1112
    %vm1116 = vc.u32 %v1110, %v1112
    %v1117 = vadd.s32 %v1113, 1
    %v1118 = vsel %vm1116, %v1117, %v1113
    %v1119 = vadd.s32 %v1114, %v1118
    %v1120 = vadd.s32 %v1119, 536870912
    %v1121 = vshrl.u32 %v1120, 30
    %v1122 = vshll.u32 %v1121, 30
    %v1123 = vsub.s32 %v1119, %v1122
    %vm1124 = vcmp.lt.s32.totalorder %v1123, 0
    %v1125 = vsub.s32 0, %v1123
    %v1126 = vsel %vm1124, %v1125, %v1123
    %v1127 = vclz %v1126
    %v1128 = vsub.s32 %v1127, 2
    %vm1129 = vcmp.gt.s32.totalorder 0, %v1128
    %v1130 = vsel %vm1129, 0, %v1128
    %v1131 = vsub.s32 32, %v1130
    %v1132 = vshll.u32 %v1123, %v1130
    %v1133 = vshrl.u32 %v1115, %v1131
    %v1134 = vor.u32 %v1132, %v1133
    %v1135 = vsub.s32 4294967266, %v1130
    %v1136 = vadd.s32 %v1135, 127
    %v1137 = vshll.u32 %v1136, 23
    %v1138 = vor.u32 4788187, %v1137
    %v1139 = vand.u32 2147483647, %v1138
    %v1141 = vcvt.s32.f32 %v1134
    %v1142 = vmul.f32 %v1141, %v1139
    %v1143 = vxor.u32 %v1142, 2147483648
    %v1144 = vsel %vm1061, %v1143, %v1142
    %v1145 = vsub.s32 4, %v1121
    %v1146 = vsel %vm1061, %v1145, %v1121
    %v1147 = vsel %vm1060, %v95, %v1144
    %v1148 = vsel %vm1060, 0, %v1146
    %v1149 = vcosq.f32.pop %v1147
    %v1150 = vsinq.f32.pop %v1147
    %vm1151 = vweird.f32 %v95
    %v1152 = vand.u32 %v1148, 3
    %vm1153 = vcmp.lt.s32.totalorder %v1152, 2
    %vm1154 = vcmp.eq.s32.totalorder %v1152, 0
    %v1155 = vxor.u32 %v1150, 2147483648
    %v1156 = vsel %vm1154, %v1149, %v1155
    %vm1157 = vcmp.eq.s32.totalorder %v1152, 2
    %v1158 = vxor.u32 %v1149, 2147483648
    %v1159 = vsel %vm1157, %v1158, %v1150
    %v1160 = vsel %vm1153, %v1156, %v1159
    %v1161 = vsel %vm1151, nan, %v1160
    %v1162 = vand.u32 2147483647, %v96
    %vm1163 = vcmp.le.f32.partialorder %v1162, 0.7853982
    %vm1164 = vcmp.lt.s32.totalorder %v96, 0
    %v1165 = vand.u32 %v96, 2139095040
    %v1166 = vshrl.u32 %v1165, 23
    %v1167 = vsub.s32 %v1166, 127
    %v1168 = vand.u32 2147483647, %v96
    %v1169 = vand.u32 %v1168, 8388607
    %v1170 = vor.u32 %v1169, 8388608
    %v1171 = vsub.s32 0, %v1170
    %v1172 = vadd.s32 %v1167, 1
    %vm1173 = vcmp.gt.s32.totalorder %v1172, 0
    %v1174 = vsel %vm1173, %v1172, 0
    %v1175 = vshrl.u32 %v1174, 5
    %v1176 = vand.u32 %v1174, 31
    %v1177 = vsub.s32 32, %v1176
    %v1178 = vshrl.u32 683565275, %v1177
    %v1179 = vshll.u32 683565275, %v1176
    %v1180 = vshrl.u32 2475754826, %v1177
    %v1181 = vor.u32 %v1179, %v1180
    %v1182 = vshll.u32 2475754826, %v1176
    %v1183 = vshrl.u32 2131351028, %v1177
    %v1184 = vor.u32 %v1182, %v1183
    %v1185 = vshll.u32 2131351028, %v1176
    %v1186 = vshrl.u32 2102212464, %v1177
    %v1187 = vor.u32 %v1185, %v1186
    %v1188 = vshll.u32 2102212464, %v1176
    %v1189 = vshrl.u32 920167782, %v1177
    %v1190 = vor.u32 %v1188, %v1189
    %v1191 = vshll.u32 920167782, %v1176
    %v1192 = vshrl.u32 1326507024, %v1177
    %v1193 = vor.u32 %v1191, %v1192
    %vm1194 = vcmp.lt.s32.totalorder %v1175, 1
    %vm1195 = vcmp.lt.s32.totalorder %v1175, 2
    %vm1196 = vcmp.lt.s32.totalorder %v1175, 3
    %vm1197 = vcmp.lt.s32.totalorder %v1175, 4
    %v1198 = vsel %vm1194, %v1178, %v1181
    %v1199 = vsel %vm1197, %v1187, 2102212464
    %v1200 = vsel %vm1196, %v1184, %v1199
    %v1201 = vsel %vm1195, %v1198, %v1200
    %v1202 = vsel %vm1194, %v1181, %v1184
    %v1203 = vsel %vm1197, %v1190, 920167782
    %v1204 = vsel %vm1196, %v1187, %v1203
    %v1205 = vsel %vm1195, %v1202, %v1204
    %v1206 = vsel %vm1194, %v1184, %v1187
    %v1207 = vsel %vm1197, %v1193, 1326507024
    %v1208 = vsel %vm1196, %v1190, %v1207
    %v1209 = vsel %vm1195, %v1206, %v1208
    %v1210 = vshll.u32 %v1170, 8
    %v1211 = vmul.u32.u64.compose %v1210, %v1209
    %v1212 = vextract.low.u32 %v1211
    %v1213 = vextract.high.u32 %v1211
    %v1214 = vmul.u32.u64.compose %v1210, %v1205
    %v1215 = vextract.low.u32 %v1214
    %v1216 = vextract.high.u32 %v1214
    %v1217 = vmul.u32 %v1210, %v1201
    %v1218 = vadd.s32 %v1213, %v1215
    %vm1219 = vc.u32 %v1213, %v1215
    %v1220 = vadd.s32 %v1216, 1
    %v1221 = vsel %vm1219, %v1220, %v1216
    %v1222 = vadd.s32 %v1217, %v1221
    %v1223 = vadd.s32 %v1222, 536870912
    %v1224 = vshrl.u32 %v1223, 30
    %v1225 = vshll.u32 %v1224, 30
    %v1226 = vsub.s32 %v1222, %v1225
    %vm1227 = vcmp.lt.s32.totalorder %v1226, 0
    %v1228 = vsub.s32 0, %v1226
    %v1229 = vsel %vm1227, %v1228, %v1226
    %v1230 = vclz %v1229
    %v1231 = vsub.s32 %v1230, 2
    %vm1232 = vcmp.gt.s32.totalorder 0, %v1231
    %v1233 = vsel %vm1232, 0, %v1231
    %v1234 = vsub.s32 32, %v1233
    %v1235 = vshll.u32 %v1226, %v1233
    %v1236 = vshrl.u32 %v1218, %v1234
    %v1237 = vor.u32 %v1235, %v1236
    %v1238 = vsub.s32 4294967266, %v1233
    %v1239 = vadd.s32 %v1238, 127
    %v1240 = vshll.u32 %v1239, 23
    %v1241 = vor.u32 4788187, %v1240
    %v1242 = vand.u32 2147483647, %v1241
    %v1244 = vcvt.s32.f32 %v1237
    %v1245 = vmul.f32 %v1244, %v1242
    %v1246 = vxor.u32 %v1245, 2147483648
    %v1247 = vsel %vm1164, %v1246, %v1245
    %v1248 = vsub.s32 4, %v1224
    %v1249 = vsel %vm1164, %v1248, %v1224
    %v1250 = vsel %vm1163, %v96, %v1247
    %v1251 = vsel %vm1163, 0, %v1249
    %v1252 = vcosq.f32.pop %v1250
    %v1253 = vsinq.f32.pop %v1250
    %vm1254 = vweird.f32 %v96
    %v1255 = vand.u32 %v1251, 3
    %vm1256 = vcmp.lt.s32.totalorder %v1255, 2
    %vm1257 = vcmp.eq.s32.totalorder %v1255, 0
    %v1258 = vxor.u32 %v1253, 2147483648
    %v1259 = vsel %vm1257, %v1252, %v1258
    %vm1260 = vcmp.eq.s32.totalorder %v1255, 2
    %v1261 = vxor.u32 %v1252, 2147483648
    %v1262 = vsel %vm1260, %v1261, %v1253
    %v1263 = vsel %vm1256, %v1259, %v1262
    %v1264 = vsel %vm1254, nan, %v1263
    %v1265 = vand.u32 2147483647, %v87
    %vm1266 = vcmp.le.f32.partialorder %v1265, 0.7853982
    %vm1267 = vcmp.lt.s32.totalorder %v87, 0
    %v1268 = vand.u32 %v87, 2139095040
    %v1269 = vshrl.u32 %v1268, 23
    %v1270 = vsub.s32 %v1269, 127
    %v1271 = vand.u32 2147483647, %v87
    %v1272 = vand.u32 %v1271, 8388607
    %v1273 = vor.u32 %v1272, 8388608
    %v1274 = vsub.s32 0, %v1273
    %v1275 = vadd.s32 %v1270, 1
    %vm1276 = vcmp.gt.s32.totalorder %v1275, 0
    %v1277 = vsel %vm1276, %v1275, 0
    %v1278 = vshrl.u32 %v1277, 5
    %v1279 = vand.u32 %v1277, 31
    %v1280 = vsub.s32 32, %v1279
    %v1281 = vshrl.u32 683565275, %v1280
    %v1282 = vshll.u32 683565275, %v1279
    %v1283 = vshrl.u32 2475754826, %v1280
    %v1284 = vor.u32 %v1282, %v1283
    %v1285 = vshll.u32 2475754826, %v1279
    %v1286 = vshrl.u32 2131351028, %v1280
    %v1287 = vor.u32 %v1285, %v1286
    %v1288 = vshll.u32 2131351028, %v1279
    %v1289 = vshrl.u32 2102212464, %v1280
    %v1290 = vor.u32 %v1288, %v1289
    %v1291 = vshll.u32 2102212464, %v1279
    %v1292 = vshrl.u32 920167782, %v1280
    %v1293 = vor.u32 %v1291, %v1292
    %v1294 = vshll.u32 920167782, %v1279
    %v1295 = vshrl.u32 1326507024, %v1280
    %v1296 = vor.u32 %v1294, %v1295
    %vm1297 = vcmp.lt.s32.totalorder %v1278, 1
    %vm1298 = vcmp.lt.s32.totalorder %v1278, 2
    %vm1299 = vcmp.lt.s32.totalorder %v1278, 3
    %vm1300 = vcmp.lt.s32.totalorder %v1278, 4
    %v1301 = vsel %vm1297, %v1281, %v1284
    %v1302 = vsel %vm1300, %v1290, 2102212464
    %v1303 = vsel %vm1299, %v1287, %v1302
    %v1304 = vsel %vm1298, %v1301, %v1303
    %v1305 = vsel %vm1297, %v1284, %v1287
    %v1306 = vsel %vm1300, %v1293, 920167782
    %v1307 = vsel %vm1299, %v1290, %v1306
    %v1308 = vsel %vm1298, %v1305, %v1307
    %v1309 = vsel %vm1297, %v1287, %v1290
    %v1310 = vsel %vm1300, %v1296, 1326507024
    %v1311 = vsel %vm1299, %v1293, %v1310
    %v1312 = vsel %vm1298, %v1309, %v1311
    %v1313 = vshll.u32 %v1273, 8
    %v1314 = vmul.u32.u64.compose %v1313, %v1312
    %v1315 = vextract.low.u32 %v1314
    %v1316 = vextract.high.u32 %v1314
    %v1317 = vmul.u32.u64.compose %v1313, %v1308
    %v1318 = vextract.low.u32 %v1317
    %v1319 = vextract.high.u32 %v1317
    %v1320 = vmul.u32 %v1313, %v1304
    %v1321 = vadd.s32 %v1316, %v1318
    %vm1322 = vc.u32 %v1316, %v1318
    %v1323 = vadd.s32 %v1319, 1
    %v1324 = vsel %vm1322, %v1323, %v1319
    %v1325 = vadd.s32 %v1320, %v1324
    %v1326 = vadd.s32 %v1325, 536870912
    %v1327 = vshrl.u32 %v1326, 30
    %v1328 = vshll.u32 %v1327, 30
    %v1329 = vsub.s32 %v1325, %v1328
    %vm1330 = vcmp.lt.s32.totalorder %v1329, 0
    %v1331 = vsub.s32 0, %v1329
    %v1332 = vsel %vm1330, %v1331, %v1329
    %v1333 = vclz %v1332
    %v1334 = vsub.s32 %v1333, 2
    %vm1335 = vcmp.gt.s32.totalorder 0, %v1334
    %v1336 = vsel %vm1335, 0, %v1334
    %v1337 = vsub.s32 32, %v1336
    %v1338 = vshll.u32 %v1329, %v1336
    %v1339 = vshrl.u32 %v1321, %v1337
    %v1340 = vor.u32 %v1338, %v1339
    %v1341 = vsub.s32 4294967266, %v1336
    %v1342 = vadd.s32 %v1341, 127
    %v1343 = vshll.u32 %v1342, 23
    %v1344 = vor.u32 4788187, %v1343
    %v1345 = vand.u32 2147483647, %v1344
    %v1347 = vcvt.s32.f32 %v1340
    %v1348 = vmul.f32 %v1347, %v1345
    %v1349 = vxor.u32 %v1348, 2147483648
    %v1350 = vsel %vm1267, %v1349, %v1348
    %v1351 = vsub.s32 4, %v1327
    %v1352 = vsel %vm1267, %v1351, %v1327
    %v1353 = vsel %vm1266, %v87, %v1350
    %v1354 = vsel %vm1266, 0, %v1352
    %v1355 = vcosq.f32.pop %v1353
    %v1356 = vsinq.f32.pop %v1353
    %vm1357 = vweird.f32 %v87
    %v1358 = vadd.s32 %v1354, 3
    %v1359 = vand.u32 %v1358, 3
    %vm1360 = vcmp.lt.s32.totalorder %v1359, 2
    %vm1361 = vcmp.eq.s32.totalorder %v1359, 0
    %v1362 = vxor.u32 %v1356, 2147483648
    %v1363 = vsel %vm1361, %v1355, %v1362
    %vm1364 = vcmp.eq.s32.totalorder %v1359, 2
    %v1365 = vxor.u32 %v1355, 2147483648
    %v1366 = vsel %vm1364, %v1365, %v1356
    %v1367 = vsel %vm1360, %v1363, %v1366
    %v1368 = vsel %vm1357, nan, %v1367
    %v1369 = vand.u32 2147483647, %v88
    %vm1370 = vcmp.le.f32.partialorder %v1369, 0.7853982
    %vm1371 = vcmp.lt.s32.totalorder %v88, 0
    %v1372 = vand.u32 %v88, 2139095040
    %v1373 = vshrl.u32 %v1372, 23
    %v1374 = vsub.s32 %v1373, 127
    %v1375 = vand.u32 2147483647, %v88
    %v1376 = vand.u32 %v1375, 8388607
    %v1377 = vor.u32 %v1376, 8388608
    %v1378 = vsub.s32 0, %v1377
    %v1379 = vadd.s32 %v1374, 1
    %vm1380 = vcmp.gt.s32.totalorder %v1379, 0
    %v1381 = vsel %vm1380, %v1379, 0
    %v1382 = vshrl.u32 %v1381, 5
    %v1383 = vand.u32 %v1381, 31
    %v1384 = vsub.s32 32, %v1383
    %v1385 = vshrl.u32 683565275, %v1384
    %v1386 = vshll.u32 683565275, %v1383
    %v1387 = vshrl.u32 2475754826, %v1384
    %v1388 = vor.u32 %v1386, %v1387
    %v1389 = vshll.u32 2475754826, %v1383
    %v1390 = vshrl.u32 2131351028, %v1384
    %v1391 = vor.u32 %v1389, %v1390
    %v1392 = vshll.u32 2131351028, %v1383
    %v1393 = vshrl.u32 2102212464, %v1384
    %v1394 = vor.u32 %v1392, %v1393
    %v1395 = vshll.u32 2102212464, %v1383
    %v1396 = vshrl.u32 920167782, %v1384
    %v1397 = vor.u32 %v1395, %v1396
    %v1398 = vshll.u32 920167782, %v1383
    %v1399 = vshrl.u32 1326507024, %v1384
    %v1400 = vor.u32 %v1398, %v1399
    %vm1401 = vcmp.lt.s32.totalorder %v1382, 1
    %vm1402 = vcmp.lt.s32.totalorder %v1382, 2
    %vm1403 = vcmp.lt.s32.totalorder %v1382, 3
    %vm1404 = vcmp.lt.s32.totalorder %v1382, 4
    %v1405 = vsel %vm1401, %v1385, %v1388
    %v1406 = vsel %vm1404, %v1394, 2102212464
    %v1407 = vsel %vm1403, %v1391, %v1406
    %v1408 = vsel %vm1402, %v1405, %v1407
    %v1409 = vsel %vm1401, %v1388, %v1391
    %v1410 = vsel %vm1404, %v1397, 920167782
    %v1411 = vsel %vm1403, %v1394, %v1410
    %v1412 = vsel %vm1402, %v1409, %v1411
    %v1413 = vsel %vm1401, %v1391, %v1394
    %v1414 = vsel %vm1404, %v1400, 1326507024
    %v1415 = vsel %vm1403, %v1397, %v1414
    %v1416 = vsel %vm1402, %v1413, %v1415
    %v1417 = vshll.u32 %v1377, 8
    %v1418 = vmul.u32.u64.compose %v1417, %v1416
    %v1419 = vextract.low.u32 %v1418
    %v1420 = vextract.high.u32 %v1418
    %v1421 = vmul.u32.u64.compose %v1417, %v1412
    %v1422 = vextract.low.u32 %v1421
    %v1423 = vextract.high.u32 %v1421
    %v1424 = vmul.u32 %v1417, %v1408
    %v1425 = vadd.s32 %v1420, %v1422
    %vm1426 = vc.u32 %v1420, %v1422
    %v1427 = vadd.s32 %v1423, 1
    %v1428 = vsel %vm1426, %v1427, %v1423
    %v1429 = vadd.s32 %v1424, %v1428
    %v1430 = vadd.s32 %v1429, 536870912
    %v1431 = vshrl.u32 %v1430, 30
    %v1432 = vshll.u32 %v1431, 30
    %v1433 = vsub.s32 %v1429, %v1432
    %vm1434 = vcmp.lt.s32.totalorder %v1433, 0
    %v1435 = vsub.s32 0, %v1433
    %v1436 = vsel %vm1434, %v1435, %v1433
    %v1437 = vclz %v1436
    %v1438 = vsub.s32 %v1437, 2
    %vm1439 = vcmp.gt.s32.totalorder 0, %v1438
    %v1440 = vsel %vm1439, 0, %v1438
    %v1441 = vsub.s32 32, %v1440
    %v1442 = vshll.u32 %v1433, %v1440
    %v1443 = vshrl.u32 %v1425, %v1441
    %v1444 = vor.u32 %v1442, %v1443
    %v1445 = vsub.s32 4294967266, %v1440
    %v1446 = vadd.s32 %v1445, 127
    %v1447 = vshll.u32 %v1446, 23
    %v1448 = vor.u32 4788187, %v1447
    %v1449 = vand.u32 2147483647, %v1448
    %v1451 = vcvt.s32.f32 %v1444
    %v1452 = vmul.f32 %v1451, %v1449
    %v1453 = vxor.u32 %v1452, 2147483648
    %v1454 = vsel %vm1371, %v1453, %v1452
    %v1455 = vsub.s32 4, %v1431
    %v1456 = vsel %vm1371, %v1455, %v1431
    %v1457 = vsel %vm1370, %v88, %v1454
    %v1458 = vsel %vm1370, 0, %v1456
    %v1459 = vcosq.f32.pop %v1457
    %v1460 = vsinq.f32.pop %v1457
    %vm1461 = vweird.f32 %v88
    %v1462 = vadd.s32 %v1458, 3
    %v1463 = vand.u32 %v1462, 3
    %vm1464 = vcmp.lt.s32.totalorder %v1463, 2
    %vm1465 = vcmp.eq.s32.totalorder %v1463, 0
    %v1466 = vxor.u32 %v1460, 2147483648
    %v1467 = vsel %vm1465, %v1459, %v1466
    %vm1468 = vcmp.eq.s32.totalorder %v1463, 2
    %v1469 = vxor.u32 %v1459, 2147483648
    %v1470 = vsel %vm1468, %v1469, %v1460
    %v1471 = vsel %vm1464, %v1467, %v1470
    %v1472 = vsel %vm1461, nan, %v1471
    %v1473 = vand.u32 2147483647, %v89
    %vm1474 = vcmp.le.f32.partialorder %v1473, 0.7853982
    %vm1475 = vcmp.lt.s32.totalorder %v89, 0
    %v1476 = vand.u32 %v89, 2139095040
    %v1477 = vshrl.u32 %v1476, 23
    %v1478 = vsub.s32 %v1477, 127
    %v1479 = vand.u32 2147483647, %v89
    %v1480 = vand.u32 %v1479, 8388607
    %v1481 = vor.u32 %v1480, 8388608
    %v1482 = vsub.s32 0, %v1481
    %v1483 = vadd.s32 %v1478, 1
    %vm1484 = vcmp.gt.s32.totalorder %v1483, 0
    %v1485 = vsel %vm1484, %v1483, 0
    %v1486 = vshrl.u32 %v1485, 5
    %v1487 = vand.u32 %v1485, 31
    %v1488 = vsub.s32 32, %v1487
    %v1489 = vshrl.u32 683565275, %v1488
    %v1490 = vshll.u32 683565275, %v1487
    %v1491 = vshrl.u32 2475754826, %v1488
    %v1492 = vor.u32 %v1490, %v1491
    %v1493 = vshll.u32 2475754826, %v1487
    %v1494 = vshrl.u32 2131351028, %v1488
    %v1495 = vor.u32 %v1493, %v1494
    %v1496 = vshll.u32 2131351028, %v1487
    %v1497 = vshrl.u32 2102212464, %v1488
    %v1498 = vor.u32 %v1496, %v1497
    %v1499 = vshll.u32 2102212464, %v1487
    %v1500 = vshrl.u32 920167782, %v1488
    %v1501 = vor.u32 %v1499, %v1500
    %v1502 = vshll.u32 920167782, %v1487
    %v1503 = vshrl.u32 1326507024, %v1488
    %v1504 = vor.u32 %v1502, %v1503
    %vm1505 = vcmp.lt.s32.totalorder %v1486, 1
    %vm1506 = vcmp.lt.s32.totalorder %v1486, 2
    %vm1507 = vcmp.lt.s32.totalorder %v1486, 3
    %vm1508 = vcmp.lt.s32.totalorder %v1486, 4
    %v1509 = vsel %vm1505, %v1489, %v1492
    %v1510 = vsel %vm1508, %v1498, 2102212464
    %v1511 = vsel %vm1507, %v1495, %v1510
    %v1512 = vsel %vm1506, %v1509, %v1511
    %v1513 = vsel %vm1505, %v1492, %v1495
    %v1514 = vsel %vm1508, %v1501, 920167782
    %v1515 = vsel %vm1507, %v1498, %v1514
    %v1516 = vsel %vm1506, %v1513, %v1515
    %v1517 = vsel %vm1505, %v1495, %v1498
    %v1518 = vsel %vm1508, %v1504, 1326507024
    %v1519 = vsel %vm1507, %v1501, %v1518
    %v1520 = vsel %vm1506, %v1517, %v1519
    %v1521 = vshll.u32 %v1481, 8
    %v1522 = vmul.u32.u64.compose %v1521, %v1520
    %v1523 = vextract.low.u32 %v1522
    %v1524 = vextract.high.u32 %v1522
    %v1525 = vmul.u32.u64.compose %v1521, %v1516
    %v1526 = vextract.low.u32 %v1525
    %v1527 = vextract.high.u32 %v1525
    %v1528 = vmul.u32 %v1521, %v1512
    %v1529 = vadd.s32 %v1524, %v1526
    %vm1530 = vc.u32 %v1524, %v1526
    %v1531 = vadd.s32 %v1527, 1
    %v1532 = vsel %vm1530, %v1531, %v1527
    %v1533 = vadd.s32 %v1528, %v1532
    %v1534 = vadd.s32 %v1533, 536870912
    %v1535 = vshrl.u32 %v1534, 30
    %v1536 = vshll.u32 %v1535, 30
    %v1537 = vsub.s32 %v1533, %v1536
    %vm1538 = vcmp.lt.s32.totalorder %v1537, 0
    %v1539 = vsub.s32 0, %v1537
    %v1540 = vsel %vm1538, %v1539, %v1537
    %v1541 = vclz %v1540
    %v1542 = vsub.s32 %v1541, 2
    %vm1543 = vcmp.gt.s32.totalorder 0, %v1542
    %v1544 = vsel %vm1543, 0, %v1542
    %v1545 = vsub.s32 32, %v1544
    %v1546 = vshll.u32 %v1537, %v1544
    %v1547 = vshrl.u32 %v1529, %v1545
    %v1548 = vor.u32 %v1546, %v1547
    %v1549 = vsub.s32 4294967266, %v1544
    %v1550 = vadd.s32 %v1549, 127
    %v1551 = vshll.u32 %v1550, 23
    %v1552 = vor.u32 4788187, %v1551
    %v1553 = vand.u32 2147483647, %v1552
    %v1555 = vcvt.s32.f32 %v1548
    %v1556 = vmul.f32 %v1555, %v1553
    %v1557 = vxor.u32 %v1556, 2147483648
    %v1558 = vsel %vm1475, %v1557, %v1556
    %v1559 = vsub.s32 4, %v1535
    %v1560 = vsel %vm1475, %v1559, %v1535
    %v1561 = vsel %vm1474, %v89, %v1558
    %v1562 = vsel %vm1474, 0, %v1560
    %v1563 = vcosq.f32.pop %v1561
    %v1564 = vsinq.f32.pop %v1561
    %vm1565 = vweird.f32 %v89
    %v1566 = vadd.s32 %v1562, 3
    %v1567 = vand.u32 %v1566, 3
    %vm1568 = vcmp.lt.s32.totalorder %v1567, 2
    %vm1569 = vcmp.eq.s32.totalorder %v1567, 0
    %v1570 = vxor.u32 %v1564, 2147483648
    %v1571 = vsel %vm1569, %v1563, %v1570
    %vm1572 = vcmp.eq.s32.totalorder %v1567, 2
    %v1573 = vxor.u32 %v1563, 2147483648
    %v1574 = vsel %vm1572, %v1573, %v1564
    %v1575 = vsel %vm1568, %v1571, %v1574
    %v1576 = vsel %vm1565, nan, %v1575
    %v1577 = vand.u32 2147483647, %v90
    %vm1578 = vcmp.le.f32.partialorder %v1577, 0.7853982
    %vm1579 = vcmp.lt.s32.totalorder %v90, 0
    %v1580 = vand.u32 %v90, 2139095040
    %v1581 = vshrl.u32 %v1580, 23
    %v1582 = vsub.s32 %v1581, 127
    %v1583 = vand.u32 2147483647, %v90
    %v1584 = vand.u32 %v1583, 8388607
    %v1585 = vor.u32 %v1584, 8388608
    %v1586 = vsub.s32 0, %v1585
    %v1587 = vadd.s32 %v1582, 1
    %vm1588 = vcmp.gt.s32.totalorder %v1587, 0
    %v1589 = vsel %vm1588, %v1587, 0
    %v1590 = vshrl.u32 %v1589, 5
    %v1591 = vand.u32 %v1589, 31
    %v1592 = vsub.s32 32, %v1591
    %v1593 = vshrl.u32 683565275, %v1592
    %v1594 = vshll.u32 683565275, %v1591
    %v1595 = vshrl.u32 2475754826, %v1592
    %v1596 = vor.u32 %v1594, %v1595
    %v1597 = vshll.u32 2475754826, %v1591
    %v1598 = vshrl.u32 2131351028, %v1592
    %v1599 = vor.u32 %v1597, %v1598
    %v1600 = vshll.u32 2131351028, %v1591
    %v1601 = vshrl.u32 2102212464, %v1592
    %v1602 = vor.u32 %v1600, %v1601
    %v1603 = vshll.u32 2102212464, %v1591
    %v1604 = vshrl.u32 920167782, %v1592
    %v1605 = vor.u32 %v1603, %v1604
    %v1606 = vshll.u32 920167782, %v1591
    %v1607 = vshrl.u32 1326507024, %v1592
    %v1608 = vor.u32 %v1606, %v1607
    %vm1609 = vcmp.lt.s32.totalorder %v1590, 1
    %vm1610 = vcmp.lt.s32.totalorder %v1590, 2
    %vm1611 = vcmp.lt.s32.totalorder %v1590, 3
    %vm1612 = vcmp.lt.s32.totalorder %v1590, 4
    %v1613 = vsel %vm1609, %v1593, %v1596
    %v1614 = vsel %vm1612, %v1602, 2102212464
    %v1615 = vsel %vm1611, %v1599, %v1614
    %v1616 = vsel %vm1610, %v1613, %v1615
    %v1617 = vsel %vm1609, %v1596, %v1599
    %v1618 = vsel %vm1612, %v1605, 920167782
    %v1619 = vsel %vm1611, %v1602, %v1618
    %v1620 = vsel %vm1610, %v1617, %v1619
    %v1621 = vsel %vm1609, %v1599, %v1602
    %v1622 = vsel %vm1612, %v1608, 1326507024
    %v1623 = vsel %vm1611, %v1605, %v1622
    %v1624 = vsel %vm1610, %v1621, %v1623
    %v1625 = vshll.u32 %v1585, 8
    %v1626 = vmul.u32.u64.compose %v1625, %v1624
    %v1627 = vextract.low.u32 %v1626
    %v1628 = vextract.high.u32 %v1626
    %v1629 = vmul.u32.u64.compose %v1625, %v1620
    %v1630 = vextract.low.u32 %v1629
    %v1631 = vextract.high.u32 %v1629
    %v1632 = vmul.u32 %v1625, %v1616
    %v1633 = vadd.s32 %v1628, %v1630
    %vm1634 = vc.u32 %v1628, %v1630
    %v1635 = vadd.s32 %v1631, 1
    %v1636 = vsel %vm1634, %v1635, %v1631
    %v1637 = vadd.s32 %v1632, %v1636
    %v1638 = vadd.s32 %v1637, 536870912
    %v1639 = vshrl.u32 %v1638, 30
    %v1640 = vshll.u32 %v1639, 30
    %v1641 = vsub.s32 %v1637, %v1640
    %vm1642 = vcmp.lt.s32.totalorder %v1641, 0
    %v1643 = vsub.s32 0, %v1641
    %v1644 = vsel %vm1642, %v1643, %v1641
    %v1645 = vclz %v1644
    %v1646 = vsub.s32 %v1645, 2
    %vm1647 = vcmp.gt.s32.totalorder 0, %v1646
    %v1648 = vsel %vm1647, 0, %v1646
    %v1649 = vsub.s32 32, %v1648
    %v1650 = vshll.u32 %v1641, %v1648
    %v1651 = vshrl.u32 %v1633, %v1649
    %v1652 = vor.u32 %v1650, %v1651
    %v1653 = vsub.s32 4294967266, %v1648
    %v1654 = vadd.s32 %v1653, 127
    %v1655 = vshll.u32 %v1654, 23
    %v1656 = vor.u32 4788187, %v1655
    %v1657 = vand.u32 2147483647, %v1656
    %v1659 = vcvt.s32.f32 %v1652
    %v1660 = vmul.f32 %v1659, %v1657
    %v1661 = vxor.u32 %v1660, 2147483648
    %v1662 = vsel %vm1579, %v1661, %v1660
    %v1663 = vsub.s32 4, %v1639
    %v1664 = vsel %vm1579, %v1663, %v1639
    %v1665 = vsel %vm1578, %v90, %v1662
    %v1666 = vsel %vm1578, 0, %v1664
    %v1667 = vcosq.f32.pop %v1665
    %v1668 = vsinq.f32.pop %v1665
    %vm1669 = vweird.f32 %v90
    %v1670 = vadd.s32 %v1666, 3
    %v1671 = vand.u32 %v1670, 3
    %vm1672 = vcmp.lt.s32.totalorder %v1671, 2
    %vm1673 = vcmp.eq.s32.totalorder %v1671, 0
    %v1674 = vxor.u32 %v1668, 2147483648
    %v1675 = vsel %vm1673, %v1667, %v1674
    %vm1676 = vcmp.eq.s32.totalorder %v1671, 2
    %v1677 = vxor.u32 %v1667, 2147483648
    %v1678 = vsel %vm1676, %v1677, %v1668
    %v1679 = vsel %vm1672, %v1675, %v1678
    %v1680 = vsel %vm1669, nan, %v1679
    %v1681 = vand.u32 2147483647, %v91
    %vm1682 = vcmp.le.f32.partialorder %v1681, 0.7853982
    %vm1683 = vcmp.lt.s32.totalorder %v91, 0
    %v1684 = vand.u32 %v91, 2139095040
    %v1685 = vshrl.u32 %v1684, 23
    %v1686 = vsub.s32 %v1685, 127
    %v1687 = vand.u32 2147483647, %v91
    %v1688 = vand.u32 %v1687, 8388607
    %v1689 = vor.u32 %v1688, 8388608
    %v1690 = vsub.s32 0, %v1689
    %v1691 = vadd.s32 %v1686, 1
    %vm1692 = vcmp.gt.s32.totalorder %v1691, 0
    %v1693 = vsel %vm1692, %v1691, 0
    %v1694 = vshrl.u32 %v1693, 5
    %v1695 = vand.u32 %v1693, 31
    %v1696 = vsub.s32 32, %v1695
    %v1697 = vshrl.u32 683565275, %v1696
    %v1698 = vshll.u32 683565275, %v1695
    %v1699 = vshrl.u32 2475754826, %v1696
    %v1700 = vor.u32 %v1698, %v1699
    %v1701 = vshll.u32 2475754826, %v1695
    %v1702 = vshrl.u32 2131351028, %v1696
    %v1703 = vor.u32 %v1701, %v1702
    %v1704 = vshll.u32 2131351028, %v1695
    %v1705 = vshrl.u32 2102212464, %v1696
    %v1706 = vor.u32 %v1704, %v1705
    %v1707 = vshll.u32 2102212464, %v1695
    %v1708 = vshrl.u32 920167782, %v1696
    %v1709 = vor.u32 %v1707, %v1708
    %v1710 = vshll.u32 920167782, %v1695
    %v1711 = vshrl.u32 1326507024, %v1696
    %v1712 = vor.u32 %v1710, %v1711
    %vm1713 = vcmp.lt.s32.totalorder %v1694, 1
    %vm1714 = vcmp.lt.s32.totalorder %v1694, 2
    %vm1715 = vcmp.lt.s32.totalorder %v1694, 3
    %vm1716 = vcmp.lt.s32.totalorder %v1694, 4
    %v1717 = vsel %vm1713, %v1697, %v1700
    %v1718 = vsel %vm1716, %v1706, 2102212464
    %v1719 = vsel %vm1715, %v1703, %v1718
    %v1720 = vsel %vm1714, %v1717, %v1719
    %v1721 = vsel %vm1713, %v1700, %v1703
    %v1722 = vsel %vm1716, %v1709, 920167782
    %v1723 = vsel %vm1715, %v1706, %v1722
    %v1724 = vsel %vm1714, %v1721, %v1723
    %v1725 = vsel %vm1713, %v1703, %v1706
    %v1726 = vsel %vm1716, %v1712, 1326507024
    %v1727 = vsel %vm1715, %v1709, %v1726
    %v1728 = vsel %vm1714, %v1725, %v1727
    %v1729 = vshll.u32 %v1689, 8
    %v1730 = vmul.u32.u64.compose %v1729, %v1728
    %v1731 = vextract.low.u32 %v1730
    %v1732 = vextract.high.u32 %v1730
    %v1733 = vmul.u32.u64.compose %v1729, %v1724
    %v1734 = vextract.low.u32 %v1733
    %v1735 = vextract.high.u32 %v1733
    %v1736 = vmul.u32 %v1729, %v1720
    %v1737 = vadd.s32 %v1732, %v1734
    %vm1738 = vc.u32 %v1732, %v1734
    %v1739 = vadd.s32 %v1735, 1
    %v1740 = vsel %vm1738, %v1739, %v1735
    %v1741 = vadd.s32 %v1736, %v1740
    %v1742 = vadd.s32 %v1741, 536870912
    %v1743 = vshrl.u32 %v1742, 30
    %v1744 = vshll.u32 %v1743, 30
    %v1745 = vsub.s32 %v1741, %v1744
    %vm1746 = vcmp.lt.s32.totalorder %v1745, 0
    %v1747 = vsub.s32 0, %v1745
    %v1748 = vsel %vm1746, %v1747, %v1745
    %v1749 = vclz %v1748
    %v1750 = vsub.s32 %v1749, 2
    %vm1751 = vcmp.gt.s32.totalorder 0, %v1750
    %v1752 = vsel %vm1751, 0, %v1750
    %v1753 = vsub.s32 32, %v1752
    %v1754 = vshll.u32 %v1745, %v1752
    %v1755 = vshrl.u32 %v1737, %v1753
    %v1756 = vor.u32 %v1754, %v1755
    %v1757 = vsub.s32 4294967266, %v1752
    %v1758 = vadd.s32 %v1757, 127
    %v1759 = vshll.u32 %v1758, 23
    %v1760 = vor.u32 4788187, %v1759
    %v1761 = vand.u32 2147483647, %v1760
    %v1763 = vcvt.s32.f32 %v1756
    %v1764 = vmul.f32 %v1763, %v1761
    %v1765 = vxor.u32 %v1764, 2147483648
    %v1766 = vsel %vm1683, %v1765, %v1764
    %v1767 = vsub.s32 4, %v1743
    %v1768 = vsel %vm1683, %v1767, %v1743
    %v1769 = vsel %vm1682, %v91, %v1766
    %v1770 = vsel %vm1682, 0, %v1768
    %v1771 = vcosq.f32.pop %v1769
    %v1772 = vsinq.f32.pop %v1769
    %vm1773 = vweird.f32 %v91
    %v1774 = vadd.s32 %v1770, 3
    %v1775 = vand.u32 %v1774, 3
    %vm1776 = vcmp.lt.s32.totalorder %v1775, 2
    %vm1777 = vcmp.eq.s32.totalorder %v1775, 0
    %v1778 = vxor.u32 %v1772, 2147483648
    %v1779 = vsel %vm1777, %v1771, %v1778
    %vm1780 = vcmp.eq.s32.totalorder %v1775, 2
    %v1781 = vxor.u32 %v1771, 2147483648
    %v1782 = vsel %vm1780, %v1781, %v1772
    %v1783 = vsel %vm1776, %v1779, %v1782
    %v1784 = vsel %vm1773, nan, %v1783
    %v1785 = vand.u32 2147483647, %v92
    %vm1786 = vcmp.le.f32.partialorder %v1785, 0.7853982
    %vm1787 = vcmp.lt.s32.totalorder %v92, 0
    %v1788 = vand.u32 %v92, 2139095040
    %v1789 = vshrl.u32 %v1788, 23
    %v1790 = vsub.s32 %v1789, 127
    %v1791 = vand.u32 2147483647, %v92
    %v1792 = vand.u32 %v1791, 8388607
    %v1793 = vor.u32 %v1792, 8388608
    %v1794 = vsub.s32 0, %v1793
    %v1795 = vadd.s32 %v1790, 1
    %vm1796 = vcmp.gt.s32.totalorder %v1795, 0
    %v1797 = vsel %vm1796, %v1795, 0
    %v1798 = vshrl.u32 %v1797, 5
    %v1799 = vand.u32 %v1797, 31
    %v1800 = vsub.s32 32, %v1799
    %v1801 = vshrl.u32 683565275, %v1800
    %v1802 = vshll.u32 683565275, %v1799
    %v1803 = vshrl.u32 2475754826, %v1800
    %v1804 = vor.u32 %v1802, %v1803
    %v1805 = vshll.u32 2475754826, %v1799
    %v1806 = vshrl.u32 2131351028, %v1800
    %v1807 = vor.u32 %v1805, %v1806
    %v1808 = vshll.u32 2131351028, %v1799
    %v1809 = vshrl.u32 2102212464, %v1800
    %v1810 = vor.u32 %v1808, %v1809
    %v1811 = vshll.u32 2102212464, %v1799
    %v1812 = vshrl.u32 920167782, %v1800
    %v1813 = vor.u32 %v1811, %v1812
    %v1814 = vshll.u32 920167782, %v1799
    %v1815 = vshrl.u32 1326507024, %v1800
    %v1816 = vor.u32 %v1814, %v1815
    %vm1817 = vcmp.lt.s32.totalorder %v1798, 1
    %vm1818 = vcmp.lt.s32.totalorder %v1798, 2
    %vm1819 = vcmp.lt.s32.totalorder %v1798, 3
    %vm1820 = vcmp.lt.s32.totalorder %v1798, 4
    %v1821 = vsel %vm1817, %v1801, %v1804
    %v1822 = vsel %vm1820, %v1810, 2102212464
    %v1823 = vsel %vm1819, %v1807, %v1822
    %v1824 = vsel %vm1818, %v1821, %v1823
    %v1825 = vsel %vm1817, %v1804, %v1807
    %v1826 = vsel %vm1820, %v1813, 920167782
    %v1827 = vsel %vm1819, %v1810, %v1826
    %v1828 = vsel %vm1818, %v1825, %v1827
    %v1829 = vsel %vm1817, %v1807, %v1810
    %v1830 = vsel %vm1820, %v1816, 1326507024
    %v1831 = vsel %vm1819, %v1813, %v1830
    %v1832 = vsel %vm1818, %v1829, %v1831
    %v1833 = vshll.u32 %v1793, 8
    %v1834 = vmul.u32.u64.compose %v1833, %v1832
    %v1835 = vextract.low.u32 %v1834
    %v1836 = vextract.high.u32 %v1834
    %v1837 = vmul.u32.u64.compose %v1833, %v1828
    %v1838 = vextract.low.u32 %v1837
    %v1839 = vextract.high.u32 %v1837
    %v1840 = vmul.u32 %v1833, %v1824
    %v1841 = vadd.s32 %v1836, %v1838
    %vm1842 = vc.u32 %v1836, %v1838
    %v1843 = vadd.s32 %v1839, 1
    %v1844 = vsel %vm1842, %v1843, %v1839
    %v1845 = vadd.s32 %v1840, %v1844
    %v1846 = vadd.s32 %v1845, 536870912
    %v1847 = vshrl.u32 %v1846, 30
    %v1848 = vshll.u32 %v1847, 30
    %v1849 = vsub.s32 %v1845, %v1848
    %vm1850 = vcmp.lt.s32.totalorder %v1849, 0
    %v1851 = vsub.s32 0, %v1849
    %v1852 = vsel %vm1850, %v1851, %v1849
    %v1853 = vclz %v1852
    %v1854 = vsub.s32 %v1853, 2
    %vm1855 = vcmp.gt.s32.totalorder 0, %v1854
    %v1856 = vsel %vm1855, 0, %v1854
    %v1857 = vsub.s32 32, %v1856
    %v1858 = vshll.u32 %v1849, %v1856
    %v1859 = vshrl.u32 %v1841, %v1857
    %v1860 = vor.u32 %v1858, %v1859
    %v1861 = vsub.s32 4294967266, %v1856
    %v1862 = vadd.s32 %v1861, 127
    %v1863 = vshll.u32 %v1862, 23
    %v1864 = vor.u32 4788187, %v1863
    %v1865 = vand.u32 2147483647, %v1864
    %v1867 = vcvt.s32.f32 %v1860
    %v1868 = vmul.f32 %v1867, %v1865
    %v1869 = vxor.u32 %v1868, 2147483648
    %v1870 = vsel %vm1787, %v1869, %v1868
    %v1871 = vsub.s32 4, %v1847
    %v1872 = vsel %vm1787, %v1871, %v1847
    %v1873 = vsel %vm1786, %v92, %v1870
    %v1874 = vsel %vm1786, 0, %v1872
    %v1875 = vcosq.f32.pop %v1873
    %v1876 = vsinq.f32.pop %v1873
    %vm1877 = vweird.f32 %v92
    %v1878 = vadd.s32 %v1874, 3
    %v1879 = vand.u32 %v1878, 3
    %vm1880 = vcmp.lt.s32.totalorder %v1879, 2
    %vm1881 = vcmp.eq.s32.totalorder %v1879, 0
    %v1882 = vxor.u32 %v1876, 2147483648
    %v1883 = vsel %vm1881, %v1875, %v1882
    %vm1884 = vcmp.eq.s32.totalorder %v1879, 2
    %v1885 = vxor.u32 %v1875, 2147483648
    %v1886 = vsel %vm1884, %v1885, %v1876
    %v1887 = vsel %vm1880, %v1883, %v1886
    %v1888 = vsel %vm1877, nan, %v1887
    %v1889 = vand.u32 2147483647, %v93
    %vm1890 = vcmp.le.f32.partialorder %v1889, 0.7853982
    %vm1891 = vcmp.lt.s32.totalorder %v93, 0
    %v1892 = vand.u32 %v93, 2139095040
    %v1893 = vshrl.u32 %v1892, 23
    %v1894 = vsub.s32 %v1893, 127
    %v1895 = vand.u32 2147483647, %v93
    %v1896 = vand.u32 %v1895, 8388607
    %v1897 = vor.u32 %v1896, 8388608
    %v1898 = vsub.s32 0, %v1897
    %v1899 = vadd.s32 %v1894, 1
    %vm1900 = vcmp.gt.s32.totalorder %v1899, 0
    %v1901 = vsel %vm1900, %v1899, 0
    %v1902 = vshrl.u32 %v1901, 5
    %v1903 = vand.u32 %v1901, 31
    %v1904 = vsub.s32 32, %v1903
    %v1905 = vshrl.u32 683565275, %v1904
    %v1906 = vshll.u32 683565275, %v1903
    %v1907 = vshrl.u32 2475754826, %v1904
    %v1908 = vor.u32 %v1906, %v1907
    %v1909 = vshll.u32 2475754826, %v1903
    %v1910 = vshrl.u32 2131351028, %v1904
    %v1911 = vor.u32 %v1909, %v1910
    %v1912 = vshll.u32 2131351028, %v1903
    %v1913 = vshrl.u32 2102212464, %v1904
    %v1914 = vor.u32 %v1912, %v1913
    %v1915 = vshll.u32 2102212464, %v1903
    %v1916 = vshrl.u32 920167782, %v1904
    %v1917 = vor.u32 %v1915, %v1916
    %v1918 = vshll.u32 920167782, %v1903
    %v1919 = vshrl.u32 1326507024, %v1904
    %v1920 = vor.u32 %v1918, %v1919
    %vm1921 = vcmp.lt.s32.totalorder %v1902, 1
    %vm1922 = vcmp.lt.s32.totalorder %v1902, 2
    %vm1923 = vcmp.lt.s32.totalorder %v1902, 3
    %vm1924 = vcmp.lt.s32.totalorder %v1902, 4
    %v1925 = vsel %vm1921, %v1905, %v1908
    %v1926 = vsel %vm1924, %v1914, 2102212464
    %v1927 = vsel %vm1923, %v1911, %v1926
    %v1928 = vsel %vm1922, %v1925, %v1927
    %v1929 = vsel %vm1921, %v1908, %v1911
    %v1930 = vsel %vm1924, %v1917, 920167782
    %v1931 = vsel %vm1923, %v1914, %v1930
    %v1932 = vsel %vm1922, %v1929, %v1931
    %v1933 = vsel %vm1921, %v1911, %v1914
    %v1934 = vsel %vm1924, %v1920, 1326507024
    %v1935 = vsel %vm1923, %v1917, %v1934
    %v1936 = vsel %vm1922, %v1933, %v1935
    %v1937 = vshll.u32 %v1897, 8
    %v1938 = vmul.u32.u64.compose %v1937, %v1936
    %v1939 = vextract.low.u32 %v1938
    %v1940 = vextract.high.u32 %v1938
    %v1941 = vmul.u32.u64.compose %v1937, %v1932
    %v1942 = vextract.low.u32 %v1941
    %v1943 = vextract.high.u32 %v1941
    %v1944 = vmul.u32 %v1937, %v1928
    %v1945 = vadd.s32 %v1940, %v1942
    %vm1946 = vc.u32 %v1940, %v1942
    %v1947 = vadd.s32 %v1943, 1
    %v1948 = vsel %vm1946, %v1947, %v1943
    %v1949 = vadd.s32 %v1944, %v1948
    %v1950 = vadd.s32 %v1949, 536870912
    %v1951 = vshrl.u32 %v1950, 30
    %v1952 = vshll.u32 %v1951, 30
    %v1953 = vsub.s32 %v1949, %v1952
    %vm1954 = vcmp.lt.s32.totalorder %v1953, 0
    %v1955 = vsub.s32 0, %v1953
    %v1956 = vsel %vm1954, %v1955, %v1953
    %v1957 = vclz %v1956
    %v1958 = vsub.s32 %v1957, 2
    %vm1959 = vcmp.gt.s32.totalorder 0, %v1958
    %v1960 = vsel %vm1959, 0, %v1958
    %v1961 = vsub.s32 32, %v1960
    %v1962 = vshll.u32 %v1953, %v1960
    %v1963 = vshrl.u32 %v1945, %v1961
    %v1964 = vor.u32 %v1962, %v1963
    %v1965 = vsub.s32 4294967266, %v1960
    %v1966 = vadd.s32 %v1965, 127
    %v1967 = vshll.u32 %v1966, 23
    %v1968 = vor.u32 4788187, %v1967
    %v1969 = vand.u32 2147483647, %v1968
    %v1971 = vcvt.s32.f32 %v1964
    %v1972 = vmul.f32 %v1971, %v1969
    %v1973 = vxor.u32 %v1972, 2147483648
    %v1974 = vsel %vm1891, %v1973, %v1972
    %v1975 = vsub.s32 4, %v1951
    %v1976 = vsel %vm1891, %v1975, %v1951
    %v1977 = vsel %vm1890, %v93, %v1974
    %v1978 = vsel %vm1890, 0, %v1976
    %v1979 = vcosq.f32.pop %v1977
    %v1980 = vsinq.f32.pop %v1977
    %vm1981 = vweird.f32 %v93
    %v1982 = vadd.s32 %v1978, 3
    %v1983 = vand.u32 %v1982, 3
    %vm1984 = vcmp.lt.s32.totalorder %v1983, 2
    %vm1985 = vcmp.eq.s32.totalorder %v1983, 0
    %v1986 = vxor.u32 %v1980, 2147483648
    %v1987 = vsel %vm1985, %v1979, %v1986
    %vm1988 = vcmp.eq.s32.totalorder %v1983, 2
    %v1989 = vxor.u32 %v1979, 2147483648
    %v1990 = vsel %vm1988, %v1989, %v1980
    %v1991 = vsel %vm1984, %v1987, %v1990
    %v1992 = vsel %vm1981, nan, %v1991
    %v1993 = vand.u32 2147483647, %v94
    %vm1994 = vcmp.le.f32.partialorder %v1993, 0.7853982
    %vm1995 = vcmp.lt.s32.totalorder %v94, 0
    %v1996 = vand.u32 %v94, 2139095040
    %v1997 = vshrl.u32 %v1996, 23
    %v1998 = vsub.s32 %v1997, 127
    %v1999 = vand.u32 2147483647, %v94
    %v2000 = vand.u32 %v1999, 8388607
    %v2001 = vor.u32 %v2000, 8388608
    %v2002 = vsub.s32 0, %v2001
    %v2003 = vadd.s32 %v1998, 1
    %vm2004 = vcmp.gt.s32.totalorder %v2003, 0
    %v2005 = vsel %vm2004, %v2003, 0
    %v2006 = vshrl.u32 %v2005, 5
    %v2007 = vand.u32 %v2005, 31
    %v2008 = vsub.s32 32, %v2007
    %v2009 = vshrl.u32 683565275, %v2008
    %v2010 = vshll.u32 683565275, %v2007
    %v2011 = vshrl.u32 2475754826, %v2008
    %v2012 = vor.u32 %v2010, %v2011
    %v2013 = vshll.u32 2475754826, %v2007
    %v2014 = vshrl.u32 2131351028, %v2008
    %v2015 = vor.u32 %v2013, %v2014
    %v2016 = vshll.u32 2131351028, %v2007
    %v2017 = vshrl.u32 2102212464, %v2008
    %v2018 = vor.u32 %v2016, %v2017
    %v2019 = vshll.u32 2102212464, %v2007
    %v2020 = vshrl.u32 920167782, %v2008
    %v2021 = vor.u32 %v2019, %v2020
    %v2022 = vshll.u32 920167782, %v2007
    %v2023 = vshrl.u32 1326507024, %v2008
    %v2024 = vor.u32 %v2022, %v2023
    %vm2025 = vcmp.lt.s32.totalorder %v2006, 1
    %vm2026 = vcmp.lt.s32.totalorder %v2006, 2
    %vm2027 = vcmp.lt.s32.totalorder %v2006, 3
    %vm2028 = vcmp.lt.s32.totalorder %v2006, 4
    %v2029 = vsel %vm2025, %v2009, %v2012
    %v2030 = vsel %vm2028, %v2018, 2102212464
    %v2031 = vsel %vm2027, %v2015, %v2030
    %v2032 = vsel %vm2026, %v2029, %v2031
    %v2033 = vsel %vm2025, %v2012, %v2015
    %v2034 = vsel %vm2028, %v2021, 920167782
    %v2035 = vsel %vm2027, %v2018, %v2034
    %v2036 = vsel %vm2026, %v2033, %v2035
    %v2037 = vsel %vm2025, %v2015, %v2018
    %v2038 = vsel %vm2028, %v2024, 1326507024
    %v2039 = vsel %vm2027, %v2021, %v2038
    %v2040 = vsel %vm2026, %v2037, %v2039
    %v2041 = vshll.u32 %v2001, 8
    %v2042 = vmul.u32.u64.compose %v2041, %v2040
    %v2043 = vextract.low.u32 %v2042
    %v2044 = vextract.high.u32 %v2042
    %v2045 = vmul.u32.u64.compose %v2041, %v2036
    %v2046 = vextract.low.u32 %v2045
    %v2047 = vextract.high.u32 %v2045
    %v2048 = vmul.u32 %v2041, %v2032
    %v2049 = vadd.s32 %v2044, %v2046
    %vm2050 = vc.u32 %v2044, %v2046
    %v2051 = vadd.s32 %v2047, 1
    %v2052 = vsel %vm2050, %v2051, %v2047
    %v2053 = vadd.s32 %v2048, %v2052
    %v2054 = vadd.s32 %v2053, 536870912
    %v2055 = vshrl.u32 %v2054, 30
    %v2056 = vshll.u32 %v2055, 30
    %v2057 = vsub.s32 %v2053, %v2056
    %vm2058 = vcmp.lt.s32.totalorder %v2057, 0
    %v2059 = vsub.s32 0, %v2057
    %v2060 = vsel %vm2058, %v2059, %v2057
    %v2061 = vclz %v2060
    %v2062 = vsub.s32 %v2061, 2
    %vm2063 = vcmp.gt.s32.totalorder 0, %v2062
    %v2064 = vsel %vm2063, 0, %v2062
    %v2065 = vsub.s32 32, %v2064
    %v2066 = vshll.u32 %v2057, %v2064
    %v2067 = vshrl.u32 %v2049, %v2065
    %v2068 = vor.u32 %v2066, %v2067
    %v2069 = vsub.s32 4294967266, %v2064
    %v2070 = vadd.s32 %v2069, 127
    %v2071 = vshll.u32 %v2070, 23
    %v2072 = vor.u32 4788187, %v2071
    %v2073 = vand.u32 2147483647, %v2072
    %v2075 = vcvt.s32.f32 %v2068
    %v2076 = vmul.f32 %v2075, %v2073
    %v2077 = vxor.u32 %v2076, 2147483648
    %v2078 = vsel %vm1995, %v2077, %v2076
    %v2079 = vsub.s32 4, %v2055
    %v2080 = vsel %vm1995, %v2079, %v2055
    %v2081 = vsel %vm1994, %v94, %v2078
    %v2082 = vsel %vm1994, 0, %v2080
    %v2083 = vcosq.f32.pop %v2081
    %v2084 = vsinq.f32.pop %v2081
    %vm2085 = vweird.f32 %v94
    %v2086 = vadd.s32 %v2082, 3
    %v2087 = vand.u32 %v2086, 3
    %vm2088 = vcmp.lt.s32.totalorder %v2087, 2
    %vm2089 = vcmp.eq.s32.totalorder %v2087, 0
    %v2090 = vxor.u32 %v2084, 2147483648
    %v2091 = vsel %vm2089, %v2083, %v2090
    %vm2092 = vcmp.eq.s32.totalorder %v2087, 2
    %v2093 = vxor.u32 %v2083, 2147483648
    %v2094 = vsel %vm2092, %v2093, %v2084
    %v2095 = vsel %vm2088, %v2091, %v2094
    %v2096 = vsel %vm2085, nan, %v2095
    %v2097 = vand.u32 2147483647, %v95
    %vm2098 = vcmp.le.f32.partialorder %v2097, 0.7853982
    %vm2099 = vcmp.lt.s32.totalorder %v95, 0
    %v2100 = vand.u32 %v95, 2139095040
    %v2101 = vshrl.u32 %v2100, 23
    %v2102 = vsub.s32 %v2101, 127
    %v2103 = vand.u32 2147483647, %v95
    %v2104 = vand.u32 %v2103, 8388607
    %v2105 = vor.u32 %v2104, 8388608
    %v2106 = vsub.s32 0, %v2105
    %v2107 = vadd.s32 %v2102, 1
    %vm2108 = vcmp.gt.s32.totalorder %v2107, 0
    %v2109 = vsel %vm2108, %v2107, 0
    %v2110 = vshrl.u32 %v2109, 5
    %v2111 = vand.u32 %v2109, 31
    %v2112 = vsub.s32 32, %v2111
    %v2113 = vshrl.u32 683565275, %v2112
    %v2114 = vshll.u32 683565275, %v2111
    %v2115 = vshrl.u32 2475754826, %v2112
    %v2116 = vor.u32 %v2114, %v2115
    %v2117 = vshll.u32 2475754826, %v2111
    %v2118 = vshrl.u32 2131351028, %v2112
    %v2119 = vor.u32 %v2117, %v2118
    %v2120 = vshll.u32 2131351028, %v2111
    %v2121 = vshrl.u32 2102212464, %v2112
    %v2122 = vor.u32 %v2120, %v2121
    %v2123 = vshll.u32 2102212464, %v2111
    %v2124 = vshrl.u32 920167782, %v2112
    %v2125 = vor.u32 %v2123, %v2124
    %v2126 = vshll.u32 920167782, %v2111
    %v2127 = vshrl.u32 1326507024, %v2112
    %v2128 = vor.u32 %v2126, %v2127
    %vm2129 = vcmp.lt.s32.totalorder %v2110, 1
    %vm2130 = vcmp.lt.s32.totalorder %v2110, 2
    %vm2131 = vcmp.lt.s32.totalorder %v2110, 3
    %vm2132 = vcmp.lt.s32.totalorder %v2110, 4
    %v2133 = vsel %vm2129, %v2113, %v2116
    %v2134 = vsel %vm2132, %v2122, 2102212464
    %v2135 = vsel %vm2131, %v2119, %v2134
    %v2136 = vsel %vm2130, %v2133, %v2135
    %v2137 = vsel %vm2129, %v2116, %v2119
    %v2138 = vsel %vm2132, %v2125, 920167782
    %v2139 = vsel %vm2131, %v2122, %v2138
    %v2140 = vsel %vm2130, %v2137, %v2139
    %v2141 = vsel %vm2129, %v2119, %v2122
    %v2142 = vsel %vm2132, %v2128, 1326507024
    %v2143 = vsel %vm2131, %v2125, %v2142
    %v2144 = vsel %vm2130, %v2141, %v2143
    %v2145 = vshll.u32 %v2105, 8
    %v2146 = vmul.u32.u64.compose %v2145, %v2144
    %v2147 = vextract.low.u32 %v2146
    %v2148 = vextract.high.u32 %v2146
    %v2149 = vmul.u32.u64.compose %v2145, %v2140
    %v2150 = vextract.low.u32 %v2149
    %v2151 = vextract.high.u32 %v2149
    %v2152 = vmul.u32 %v2145, %v2136
    %v2153 = vadd.s32 %v2148, %v2150
    %vm2154 = vc.u32 %v2148, %v2150
    %v2155 = vadd.s32 %v2151, 1
    %v2156 = vsel %vm2154, %v2155, %v2151
    %v2157 = vadd.s32 %v2152, %v2156
    %v2158 = vadd.s32 %v2157, 536870912
    %v2159 = vshrl.u32 %v2158, 30
    %v2160 = vshll.u32 %v2159, 30
    %v2161 = vsub.s32 %v2157, %v2160
    %vm2162 = vcmp.lt.s32.totalorder %v2161, 0
    %v2163 = vsub.s32 0, %v2161
    %v2164 = vsel %vm2162, %v2163, %v2161
    %v2165 = vclz %v2164
    %v2166 = vsub.s32 %v2165, 2
    %vm2167 = vcmp.gt.s32.totalorder 0, %v2166
    %v2168 = vsel %vm2167, 0, %v2166
    %v2169 = vsub.s32 32, %v2168
    %v2170 = vshll.u32 %v2161, %v2168
    %v2171 = vshrl.u32 %v2153, %v2169
    %v2172 = vor.u32 %v2170, %v2171
    %v2173 = vsub.s32 4294967266, %v2168
    %v2174 = vadd.s32 %v2173, 127
    %v2175 = vshll.u32 %v2174, 23
    %v2176 = vor.u32 4788187, %v2175
    %v2177 = vand.u32 2147483647, %v2176
    %v2179 = vcvt.s32.f32 %v2172
    %v2180 = vmul.f32 %v2179, %v2177
    %v2181 = vxor.u32 %v2180, 2147483648
    %v2182 = vsel %vm2099, %v2181, %v2180
    %v2183 = vsub.s32 4, %v2159
    %v2184 = vsel %vm2099, %v2183, %v2159
    %v2185 = vsel %vm2098, %v95, %v2182
    %v2186 = vsel %vm2098, 0, %v2184
    %v2187 = vcosq.f32.pop %v2185
    %v2188 = vsinq.f32.pop %v2185
    %vm2189 = vweird.f32 %v95
    %v2190 = vadd.s32 %v2186, 3
    %v2191 = vand.u32 %v2190, 3
    %vm2192 = vcmp.lt.s32.totalorder %v2191, 2
    %vm2193 = vcmp.eq.s32.totalorder %v2191, 0
    %v2194 = vxor.u32 %v2188, 2147483648
    %v2195 = vsel %vm2193, %v2187, %v2194
    %vm2196 = vcmp.eq.s32.totalorder %v2191, 2
    %v2197 = vxor.u32 %v2187, 2147483648
    %v2198 = vsel %vm2196, %v2197, %v2188
    %v2199 = vsel %vm2192, %v2195, %v2198
    %v2200 = vsel %vm2189, nan, %v2199
    %v2201 = vand.u32 2147483647, %v96
    %vm2202 = vcmp.le.f32.partialorder %v2201, 0.7853982
    %vm2203 = vcmp.lt.s32.totalorder %v96, 0
    %v2204 = vand.u32 %v96, 2139095040
    %v2205 = vshrl.u32 %v2204, 23
    %v2206 = vsub.s32 %v2205, 127
    %v2207 = vand.u32 2147483647, %v96
    %v2208 = vand.u32 %v2207, 8388607
    %v2209 = vor.u32 %v2208, 8388608
    %v2210 = vsub.s32 0, %v2209
    %v2211 = vadd.s32 %v2206, 1
    %vm2212 = vcmp.gt.s32.totalorder %v2211, 0
    %v2213 = vsel %vm2212, %v2211, 0
    %v2214 = vshrl.u32 %v2213, 5
    %v2215 = vand.u32 %v2213, 31
    %v2216 = vsub.s32 32, %v2215
    %v2217 = vshrl.u32 683565275, %v2216
    %v2218 = vshll.u32 683565275, %v2215
    %v2219 = vshrl.u32 2475754826, %v2216
    %v2220 = vor.u32 %v2218, %v2219
    %v2221 = vshll.u32 2475754826, %v2215
    %v2222 = vshrl.u32 2131351028, %v2216
    %v2223 = vor.u32 %v2221, %v2222
    %v2224 = vshll.u32 2131351028, %v2215
    %v2225 = vshrl.u32 2102212464, %v2216
    %v2226 = vor.u32 %v2224, %v2225
    %v2227 = vshll.u32 2102212464, %v2215
    %v2228 = vshrl.u32 920167782, %v2216
    %v2229 = vor.u32 %v2227, %v2228
    %v2230 = vshll.u32 920167782, %v2215
    %v2231 = vshrl.u32 1326507024, %v2216
    %v2232 = vor.u32 %v2230, %v2231
    %vm2233 = vcmp.lt.s32.totalorder %v2214, 1
    %vm2234 = vcmp.lt.s32.totalorder %v2214, 2
    %vm2235 = vcmp.lt.s32.totalorder %v2214, 3
    %vm2236 = vcmp.lt.s32.totalorder %v2214, 4
    %v2237 = vsel %vm2233, %v2217, %v2220
    %v2238 = vsel %vm2236, %v2226, 2102212464
    %v2239 = vsel %vm2235, %v2223, %v2238
    %v2240 = vsel %vm2234, %v2237, %v2239
    %v2241 = vsel %vm2233, %v2220, %v2223
    %v2242 = vsel %vm2236, %v2229, 920167782
    %v2243 = vsel %vm2235, %v2226, %v2242
    %v2244 = vsel %vm2234, %v2241, %v2243
    %v2245 = vsel %vm2233, %v2223, %v2226
    %v2246 = vsel %vm2236, %v2232, 1326507024
    %v2247 = vsel %vm2235, %v2229, %v2246
    %v2248 = vsel %vm2234, %v2245, %v2247
    %v2249 = vshll.u32 %v2209, 8
    %v2250 = vmul.u32.u64.compose %v2249, %v2248
    %v2251 = vextract.low.u32 %v2250
    %v2252 = vextract.high.u32 %v2250
    %v2253 = vmul.u32.u64.compose %v2249, %v2244
    %v2254 = vextract.low.u32 %v2253
    %v2255 = vextract.high.u32 %v2253
    %v2256 = vmul.u32 %v2249, %v2240
    %v2257 = vadd.s32 %v2252, %v2254
    %vm2258 = vc.u32 %v2252, %v2254
    %v2259 = vadd.s32 %v2255, 1
    %v2260 = vsel %vm2258, %v2259, %v2255
    %v2261 = vadd.s32 %v2256, %v2260
    %v2262 = vadd.s32 %v2261, 536870912
    %v2263 = vshrl.u32 %v2262, 30
    %v2264 = vshll.u32 %v2263, 30
    %v2265 = vsub.s32 %v2261, %v2264
    %vm2266 = vcmp.lt.s32.totalorder %v2265, 0
    %v2267 = vsub.s32 0, %v2265
    %v2268 = vsel %vm2266, %v2267, %v2265
    %v2269 = vclz %v2268
    %v2270 = vsub.s32 %v2269, 2
    %vm2271 = vcmp.gt.s32.totalorder 0, %v2270
    %v2272 = vsel %vm2271, 0, %v2270
    %v2273 = vsub.s32 32, %v2272
    %v2274 = vshll.u32 %v2265, %v2272
    %v2275 = vshrl.u32 %v2257, %v2273
    %v2276 = vor.u32 %v2274, %v2275
    %v2277 = vsub.s32 4294967266, %v2272
    %v2278 = vadd.s32 %v2277, 127
    %v2279 = vshll.u32 %v2278, 23
    %v2280 = vor.u32 4788187, %v2279
    %v2281 = vand.u32 2147483647, %v2280
    %v2283 = vcvt.s32.f32 %v2276
    %v2284 = vmul.f32 %v2283, %v2281
    %v2285 = vxor.u32 %v2284, 2147483648
    %v2286 = vsel %vm2203, %v2285, %v2284
    %v2287 = vsub.s32 4, %v2263
    %v2288 = vsel %vm2203, %v2287, %v2263
    %v2289 = vsel %vm2202, %v96, %v2286
    %v2290 = vsel %vm2202, 0, %v2288
    %v2291 = vcosq.f32.pop %v2289
    %v2292 = vsinq.f32.pop %v2289
    %vm2293 = vweird.f32 %v96
    %v2294 = vadd.s32 %v2290, 3
    %v2295 = vand.u32 %v2294, 3
    %vm2296 = vcmp.lt.s32.totalorder %v2295, 2
    %vm2297 = vcmp.eq.s32.totalorder %v2295, 0
    %v2298 = vxor.u32 %v2292, 2147483648
    %v2299 = vsel %vm2297, %v2291, %v2298
    %vm2300 = vcmp.eq.s32.totalorder %v2295, 2
    %v2301 = vxor.u32 %v2291, 2147483648
    %v2302 = vsel %vm2300, %v2301, %v2292
    %v2303 = vsel %vm2296, %v2299, %v2302
    %v2304 = vsel %vm2293, nan, %v2303
    %v2305 = vsub.f32 0.0, %v197
    %v2306 = vsub.f32 0.0, %v200
    %v2307 = vsub.f32 0.0, %v205
    %v2308 = vsub.f32 0.0, %v208
    %v2309 = vsub.f32 0.0, %v213
    %v2310 = vsub.f32 0.0, %v216
    %v2311 = vsub.f32 0.0, %v221
    %v2312 = vsub.f32 0.0, %v224
    %v2313 = vsub.f32 0.0, %v229
    %v2314 = vsub.f32 0.0, %v232
    %2325 = vrot.lane.b32.xlu0 %v2305, 124
    %v2326 = vpop.permute.xlu0 %2325
    %2327 = vrot.lane.b32.xlu0 %v2306, 124
    %v2328 = vpop.permute.xlu0 %2327
    %2329 = vrot.lane.b32.xlu0 %v2307, 124
    %v2330 = vpop.permute.xlu0 %2329
    %2331 = vrot.lane.b32.xlu0 %v2308, 124
    %v2332 = vpop.permute.xlu0 %2331
    %2333 = vrot.lane.b32.xlu0 %v2309, 124
    %v2334 = vpop.permute.xlu0 %2333
    %2335 = vrot.lane.b32.xlu0 %v2310, 124
    %v2336 = vpop.permute.xlu0 %2335
    %2337 = vrot.lane.b32.xlu0 %v2311, 124
    %v2338 = vpop.permute.xlu0 %2337
    %2339 = vrot.lane.b32.xlu0 %v2312, 124
    %v2340 = vpop.permute.xlu0 %2339
    %2341 = vrot.lane.b32.xlu0 %v2313, 124
    %v2342 = vpop.permute.xlu0 %2341
    %2343 = vrot.lane.b32.xlu0 %v2314, 124
    %v2344 = vpop.permute.xlu0 %2343
    %2365 = vrot.lane.b32.xlu0 %v197, 4
    %v2366 = vpop.permute.xlu0 %2365
    %2367 = vrot.lane.b32.xlu0 %v200, 4
    %v2368 = vpop.permute.xlu0 %2367
    %2369 = vrot.lane.b32.xlu0 %v205, 4
    %v2370 = vpop.permute.xlu0 %2369
    %2371 = vrot.lane.b32.xlu0 %v208, 4
    %v2372 = vpop.permute.xlu0 %2371
    %2373 = vrot.lane.b32.xlu0 %v213, 4
    %v2374 = vpop.permute.xlu0 %2373
    %2375 = vrot.lane.b32.xlu0 %v216, 4
    %v2376 = vpop.permute.xlu0 %2375
    %2377 = vrot.lane.b32.xlu0 %v221, 4
    %v2378 = vpop.permute.xlu0 %2377
    %2379 = vrot.lane.b32.xlu0 %v224, 4
    %v2380 = vpop.permute.xlu0 %2379
    %2381 = vrot.lane.b32.xlu0 %v229, 4
    %v2382 = vpop.permute.xlu0 %2381
    %2383 = vrot.lane.b32.xlu0 %v232, 4
    %v2384 = vpop.permute.xlu0 %2383
    %vm2395 = vcmask 31744
    %v2396 = vsel %vm2395, %v2326, %v2366
    %v2397 = vsel %vm2395, %v2328, %v2368
    %v2398 = vsel %vm2395, %v2330, %v2370
    %v2399 = vsel %vm2395, %v2332, %v2372
    %v2400 = vsel %vm2395, %v2334, %v2374
    %v2401 = vsel %vm2395, %v2336, %v2376
    %v2402 = vsel %vm2395, %v2338, %v2378
    %v2403 = vsel %vm2395, %v2340, %v2380
    %v2404 = vsel %vm2395, %v2342, %v2382
    %v2405 = vsel %vm2395, %v2344, %v2384
    %vm2406 = vcmask 64512
    %v2407 = vsel %vm2406, %v2396, %v2326
    %v2408 = vsel %vm2406, %v2397, %v2328
    %v2409 = vsel %vm2406, %v2398, %v2330
    %v2410 = vsel %vm2406, %v2399, %v2332
    %v2411 = vsel %vm2406, %v2400, %v2334
    %v2412 = vsel %vm2406, %v2401, %v2336
    %v2413 = vsel %vm2406, %v2402, %v2338
    %v2414 = vsel %vm2406, %v2403, %v2340
    %v2415 = vsel %vm2406, %v2404, %v2342
    %v2416 = vsel %vm2406, %v2405, %v2344
    %vm2417 = vcmask 97280
    %v2418 = vsel %vm2417, %v2407, %v2366
    %v2419 = vsel %vm2417, %v2408, %v2368
    %v2420 = vsel %vm2417, %v2409, %v2370
    %v2421 = vsel %vm2417, %v2410, %v2372
    %v2422 = vsel %vm2417, %v2411, %v2374
    %v2423 = vsel %vm2417, %v2412, %v2376
    %v2424 = vsel %vm2417, %v2413, %v2378
    %v2425 = vsel %vm2417, %v2414, %v2380
    %v2426 = vsel %vm2417, %v2415, %v2382
    %v2427 = vsel %vm2417, %v2416, %v2384
    %v2428 = vmul.f32 %v197, %v337
    %v2429 = vmul.f32 %v200, %v440
    %v2430 = vmul.f32 %v205, %v543
    %v2431 = vmul.f32 %v208, %v646
    %v2432 = vmul.f32 %v213, %v749
    %v2433 = vmul.f32 %v216, %v852
    %v2434 = vmul.f32 %v221, %v955
    %v2435 = vmul.f32 %v224, %v1058
    %v2436 = vmul.f32 %v229, %v1161
    %v2437 = vmul.f32 %v232, %v1264
    %v2438 = vmul.f32 %v2418, %v1368
    %v2439 = vmul.f32 %v2419, %v1472
    %v2440 = vmul.f32 %v2420, %v1576
    %v2441 = vmul.f32 %v2421, %v1680
    %v2442 = vmul.f32 %v2422, %v1784
    %v2443 = vmul.f32 %v2423, %v1888
    %v2444 = vmul.f32 %v2424, %v1992
    %v2445 = vmul.f32 %v2425, %v2096
    %v2446 = vmul.f32 %v2426, %v2200
    %v2447 = vmul.f32 %v2427, %v2304
    %v2448 = vadd.f32 %v2428, %v2438
    %v2449 = vadd.f32 %v2429, %v2439
    %v2450 = vadd.f32 %v2430, %v2440
    %v2451 = vadd.f32 %v2431, %v2441
    %v2452 = vadd.f32 %v2432, %v2442
    %v2453 = vadd.f32 %v2433, %v2443
    %v2454 = vadd.f32 %v2434, %v2444
    %v2455 = vadd.f32 %v2435, %v2445
    %v2456 = vadd.f32 %v2436, %v2446
    %v2457 = vadd.f32 %v2437, %v2447
    %2458 = vrot.lane.b32.xlu0 %v2305, 92
    %v2459 = vpop.permute.xlu0 %2458
    %2460 = vrot.lane.b32.xlu0 %v2306, 92
    %v2461 = vpop.permute.xlu0 %2460
    %2462 = vrot.lane.b32.xlu0 %v2307, 92
    %v2463 = vpop.permute.xlu0 %2462
    %2464 = vrot.lane.b32.xlu0 %v2308, 92
    %v2465 = vpop.permute.xlu0 %2464
    %2466 = vrot.lane.b32.xlu0 %v2309, 92
    %v2467 = vpop.permute.xlu0 %2466
    %2468 = vrot.lane.b32.xlu0 %v2310, 92
    %v2469 = vpop.permute.xlu0 %2468
    %2470 = vrot.lane.b32.xlu0 %v2311, 92
    %v2471 = vpop.permute.xlu0 %2470
    %2472 = vrot.lane.b32.xlu0 %v2312, 92
    %v2473 = vpop.permute.xlu0 %2472
    %2474 = vrot.lane.b32.xlu0 %v2313, 92
    %v2475 = vpop.permute.xlu0 %2474
    %2476 = vrot.lane.b32.xlu0 %v2314, 92
    %v2477 = vpop.permute.xlu0 %2476
    %2488 = vrot.lane.b32.xlu0 %v197, 100
    %v2489 = vpop.permute.xlu0 %2488
    %2490 = vrot.lane.b32.xlu0 %v200, 100
    %v2491 = vpop.permute.xlu0 %2490
    %2492 = vrot.lane.b32.xlu0 %v205, 100
    %v2493 = vpop.permute.xlu0 %2492
    %2494 = vrot.lane.b32.xlu0 %v208, 100
    %v2495 = vpop.permute.xlu0 %2494
    %2496 = vrot.lane.b32.xlu0 %v213, 100
    %v2497 = vpop.permute.xlu0 %2496
    %2498 = vrot.lane.b32.xlu0 %v216, 100
    %v2499 = vpop.permute.xlu0 %2498
    %2500 = vrot.lane.b32.xlu0 %v221, 100
    %v2501 = vpop.permute.xlu0 %2500
    %2502 = vrot.lane.b32.xlu0 %v224, 100
    %v2503 = vpop.permute.xlu0 %2502
    %2504 = vrot.lane.b32.xlu0 %v229, 100
    %v2505 = vpop.permute.xlu0 %2504
    %2506 = vrot.lane.b32.xlu0 %v232, 100
    %v2507 = vpop.permute.xlu0 %2506
    %v2518 = vsel %vm2395, %v2459, %v2489
    %v2519 = vsel %vm2395, %v2461, %v2491
    %v2520 = vsel %vm2395, %v2463, %v2493
    %v2521 = vsel %vm2395, %v2465, %v2495
    %v2522 = vsel %vm2395, %v2467, %v2497
    %v2523 = vsel %vm2395, %v2469, %v2499
    %v2524 = vsel %vm2395, %v2471, %v2501
    %v2525 = vsel %vm2395, %v2473, %v2503
    %v2526 = vsel %vm2395, %v2475, %v2505
    %v2527 = vsel %vm2395, %v2477, %v2507
    %v2528 = vsel %vm2406, %v2518, %v2459
    %v2529 = vsel %vm2406, %v2519, %v2461
    %v2530 = vsel %vm2406, %v2520, %v2463
    %v2531 = vsel %vm2406, %v2521, %v2465
    %v2532 = vsel %vm2406, %v2522, %v2467
    %v2533 = vsel %vm2406, %v2523, %v2469
    %v2534 = vsel %vm2406, %v2524, %v2471
    %v2535 = vsel %vm2406, %v2525, %v2473
    %v2536 = vsel %vm2406, %v2526, %v2475
    %v2537 = vsel %vm2406, %v2527, %v2477
    %v2538 = vsel %vm2417, %v2528, %v2489
    %v2539 = vsel %vm2417, %v2529, %v2491
    %v2540 = vsel %vm2417, %v2530, %v2493
    %v2541 = vsel %vm2417, %v2531, %v2495
    %v2542 = vsel %vm2417, %v2532, %v2497
    %v2543 = vsel %vm2417, %v2533, %v2499
    %v2544 = vsel %vm2417, %v2534, %v2501
    %v2545 = vsel %vm2417, %v2535, %v2503
    %v2546 = vsel %vm2417, %v2536, %v2505
    %v2547 = vsel %vm2417, %v2537, %v2507
    %2558 = vrot.lane.b32.xlu0 %v337, 32
    %v2559 = vpop.permute.xlu0 %2558
    %2560 = vrot.lane.b32.xlu0 %v440, 32
    %v2561 = vpop.permute.xlu0 %2560
    %2562 = vrot.lane.b32.xlu0 %v543, 32
    %v2563 = vpop.permute.xlu0 %2562
    %2564 = vrot.lane.b32.xlu0 %v646, 32
    %v2565 = vpop.permute.xlu0 %2564
    %2566 = vrot.lane.b32.xlu0 %v749, 32
    %v2567 = vpop.permute.xlu0 %2566
    %2568 = vrot.lane.b32.xlu0 %v852, 32
    %v2569 = vpop.permute.xlu0 %2568
    %2570 = vrot.lane.b32.xlu0 %v955, 32
    %v2571 = vpop.permute.xlu0 %2570
    %2572 = vrot.lane.b32.xlu0 %v1058, 32
    %v2573 = vpop.permute.xlu0 %2572
    %2574 = vrot.lane.b32.xlu0 %v1161, 32
    %v2575 = vpop.permute.xlu0 %2574
    %2576 = vrot.lane.b32.xlu0 %v1264, 32
    %v2577 = vpop.permute.xlu0 %2576
    %v2588 = vmul.f32 %v197, %v2559
    %v2589 = vmul.f32 %v200, %v2561
    %v2590 = vmul.f32 %v205, %v2563
    %v2591 = vmul.f32 %v208, %v2565
    %v2592 = vmul.f32 %v213, %v2567
    %v2593 = vmul.f32 %v216, %v2569
    %v2594 = vmul.f32 %v221, %v2571
    %v2595 = vmul.f32 %v224, %v2573
    %v2596 = vmul.f32 %v229, %v2575
    %v2597 = vmul.f32 %v232, %v2577
    %v2598 = vmul.f32 %v2538, %v1368
    %v2599 = vmul.f32 %v2539, %v1472
    %v2600 = vmul.f32 %v2540, %v1576
    %v2601 = vmul.f32 %v2541, %v1680
    %v2602 = vmul.f32 %v2542, %v1784
    %v2603 = vmul.f32 %v2543, %v1888
    %v2604 = vmul.f32 %v2544, %v1992
    %v2605 = vmul.f32 %v2545, %v2096
    %v2606 = vmul.f32 %v2546, %v2200
    %v2607 = vmul.f32 %v2547, %v2304
    %2618 = vrot.lane.b32.xlu0 %v2598, 32
    %v2619 = vpop.permute.xlu0 %2618
    %2620 = vrot.lane.b32.xlu0 %v2599, 32
    %v2621 = vpop.permute.xlu0 %2620
    %2622 = vrot.lane.b32.xlu0 %v2600, 32
    %v2623 = vpop.permute.xlu0 %2622
    %2624 = vrot.lane.b32.xlu0 %v2601, 32
    %v2625 = vpop.permute.xlu0 %2624
    %2626 = vrot.lane.b32.xlu0 %v2602, 32
    %v2627 = vpop.permute.xlu0 %2626
    %2628 = vrot.lane.b32.xlu0 %v2603, 32
    %v2629 = vpop.permute.xlu0 %2628
    %2630 = vrot.lane.b32.xlu0 %v2604, 32
    %v2631 = vpop.permute.xlu0 %2630
    %2632 = vrot.lane.b32.xlu0 %v2605, 32
    %v2633 = vpop.permute.xlu0 %2632
    %2634 = vrot.lane.b32.xlu0 %v2606, 32
    %v2635 = vpop.permute.xlu0 %2634
    %2636 = vrot.lane.b32.xlu0 %v2607, 32
    %v2637 = vpop.permute.xlu0 %2636
    %v2648 = vadd.f32 %v2588, %v2619
    %v2649 = vadd.f32 %v2589, %v2621
    %v2650 = vadd.f32 %v2590, %v2623
    %v2651 = vadd.f32 %v2591, %v2625
    %v2652 = vadd.f32 %v2592, %v2627
    %v2653 = vadd.f32 %v2593, %v2629
    %v2654 = vadd.f32 %v2594, %v2631
    %v2655 = vadd.f32 %v2595, %v2633
    %v2656 = vadd.f32 %v2596, %v2635
    %v2657 = vadd.f32 %v2597, %v2637
    %2660 = vrot.lane.b32.xlu0 %v2648, 96
    %v2661 = vpop.permute.xlu0 %2660
    %2662 = vrot.lane.b32.xlu0 %v2649, 96
    %v2663 = vpop.permute.xlu0 %2662
    %v2666 = vmul.f32 %v2448, %v2661
    %v2667 = vmul.f32 %v2449, %v2663
    %vm2668 = vcmask 130048
    %v2669 = vsel %vm2668, %v2666, 0.0
    %2670 = vadd.xlane.f32.xlu0 %v2669
    %v2671 = vpop.xlane.xlu0 %2670
    %v2672 = vsel %vm2668, %v2667, 0.0
    %2673 = vadd.xlane.f32.xlu0 %v2672
    %v2674 = vpop.xlane.xlu0 %2673
    %v2675 = vmul.f32 %v2671, 0.25
    %v2676 = vmul.f32 %v2674, 0.25
    %2679 = vrot.lane.b32.xlu0 %v2650, 96
    %v2680 = vpop.permute.xlu0 %2679
    %2681 = vrot.lane.b32.xlu0 %v2651, 96
    %v2682 = vpop.permute.xlu0 %2681
    %v2685 = vmul.f32 %v2448, %v2680
    %v2686 = vmul.f32 %v2449, %v2682
    %v2687 = vsel %vm2668, %v2685, 0.0
    %2688 = vadd.xlane.f32.xlu0 %v2687
    %v2689 = vpop.xlane.xlu0 %2688
    %v2690 = vsel %vm2668, %v2686, 0.0
    %2691 = vadd.xlane.f32.xlu0 %v2690
    %v2692 = vpop.xlane.xlu0 %2691
    %v2693 = vmul.f32 %v2689, 0.25
    %v2694 = vmul.f32 %v2692, 0.25
    %2697 = vrot.lane.b32.xlu0 %v2652, 96
    %v2698 = vpop.permute.xlu0 %2697
    %2699 = vrot.lane.b32.xlu0 %v2653, 96
    %v2700 = vpop.permute.xlu0 %2699
    %v2703 = vmul.f32 %v2448, %v2698
    %v2704 = vmul.f32 %v2449, %v2700
    %v2705 = vsel %vm2668, %v2703, 0.0
    %2706 = vadd.xlane.f32.xlu0 %v2705
    %v2707 = vpop.xlane.xlu0 %2706
    %v2708 = vsel %vm2668, %v2704, 0.0
    %2709 = vadd.xlane.f32.xlu0 %v2708
    %v2710 = vpop.xlane.xlu0 %2709
    %v2711 = vmul.f32 %v2707, 0.25
    %v2712 = vmul.f32 %v2710, 0.25
    %2715 = vrot.lane.b32.xlu0 %v2654, 96
    %v2716 = vpop.permute.xlu0 %2715
    %2717 = vrot.lane.b32.xlu0 %v2655, 96
    %v2718 = vpop.permute.xlu0 %2717
    %v2721 = vmul.f32 %v2448, %v2716
    %v2722 = vmul.f32 %v2449, %v2718
    %v2723 = vsel %vm2668, %v2721, 0.0
    %2724 = vadd.xlane.f32.xlu0 %v2723
    %v2725 = vpop.xlane.xlu0 %2724
    %v2726 = vsel %vm2668, %v2722, 0.0
    %2727 = vadd.xlane.f32.xlu0 %v2726
    %v2728 = vpop.xlane.xlu0 %2727
    %v2729 = vmul.f32 %v2725, 0.25
    %v2730 = vmul.f32 %v2728, 0.25
    %2733 = vrot.lane.b32.xlu0 %v2656, 96
    %v2734 = vpop.permute.xlu0 %2733
    %2735 = vrot.lane.b32.xlu0 %v2657, 96
    %v2736 = vpop.permute.xlu0 %2735
    %v2739 = vmul.f32 %v2448, %v2734
    %v2740 = vmul.f32 %v2449, %v2736
    %v2741 = vsel %vm2668, %v2739, 0.0
    %2742 = vadd.xlane.f32.xlu0 %v2741
    %v2743 = vpop.xlane.xlu0 %2742
    %v2744 = vsel %vm2668, %v2740, 0.0
    %2745 = vadd.xlane.f32.xlu0 %v2744
    %v2746 = vpop.xlane.xlu0 %2745
    %v2747 = vmul.f32 %v2743, 0.25
    %v2748 = vmul.f32 %v2746, 0.25
    %v2749 = vmax.f32 %v2675, %v2693
    %v2750 = vmax.f32 %v2676, %v2694
    %v2751 = vmax.f32 %v2749, %v2711
    %v2752 = vmax.f32 %v2750, %v2712
    %v2753 = vmax.f32 %v2751, %v2729
    %v2754 = vmax.f32 %v2752, %v2730
    %v2755 = vmax.f32 %v2753, %v2747
    %v2756 = vmax.f32 %v2754, %v2748
    %v2757 = vsub.f32 %v2675, %v2755
    %v2758 = vsub.f32 %v2676, %v2756
    %v2759 = vmul.f32 %v2757, 1.442695
    %v2760 = vpow.pop %v2759
    %v2761 = vmul.f32 %v2758, 1.442695
    %v2762 = vpow.pop %v2761
    %v2763 = vsub.f32 %v2693, %v2755
    %v2764 = vsub.f32 %v2694, %v2756
    %v2765 = vmul.f32 %v2763, 1.442695
    %v2766 = vpow.pop %v2765
    %v2767 = vmul.f32 %v2764, 1.442695
    %v2768 = vpow.pop %v2767
    %v2769 = vsub.f32 %v2711, %v2755
    %v2770 = vsub.f32 %v2712, %v2756
    %v2771 = vmul.f32 %v2769, 1.442695
    %v2772 = vpow.pop %v2771
    %v2773 = vmul.f32 %v2770, 1.442695
    %v2774 = vpow.pop %v2773
    %v2775 = vsub.f32 %v2729, %v2755
    %v2776 = vsub.f32 %v2730, %v2756
    %v2777 = vmul.f32 %v2775, 1.442695
    %v2778 = vpow.pop %v2777
    %v2779 = vmul.f32 %v2776, 1.442695
    %v2780 = vpow.pop %v2779
    %v2781 = vsub.f32 %v2747, %v2755
    %v2782 = vsub.f32 %v2748, %v2756
    %v2783 = vmul.f32 %v2781, 1.442695
    %v2784 = vpow.pop %v2783
    %v2785 = vmul.f32 %v2782, 1.442695
    %v2786 = vpow.pop %v2785
    %v2787 = vadd.f32 %v2760, %v2766
    %v2788 = vadd.f32 %v2762, %v2768
    %v2789 = vadd.f32 %v2787, %v2772
    %v2790 = vadd.f32 %v2788, %v2774
    %v2791 = vadd.f32 %v2789, %v2778
    %v2792 = vadd.f32 %v2790, %v2780
    %v2793 = vadd.f32 %v2791, %v2784
    %v2794 = vadd.f32 %v2792, %v2786
    %v2795 = vrcp.pop %v2793
    %v2796 = vrcp.pop %v2794
    %v2797 = vmul.f32 %v2760, %v2795
    %v2798 = vmul.f32 %v2762, %v2796
    %v2799 = vmul.f32 %v2766, %v2795
    %v2800 = vmul.f32 %v2768, %v2796
    %v2801 = vmul.f32 %v2772, %v2795
    %v2802 = vmul.f32 %v2774, %v2796
    %v2803 = vmul.f32 %v2778, %v2795
    %v2804 = vmul.f32 %v2780, %v2796
    %v2805 = vmul.f32 %v2784, %v2795
    %v2806 = vmul.f32 %v2786, %v2796
    %v2807 = vmul.f32 %v2450, %v2661
    %v2808 = vmul.f32 %v2451, %v2663
    %v2809 = vsel %vm2668, %v2807, 0.0
    %2810 = vadd.xlane.f32.xlu0 %v2809
    %v2811 = vpop.xlane.xlu0 %2810
    %v2812 = vsel %vm2668, %v2808, 0.0
    %2813 = vadd.xlane.f32.xlu0 %v2812
    %v2814 = vpop.xlane.xlu0 %2813
    %v2815 = vmul.f32 %v2811, 0.25
    %v2816 = vmul.f32 %v2814, 0.25
    %v2817 = vmul.f32 %v2450, %v2680
    %v2818 = vmul.f32 %v2451, %v2682
    %v2819 = vsel %vm2668, %v2817, 0.0
    %2820 = vadd.xlane.f32.xlu0 %v2819
    %v2821 = vpop.xlane.xlu0 %2820
    %v2822 = vsel %vm2668, %v2818, 0.0
    %2823 = vadd.xlane.f32.xlu0 %v2822
    %v2824 = vpop.xlane.xlu0 %2823
    %v2825 = vmul.f32 %v2821, 0.25
    %v2826 = vmul.f32 %v2824, 0.25
    %v2827 = vmul.f32 %v2450, %v2698
    %v2828 = vmul.f32 %v2451, %v2700
    %v2829 = vsel %vm2668, %v2827, 0.0
    %2830 = vadd.xlane.f32.xlu0 %v2829
    %v2831 = vpop.xlane.xlu0 %2830
    %v2832 = vsel %vm2668, %v2828, 0.0
    %2833 = vadd.xlane.f32.xlu0 %v2832
    %v2834 = vpop.xlane.xlu0 %2833
    %v2835 = vmul.f32 %v2831, 0.25
    %v2836 = vmul.f32 %v2834, 0.25
    %v2837 = vmul.f32 %v2450, %v2716
    %v2838 = vmul.f32 %v2451, %v2718
    %v2839 = vsel %vm2668, %v2837, 0.0
    %2840 = vadd.xlane.f32.xlu0 %v2839
    %v2841 = vpop.xlane.xlu0 %2840
    %v2842 = vsel %vm2668, %v2838, 0.0
    %2843 = vadd.xlane.f32.xlu0 %v2842
    %v2844 = vpop.xlane.xlu0 %2843
    %v2845 = vmul.f32 %v2841, 0.25
    %v2846 = vmul.f32 %v2844, 0.25
    %v2847 = vmul.f32 %v2450, %v2734
    %v2848 = vmul.f32 %v2451, %v2736
    %v2849 = vsel %vm2668, %v2847, 0.0
    %2850 = vadd.xlane.f32.xlu0 %v2849
    %v2851 = vpop.xlane.xlu0 %2850
    %v2852 = vsel %vm2668, %v2848, 0.0
    %2853 = vadd.xlane.f32.xlu0 %v2852
    %v2854 = vpop.xlane.xlu0 %2853
    %v2855 = vmul.f32 %v2851, 0.25
    %v2856 = vmul.f32 %v2854, 0.25
    %v2857 = vmax.f32 %v2815, %v2825
    %v2858 = vmax.f32 %v2816, %v2826
    %v2859 = vmax.f32 %v2857, %v2835
    %v2860 = vmax.f32 %v2858, %v2836
    %v2861 = vmax.f32 %v2859, %v2845
    %v2862 = vmax.f32 %v2860, %v2846
    %v2863 = vmax.f32 %v2861, %v2855
    %v2864 = vmax.f32 %v2862, %v2856
    %v2865 = vsub.f32 %v2815, %v2863
    %v2866 = vsub.f32 %v2816, %v2864
    %v2867 = vmul.f32 %v2865, 1.442695
    %v2868 = vpow.pop %v2867
    %v2869 = vmul.f32 %v2866, 1.442695
    %v2870 = vpow.pop %v2869
    %v2871 = vsub.f32 %v2825, %v2863
    %v2872 = vsub.f32 %v2826, %v2864
    %v2873 = vmul.f32 %v2871, 1.442695
    %v2874 = vpow.pop %v2873
    %v2875 = vmul.f32 %v2872, 1.442695
    %v2876 = vpow.pop %v2875
    %v2877 = vsub.f32 %v2835, %v2863
    %v2878 = vsub.f32 %v2836, %v2864
    %v2879 = vmul.f32 %v2877, 1.442695
    %v2880 = vpow.pop %v2879
    %v2881 = vmul.f32 %v2878, 1.442695
    %v2882 = vpow.pop %v2881
    %v2883 = vsub.f32 %v2845, %v2863
    %v2884 = vsub.f32 %v2846, %v2864
    %v2885 = vmul.f32 %v2883, 1.442695
    %v2886 = vpow.pop %v2885
    %v2887 = vmul.f32 %v2884, 1.442695
    %v2888 = vpow.pop %v2887
    %v2889 = vsub.f32 %v2855, %v2863
    %v2890 = vsub.f32 %v2856, %v2864
    %v2891 = vmul.f32 %v2889, 1.442695
    %v2892 = vpow.pop %v2891
    %v2893 = vmul.f32 %v2890, 1.442695
    %v2894 = vpow.pop %v2893
    %v2895 = vadd.f32 %v2868, %v2874
    %v2896 = vadd.f32 %v2870, %v2876
    %v2897 = vadd.f32 %v2895, %v2880
    %v2898 = vadd.f32 %v2896, %v2882
    %v2899 = vadd.f32 %v2897, %v2886
    %v2900 = vadd.f32 %v2898, %v2888
    %v2901 = vadd.f32 %v2899, %v2892
    %v2902 = vadd.f32 %v2900, %v2894
    %v2903 = vrcp.pop %v2901
    %v2904 = vrcp.pop %v2902
    %v2905 = vmul.f32 %v2868, %v2903
    %v2906 = vmul.f32 %v2870, %v2904
    %v2907 = vmul.f32 %v2874, %v2903
    %v2908 = vmul.f32 %v2876, %v2904
    %v2909 = vmul.f32 %v2880, %v2903
    %v2910 = vmul.f32 %v2882, %v2904
    %v2911 = vmul.f32 %v2886, %v2903
    %v2912 = vmul.f32 %v2888, %v2904
    %v2913 = vmul.f32 %v2892, %v2903
    %v2914 = vmul.f32 %v2894, %v2904
    %v2915 = vadd.f32 %v2797, %v2905
    %v2916 = vadd.f32 %v2798, %v2906
    %v2917 = vadd.f32 %v2799, %v2907
    %v2918 = vadd.f32 %v2800, %v2908
    %v2919 = vadd.f32 %v2801, %v2909
    %v2920 = vadd.f32 %v2802, %v2910
    %v2921 = vadd.f32 %v2803, %v2911
    %v2922 = vadd.f32 %v2804, %v2912
    %v2923 = vadd.f32 %v2805, %v2913
    %v2924 = vadd.f32 %v2806, %v2914
    %v2925 = vmul.f32 %v2452, %v2661
    %v2926 = vmul.f32 %v2453, %v2663
    %v2927 = vsel %vm2668, %v2925, 0.0
    %2928 = vadd.xlane.f32.xlu0 %v2927
    %v2929 = vpop.xlane.xlu0 %2928
    %v2930 = vsel %vm2668, %v2926, 0.0
    %2931 = vadd.xlane.f32.xlu0 %v2930
    %v2932 = vpop.xlane.xlu0 %2931
    %v2933 = vmul.f32 %v2929, 0.25
    %v2934 = vmul.f32 %v2932, 0.25
    %v2935 = vmul.f32 %v2452, %v2680
    %v2936 = vmul.f32 %v2453, %v2682
    %v2937 = vsel %vm2668, %v2935, 0.0
    %2938 = vadd.xlane.f32.xlu0 %v2937
    %v2939 = vpop.xlane.xlu0 %2938
    %v2940 = vsel %vm2668, %v2936, 0.0
    %2941 = vadd.xlane.f32.xlu0 %v2940
    %v2942 = vpop.xlane.xlu0 %2941
    %v2943 = vmul.f32 %v2939, 0.25
    %v2944 = vmul.f32 %v2942, 0.25
    %v2945 = vmul.f32 %v2452, %v2698
    %v2946 = vmul.f32 %v2453, %v2700
    %v2947 = vsel %vm2668, %v2945, 0.0
    %2948 = vadd.xlane.f32.xlu0 %v2947
    %v2949 = vpop.xlane.xlu0 %2948
    %v2950 = vsel %vm2668, %v2946, 0.0
    %2951 = vadd.xlane.f32.xlu0 %v2950
    %v2952 = vpop.xlane.xlu0 %2951
    %v2953 = vmul.f32 %v2949, 0.25
    %v2954 = vmul.f32 %v2952, 0.25
    %v2955 = vmul.f32 %v2452, %v2716
    %v2956 = vmul.f32 %v2453, %v2718
    %v2957 = vsel %vm2668, %v2955, 0.0
    %2958 = vadd.xlane.f32.xlu0 %v2957
    %v2959 = vpop.xlane.xlu0 %2958
    %v2960 = vsel %vm2668, %v2956, 0.0
    %2961 = vadd.xlane.f32.xlu0 %v2960
    %v2962 = vpop.xlane.xlu0 %2961
    %v2963 = vmul.f32 %v2959, 0.25
    %v2964 = vmul.f32 %v2962, 0.25
    %v2965 = vmul.f32 %v2452, %v2734
    %v2966 = vmul.f32 %v2453, %v2736
    %v2967 = vsel %vm2668, %v2965, 0.0
    %2968 = vadd.xlane.f32.xlu0 %v2967
    %v2969 = vpop.xlane.xlu0 %2968
    %v2970 = vsel %vm2668, %v2966, 0.0
    %2971 = vadd.xlane.f32.xlu0 %v2970
    %v2972 = vpop.xlane.xlu0 %2971
    %v2973 = vmul.f32 %v2969, 0.25
    %v2974 = vmul.f32 %v2972, 0.25
    %v2975 = vmax.f32 %v2933, %v2943
    %v2976 = vmax.f32 %v2934, %v2944
    %v2977 = vmax.f32 %v2975, %v2953
    %v2978 = vmax.f32 %v2976, %v2954
    %v2979 = vmax.f32 %v2977, %v2963
    %v2980 = vmax.f32 %v2978, %v2964
    %v2981 = vmax.f32 %v2979, %v2973
    %v2982 = vmax.f32 %v2980, %v2974
    %v2983 = vsub.f32 %v2933, %v2981
    %v2984 = vsub.f32 %v2934, %v2982
    %v2985 = vmul.f32 %v2983, 1.442695
    %v2986 = vpow.pop %v2985
    %v2987 = vmul.f32 %v2984, 1.442695
    %v2988 = vpow.pop %v2987
    %v2989 = vsub.f32 %v2943, %v2981
    %v2990 = vsub.f32 %v2944, %v2982
    %v2991 = vmul.f32 %v2989, 1.442695
    %v2992 = vpow.pop %v2991
    %v2993 = vmul.f32 %v2990, 1.442695
    %v2994 = vpow.pop %v2993
    %v2995 = vsub.f32 %v2953, %v2981
    %v2996 = vsub.f32 %v2954, %v2982
    %v2997 = vmul.f32 %v2995, 1.442695
    %v2998 = vpow.pop %v2997
    %v2999 = vmul.f32 %v2996, 1.442695
    %v3000 = vpow.pop %v2999
    %v3001 = vsub.f32 %v2963, %v2981
    %v3002 = vsub.f32 %v2964, %v2982
    %v3003 = vmul.f32 %v3001, 1.442695
    %v3004 = vpow.pop %v3003
    %v3005 = vmul.f32 %v3002, 1.442695
    %v3006 = vpow.pop %v3005
    %v3007 = vsub.f32 %v2973, %v2981
    %v3008 = vsub.f32 %v2974, %v2982
    %v3009 = vmul.f32 %v3007, 1.442695
    %v3010 = vpow.pop %v3009
    %v3011 = vmul.f32 %v3008, 1.442695
    %v3012 = vpow.pop %v3011
    %v3013 = vadd.f32 %v2986, %v2992
    %v3014 = vadd.f32 %v2988, %v2994
    %v3015 = vadd.f32 %v3013, %v2998
    %v3016 = vadd.f32 %v3014, %v3000
    %v3017 = vadd.f32 %v3015, %v3004
    %v3018 = vadd.f32 %v3016, %v3006
    %v3019 = vadd.f32 %v3017, %v3010
    %v3020 = vadd.f32 %v3018, %v3012
    %v3021 = vrcp.pop %v3019
    %v3022 = vrcp.pop %v3020
    %v3023 = vmul.f32 %v2986, %v3021
    %v3024 = vmul.f32 %v2988, %v3022
    %v3025 = vmul.f32 %v2992, %v3021
    %v3026 = vmul.f32 %v2994, %v3022
    %v3027 = vmul.f32 %v2998, %v3021
    %v3028 = vmul.f32 %v3000, %v3022
    %v3029 = vmul.f32 %v3004, %v3021
    %v3030 = vmul.f32 %v3006, %v3022
    %v3031 = vmul.f32 %v3010, %v3021
    %v3032 = vmul.f32 %v3012, %v3022
    %v3033 = vadd.f32 %v2915, %v3023
    %v3034 = vadd.f32 %v2916, %v3024
    %v3035 = vadd.f32 %v2917, %v3025
    %v3036 = vadd.f32 %v2918, %v3026
    %v3037 = vadd.f32 %v2919, %v3027
    %v3038 = vadd.f32 %v2920, %v3028
    %v3039 = vadd.f32 %v2921, %v3029
    %v3040 = vadd.f32 %v2922, %v3030
    %v3041 = vadd.f32 %v2923, %v3031
    %v3042 = vadd.f32 %v2924, %v3032
    %v3043 = vmul.f32 %v2454, %v2661
    %v3044 = vmul.f32 %v2455, %v2663
    %v3045 = vsel %vm2668, %v3043, 0.0
    %3046 = vadd.xlane.f32.xlu0 %v3045
    %v3047 = vpop.xlane.xlu0 %3046
    %v3048 = vsel %vm2668, %v3044, 0.0
    %3049 = vadd.xlane.f32.xlu0 %v3048
    %v3050 = vpop.xlane.xlu0 %3049
    %v3051 = vmul.f32 %v3047, 0.25
    %v3052 = vmul.f32 %v3050, 0.25
    %v3053 = vmul.f32 %v2454, %v2680
    %v3054 = vmul.f32 %v2455, %v2682
    %v3055 = vsel %vm2668, %v3053, 0.0
    %3056 = vadd.xlane.f32.xlu0 %v3055
    %v3057 = vpop.xlane.xlu0 %3056
    %v3058 = vsel %vm2668, %v3054, 0.0
    %3059 = vadd.xlane.f32.xlu0 %v3058
    %v3060 = vpop.xlane.xlu0 %3059
    %v3061 = vmul.f32 %v3057, 0.25
    %v3062 = vmul.f32 %v3060, 0.25
    %v3063 = vmul.f32 %v2454, %v2698
    %v3064 = vmul.f32 %v2455, %v2700
    %v3065 = vsel %vm2668, %v3063, 0.0
    %3066 = vadd.xlane.f32.xlu0 %v3065
    %v3067 = vpop.xlane.xlu0 %3066
    %v3068 = vsel %vm2668, %v3064, 0.0
    %3069 = vadd.xlane.f32.xlu0 %v3068
    %v3070 = vpop.xlane.xlu0 %3069
    %v3071 = vmul.f32 %v3067, 0.25
    %v3072 = vmul.f32 %v3070, 0.25
    %v3073 = vmul.f32 %v2454, %v2716
    %v3074 = vmul.f32 %v2455, %v2718
    %v3075 = vsel %vm2668, %v3073, 0.0
    %3076 = vadd.xlane.f32.xlu0 %v3075
    %v3077 = vpop.xlane.xlu0 %3076
    %v3078 = vsel %vm2668, %v3074, 0.0
    %3079 = vadd.xlane.f32.xlu0 %v3078
    %v3080 = vpop.xlane.xlu0 %3079
    %v3081 = vmul.f32 %v3077, 0.25
    %v3082 = vmul.f32 %v3080, 0.25
    %v3083 = vmul.f32 %v2454, %v2734
    %v3084 = vmul.f32 %v2455, %v2736
    %v3085 = vsel %vm2668, %v3083, 0.0
    %3086 = vadd.xlane.f32.xlu0 %v3085
    %v3087 = vpop.xlane.xlu0 %3086
    %v3088 = vsel %vm2668, %v3084, 0.0
    %3089 = vadd.xlane.f32.xlu0 %v3088
    %v3090 = vpop.xlane.xlu0 %3089
    %v3091 = vmul.f32 %v3087, 0.25
    %v3092 = vmul.f32 %v3090, 0.25
    %v3093 = vmax.f32 %v3051, %v3061
    %v3094 = vmax.f32 %v3052, %v3062
    %v3095 = vmax.f32 %v3093, %v3071
    %v3096 = vmax.f32 %v3094, %v3072
    %v3097 = vmax.f32 %v3095, %v3081
    %v3098 = vmax.f32 %v3096, %v3082
    %v3099 = vmax.f32 %v3097, %v3091
    %v3100 = vmax.f32 %v3098, %v3092
    %v3101 = vsub.f32 %v3051, %v3099
    %v3102 = vsub.f32 %v3052, %v3100
    %v3103 = vmul.f32 %v3101, 1.442695
    %v3104 = vpow.pop %v3103
    %v3105 = vmul.f32 %v3102, 1.442695
    %v3106 = vpow.pop %v3105
    %v3107 = vsub.f32 %v3061, %v3099
    %v3108 = vsub.f32 %v3062, %v3100
    %v3109 = vmul.f32 %v3107, 1.442695
    %v3110 = vpow.pop %v3109
    %v3111 = vmul.f32 %v3108, 1.442695
    %v3112 = vpow.pop %v3111
    %v3113 = vsub.f32 %v3071, %v3099
    %v3114 = vsub.f32 %v3072, %v3100
    %v3115 = vmul.f32 %v3113, 1.442695
    %v3116 = vpow.pop %v3115
    %v3117 = vmul.f32 %v3114, 1.442695
    %v3118 = vpow.pop %v3117
    %v3119 = vsub.f32 %v3081, %v3099
    %v3120 = vsub.f32 %v3082, %v3100
    %v3121 = vmul.f32 %v3119, 1.442695
    %v3122 = vpow.pop %v3121
    %v3123 = vmul.f32 %v3120, 1.442695
    %v3124 = vpow.pop %v3123
    %v3125 = vsub.f32 %v3091, %v3099
    %v3126 = vsub.f32 %v3092, %v3100
    %v3127 = vmul.f32 %v3125, 1.442695
    %v3128 = vpow.pop %v3127
    %v3129 = vmul.f32 %v3126, 1.442695
    %v3130 = vpow.pop %v3129
    %v3131 = vadd.f32 %v3104, %v3110
    %v3132 = vadd.f32 %v3106, %v3112
    %v3133 = vadd.f32 %v3131, %v3116
    %v3134 = vadd.f32 %v3132, %v3118
    %v3135 = vadd.f32 %v3133, %v3122
    %v3136 = vadd.f32 %v3134, %v3124
    %v3137 = vadd.f32 %v3135, %v3128
    %v3138 = vadd.f32 %v3136, %v3130
    %v3139 = vrcp.pop %v3137
    %v3140 = vrcp.pop %v3138
    %v3141 = vmul.f32 %v3104, %v3139
    %v3142 = vmul.f32 %v3106, %v3140
    %v3143 = vmul.f32 %v3110, %v3139
    %v3144 = vmul.f32 %v3112, %v3140
    %v3145 = vmul.f32 %v3116, %v3139
    %v3146 = vmul.f32 %v3118, %v3140
    %v3147 = vmul.f32 %v3122, %v3139
    %v3148 = vmul.f32 %v3124, %v3140
    %v3149 = vmul.f32 %v3128, %v3139
    %v3150 = vmul.f32 %v3130, %v3140
    %v3151 = vadd.f32 %v3033, %v3141
    %v3152 = vadd.f32 %v3034, %v3142
    %v3153 = vadd.f32 %v3035, %v3143
    %v3154 = vadd.f32 %v3036, %v3144
    %v3155 = vadd.f32 %v3037, %v3145
    %v3156 = vadd.f32 %v3038, %v3146
    %v3157 = vadd.f32 %v3039, %v3147
    %v3158 = vadd.f32 %v3040, %v3148
    %v3159 = vadd.f32 %v3041, %v3149
    %v3160 = vadd.f32 %v3042, %v3150
    %v3161 = vmul.f32 %v2456, %v2661
    %v3162 = vmul.f32 %v2457, %v2663
    %v3163 = vsel %vm2668, %v3161, 0.0
    %3164 = vadd.xlane.f32.xlu0 %v3163
    %v3165 = vpop.xlane.xlu0 %3164
    %v3166 = vsel %vm2668, %v3162, 0.0
    %3167 = vadd.xlane.f32.xlu0 %v3166
    %v3168 = vpop.xlane.xlu0 %3167
    %v3169 = vmul.f32 %v3165, 0.25
    %v3170 = vmul.f32 %v3168, 0.25
    %v3171 = vmul.f32 %v2456, %v2680
    %v3172 = vmul.f32 %v2457, %v2682
    %v3173 = vsel %vm2668, %v3171, 0.0
    %3174 = vadd.xlane.f32.xlu0 %v3173
    %v3175 = vpop.xlane.xlu0 %3174
    %v3176 = vsel %vm2668, %v3172, 0.0
    %3177 = vadd.xlane.f32.xlu0 %v3176
    %v3178 = vpop.xlane.xlu0 %3177
    %v3179 = vmul.f32 %v3175, 0.25
    %v3180 = vmul.f32 %v3178, 0.25
    %v3181 = vmul.f32 %v2456, %v2698
    %v3182 = vmul.f32 %v2457, %v2700
    %v3183 = vsel %vm2668, %v3181, 0.0
    %3184 = vadd.xlane.f32.xlu0 %v3183
    %v3185 = vpop.xlane.xlu0 %3184
    %v3186 = vsel %vm2668, %v3182, 0.0
    %3187 = vadd.xlane.f32.xlu0 %v3186
    %v3188 = vpop.xlane.xlu0 %3187
    %v3189 = vmul.f32 %v3185, 0.25
    %v3190 = vmul.f32 %v3188, 0.25
    %v3191 = vmul.f32 %v2456, %v2716
    %v3192 = vmul.f32 %v2457, %v2718
    %v3193 = vsel %vm2668, %v3191, 0.0
    %3194 = vadd.xlane.f32.xlu0 %v3193
    %v3195 = vpop.xlane.xlu0 %3194
    %v3196 = vsel %vm2668, %v3192, 0.0
    %3197 = vadd.xlane.f32.xlu0 %v3196
    %v3198 = vpop.xlane.xlu0 %3197
    %v3199 = vmul.f32 %v3195, 0.25
    %v3200 = vmul.f32 %v3198, 0.25
    %v3201 = vmul.f32 %v2456, %v2734
    %v3202 = vmul.f32 %v2457, %v2736
    %v3203 = vsel %vm2668, %v3201, 0.0
    %3204 = vadd.xlane.f32.xlu0 %v3203
    %v3205 = vpop.xlane.xlu0 %3204
    %v3206 = vsel %vm2668, %v3202, 0.0
    %3207 = vadd.xlane.f32.xlu0 %v3206
    %v3208 = vpop.xlane.xlu0 %3207
    %v3209 = vmul.f32 %v3205, 0.25
    %v3210 = vmul.f32 %v3208, 0.25
    %v3211 = vmax.f32 %v3169, %v3179
    %v3212 = vmax.f32 %v3170, %v3180
    %v3213 = vmax.f32 %v3211, %v3189
    %v3214 = vmax.f32 %v3212, %v3190
    %v3215 = vmax.f32 %v3213, %v3199
    %v3216 = vmax.f32 %v3214, %v3200
    %v3217 = vmax.f32 %v3215, %v3209
    %v3218 = vmax.f32 %v3216, %v3210
    %v3219 = vsub.f32 %v3169, %v3217
    %v3220 = vsub.f32 %v3170, %v3218
    %v3221 = vmul.f32 %v3219, 1.442695
    %v3222 = vpow.pop %v3221
    %v3223 = vmul.f32 %v3220, 1.442695
    %v3224 = vpow.pop %v3223
    %v3225 = vsub.f32 %v3179, %v3217
    %v3226 = vsub.f32 %v3180, %v3218
    %v3227 = vmul.f32 %v3225, 1.442695
    %v3228 = vpow.pop %v3227
    %v3229 = vmul.f32 %v3226, 1.442695
    %v3230 = vpow.pop %v3229
    %v3231 = vsub.f32 %v3189, %v3217
    %v3232 = vsub.f32 %v3190, %v3218
    %v3233 = vmul.f32 %v3231, 1.442695
    %v3234 = vpow.pop %v3233
    %v3235 = vmul.f32 %v3232, 1.442695
    %v3236 = vpow.pop %v3235
    %v3237 = vsub.f32 %v3199, %v3217
    %v3238 = vsub.f32 %v3200, %v3218
    %v3239 = vmul.f32 %v3237, 1.442695
    %v3240 = vpow.pop %v3239
    %v3241 = vmul.f32 %v3238, 1.442695
    %v3242 = vpow.pop %v3241
    %v3243 = vsub.f32 %v3209, %v3217
    %v3244 = vsub.f32 %v3210, %v3218
    %v3245 = vmul.f32 %v3243, 1.442695
    %v3246 = vpow.pop %v3245
    %v3247 = vmul.f32 %v3244, 1.442695
    %v3248 = vpow.pop %v3247
    %v3249 = vadd.f32 %v3222, %v3228
    %v3250 = vadd.f32 %v3224, %v3230
    %v3251 = vadd.f32 %v3249, %v3234
    %v3252 = vadd.f32 %v3250, %v3236
    %v3253 = vadd.f32 %v3251, %v3240
    %v3254 = vadd.f32 %v3252, %v3242
    %v3255 = vadd.f32 %v3253, %v3246
    %v3256 = vadd.f32 %v3254, %v3248
    %v3257 = vrcp.pop %v3255
    %v3258 = vrcp.pop %v3256
    %v3259 = vmul.f32 %v3222, %v3257
    %v3260 = vmul.f32 %v3224, %v3258
    %v3261 = vmul.f32 %v3228, %v3257
    %v3262 = vmul.f32 %v3230, %v3258
    %v3263 = vmul.f32 %v3234, %v3257
    %v3264 = vmul.f32 %v3236, %v3258
    %v3265 = vmul.f32 %v3240, %v3257
    %v3266 = vmul.f32 %v3242, %v3258
    %v3267 = vmul.f32 %v3246, %v3257
    %v3268 = vmul.f32 %v3248, %v3258
    %v3269 = vadd.f32 %v3151, %v3259
    %v3270 = vadd.f32 %v3152, %v3260
    %v3271 = vadd.f32 %v3153, %v3261
    %v3272 = vadd.f32 %v3154, %v3262
    %v3273 = vadd.f32 %v3155, %v3263
    %v3274 = vadd.f32 %v3156, %v3264
    %v3275 = vadd.f32 %v3157, %v3265
    %v3276 = vadd.f32 %v3158, %v3266
    %v3277 = vadd.f32 %v3159, %v3267
    %v3278 = vadd.f32 %v3160, %v3268
    %v3279 = vmul.f32 %v3269, 0.2
    %v3280 = vmul.f32 %v3270, 0.2
    %v3281 = vmul.f32 %v3279, %v197
    %v3282 = vmul.f32 %v3280, %v200
    %v3283 = vmul.f32 %v3271, 0.2
    %v3284 = vmul.f32 %v3272, 0.2
    %v3285 = vmul.f32 %v3283, %v205
    %v3286 = vmul.f32 %v3284, %v208
    %v3287 = vadd.f32 %v3281, %v3285
    %v3288 = vadd.f32 %v3282, %v3286
    %v3289 = vmul.f32 %v3273, 0.2
    %v3290 = vmul.f32 %v3274, 0.2
    %v3291 = vmul.f32 %v3289, %v213
    %v3292 = vmul.f32 %v3290, %v216
    %v3293 = vadd.f32 %v3287, %v3291
    %v3294 = vadd.f32 %v3288, %v3292
    %v3295 = vmul.f32 %v3275, 0.2
    %v3296 = vmul.f32 %v3276, 0.2
    %v3297 = vmul.f32 %v3295, %v221
    %v3298 = vmul.f32 %v3296, %v224
    %v3299 = vadd.f32 %v3293, %v3297
    %v3300 = vadd.f32 %v3294, %v3298
    %v3301 = vmul.f32 %v3277, 0.2
    %v3302 = vmul.f32 %v3278, 0.2
    %v3303 = vmul.f32 %v3301, %v229
    %v3304 = vmul.f32 %v3302, %v232
    %v3305 = vadd.f32 %v3299, %v3303
    %v3306 = vadd.f32 %v3300, %v3304
    %3307 = vrot.lane.b32.xlu0 %v2305, 108
    %v3308 = vpop.permute.xlu0 %3307
    %3309 = vrot.lane.b32.xlu0 %v2306, 108
    %v3310 = vpop.permute.xlu0 %3309
    %3311 = vrot.lane.b32.xlu0 %v2307, 108
    %v3312 = vpop.permute.xlu0 %3311
    %3313 = vrot.lane.b32.xlu0 %v2308, 108
    %v3314 = vpop.permute.xlu0 %3313
    %3315 = vrot.lane.b32.xlu0 %v2309, 108
    %v3316 = vpop.permute.xlu0 %3315
    %3317 = vrot.lane.b32.xlu0 %v2310, 108
    %v3318 = vpop.permute.xlu0 %3317
    %3319 = vrot.lane.b32.xlu0 %v2311, 108
    %v3320 = vpop.permute.xlu0 %3319
    %3321 = vrot.lane.b32.xlu0 %v2312, 108
    %v3322 = vpop.permute.xlu0 %3321
    %3323 = vrot.lane.b32.xlu0 %v2313, 108
    %v3324 = vpop.permute.xlu0 %3323
    %3325 = vrot.lane.b32.xlu0 %v2314, 108
    %v3326 = vpop.permute.xlu0 %3325
    %3337 = vrot.lane.b32.xlu0 %v197, 116
    %v3338 = vpop.permute.xlu0 %3337
    %3339 = vrot.lane.b32.xlu0 %v200, 116
    %v3340 = vpop.permute.xlu0 %3339
    %3341 = vrot.lane.b32.xlu0 %v205, 116
    %v3342 = vpop.permute.xlu0 %3341
    %3343 = vrot.lane.b32.xlu0 %v208, 116
    %v3344 = vpop.permute.xlu0 %3343
    %3345 = vrot.lane.b32.xlu0 %v213, 116
    %v3346 = vpop.permute.xlu0 %3345
    %3347 = vrot.lane.b32.xlu0 %v216, 116
    %v3348 = vpop.permute.xlu0 %3347
    %3349 = vrot.lane.b32.xlu0 %v221, 116
    %v3350 = vpop.permute.xlu0 %3349
    %3351 = vrot.lane.b32.xlu0 %v224, 116
    %v3352 = vpop.permute.xlu0 %3351
    %3353 = vrot.lane.b32.xlu0 %v229, 116
    %v3354 = vpop.permute.xlu0 %3353
    %3355 = vrot.lane.b32.xlu0 %v232, 116
    %v3356 = vpop.permute.xlu0 %3355
    %v3367 = vsel %vm2395, %v3308, %v3338
    %v3368 = vsel %vm2395, %v3310, %v3340
    %v3369 = vsel %vm2395, %v3312, %v3342
    %v3370 = vsel %vm2395, %v3314, %v3344
    %v3371 = vsel %vm2395, %v3316, %v3346
    %v3372 = vsel %vm2395, %v3318, %v3348
    %v3373 = vsel %vm2395, %v3320, %v3350
    %v3374 = vsel %vm2395, %v3322, %v3352
    %v3375 = vsel %vm2395, %v3324, %v3354
    %v3376 = vsel %vm2395, %v3326, %v3356
    %v3377 = vsel %vm2406, %v3367, %v3308
    %v3378 = vsel %vm2406, %v3368, %v3310
    %v3379 = vsel %vm2406, %v3369, %v3312
    %v3380 = vsel %vm2406, %v3370, %v3314
    %v3381 = vsel %vm2406, %v3371, %v3316
    %v3382 = vsel %vm2406, %v3372, %v3318
    %v3383 = vsel %vm2406, %v3373, %v3320
    %v3384 = vsel %vm2406, %v3374, %v3322
    %v3385 = vsel %vm2406, %v3375, %v3324
    %v3386 = vsel %vm2406, %v3376, %v3326
    %v3387 = vsel %vm2417, %v3377, %v3338
    %v3388 = vsel %vm2417, %v3378, %v3340
    %v3389 = vsel %vm2417, %v3379, %v3342
    %v3390 = vsel %vm2417, %v3380, %v3344
    %v3391 = vsel %vm2417, %v3381, %v3346
    %v3392 = vsel %vm2417, %v3382, %v3348
    %v3393 = vsel %vm2417, %v3383, %v3350
    %v3394 = vsel %vm2417, %v3384, %v3352
    %v3395 = vsel %vm2417, %v3385, %v3354
    %v3396 = vsel %vm2417, %v3386, %v3356
    %3397 = vrot.lane.b32.xlu0 %v337, 16
    %v3398 = vpop.permute.xlu0 %3397
    %3399 = vrot.lane.b32.xlu0 %v440, 16
    %v3400 = vpop.permute.xlu0 %3399
    %3401 = vrot.lane.b32.xlu0 %v543, 16
    %v3402 = vpop.permute.xlu0 %3401
    %3403 = vrot.lane.b32.xlu0 %v646, 16
    %v3404 = vpop.permute.xlu0 %3403
    %3405 = vrot.lane.b32.xlu0 %v749, 16
    %v3406 = vpop.permute.xlu0 %3405
    %3407 = vrot.lane.b32.xlu0 %v852, 16
    %v3408 = vpop.permute.xlu0 %3407
    %3409 = vrot.lane.b32.xlu0 %v955, 16
    %v3410 = vpop.permute.xlu0 %3409
    %3411 = vrot.lane.b32.xlu0 %v1058, 16
    %v3412 = vpop.permute.xlu0 %3411
    %3413 = vrot.lane.b32.xlu0 %v1161, 16
    %v3414 = vpop.permute.xlu0 %3413
    %3415 = vrot.lane.b32.xlu0 %v1264, 16
    %v3416 = vpop.permute.xlu0 %3415
    %v3427 = vmul.f32 %v197, %v3398
    %v3428 = vmul.f32 %v200, %v3400
    %v3429 = vmul.f32 %v205, %v3402
    %v3430 = vmul.f32 %v208, %v3404
    %v3431 = vmul.f32 %v213, %v3406
    %v3432 = vmul.f32 %v216, %v3408
    %v3433 = vmul.f32 %v221, %v3410
    %v3434 = vmul.f32 %v224, %v3412
    %v3435 = vmul.f32 %v229, %v3414
    %v3436 = vmul.f32 %v232, %v3416
    %v3437 = vmul.f32 %v3387, %v1368
    %v3438 = vmul.f32 %v3388, %v1472
    %v3439 = vmul.f32 %v3389, %v1576
    %v3440 = vmul.f32 %v3390, %v1680
    %v3441 = vmul.f32 %v3391, %v1784
    %v3442 = vmul.f32 %v3392, %v1888
    %v3443 = vmul.f32 %v3393, %v1992
    %v3444 = vmul.f32 %v3394, %v2096
    %v3445 = vmul.f32 %v3395, %v2200
    %v3446 = vmul.f32 %v3396, %v2304
    %3457 = vrot.lane.b32.xlu0 %v3437, 16
    %v3458 = vpop.permute.xlu0 %3457
    %3459 = vrot.lane.b32.xlu0 %v3438, 16
    %v3460 = vpop.permute.xlu0 %3459
    %3461 = vrot.lane.b32.xlu0 %v3439, 16
    %v3462 = vpop.permute.xlu0 %3461
    %3463 = vrot.lane.b32.xlu0 %v3440, 16
    %v3464 = vpop.permute.xlu0 %3463
    %3465 = vrot.lane.b32.xlu0 %v3441, 16
    %v3466 = vpop.permute.xlu0 %3465
    %3467 = vrot.lane.b32.xlu0 %v3442, 16
    %v3468 = vpop.permute.xlu0 %3467
    %3469 = vrot.lane.b32.xlu0 %v3443, 16
    %v3470 = vpop.permute.xlu0 %3469
    %3471 = vrot.lane.b32.xlu0 %v3444, 16
    %v3472 = vpop.permute.xlu0 %3471
    %3473 = vrot.lane.b32.xlu0 %v3445, 16
    %v3474 = vpop.permute.xlu0 %3473
    %3475 = vrot.lane.b32.xlu0 %v3446, 16
    %v3476 = vpop.permute.xlu0 %3475
    %v3487 = vadd.f32 %v3427, %v3458
    %v3488 = vadd.f32 %v3428, %v3460
    %v3489 = vadd.f32 %v3429, %v3462
    %v3490 = vadd.f32 %v3430, %v3464
    %v3491 = vadd.f32 %v3431, %v3466
    %v3492 = vadd.f32 %v3432, %v3468
    %v3493 = vadd.f32 %v3433, %v3470
    %v3494 = vadd.f32 %v3434, %v3472
    %v3495 = vadd.f32 %v3435, %v3474
    %v3496 = vadd.f32 %v3436, %v3476
    %3497 = vrot.lane.b32.xlu0 %v2305, 76
    %v3498 = vpop.permute.xlu0 %3497
    %3499 = vrot.lane.b32.xlu0 %v2306, 76
    %v3500 = vpop.permute.xlu0 %3499
    %3501 = vrot.lane.b32.xlu0 %v2307, 76
    %v3502 = vpop.permute.xlu0 %3501
    %3503 = vrot.lane.b32.xlu0 %v2308, 76
    %v3504 = vpop.permute.xlu0 %3503
    %3505 = vrot.lane.b32.xlu0 %v2309, 76
    %v3506 = vpop.permute.xlu0 %3505
    %3507 = vrot.lane.b32.xlu0 %v2310, 76
    %v3508 = vpop.permute.xlu0 %3507
    %3509 = vrot.lane.b32.xlu0 %v2311, 76
    %v3510 = vpop.permute.xlu0 %3509
    %3511 = vrot.lane.b32.xlu0 %v2312, 76
    %v3512 = vpop.permute.xlu0 %3511
    %3513 = vrot.lane.b32.xlu0 %v2313, 76
    %v3514 = vpop.permute.xlu0 %3513
    %3515 = vrot.lane.b32.xlu0 %v2314, 76
    %v3516 = vpop.permute.xlu0 %3515
    %3527 = vrot.lane.b32.xlu0 %v197, 84
    %v3528 = vpop.permute.xlu0 %3527
    %3529 = vrot.lane.b32.xlu0 %v200, 84
    %v3530 = vpop.permute.xlu0 %3529
    %3531 = vrot.lane.b32.xlu0 %v205, 84
    %v3532 = vpop.permute.xlu0 %3531
    %3533 = vrot.lane.b32.xlu0 %v208, 84
    %v3534 = vpop.permute.xlu0 %3533
    %3535 = vrot.lane.b32.xlu0 %v213, 84
    %v3536 = vpop.permute.xlu0 %3535
    %3537 = vrot.lane.b32.xlu0 %v216, 84
    %v3538 = vpop.permute.xlu0 %3537
    %3539 = vrot.lane.b32.xlu0 %v221, 84
    %v3540 = vpop.permute.xlu0 %3539
    %3541 = vrot.lane.b32.xlu0 %v224, 84
    %v3542 = vpop.permute.xlu0 %3541
    %3543 = vrot.lane.b32.xlu0 %v229, 84
    %v3544 = vpop.permute.xlu0 %3543
    %3545 = vrot.lane.b32.xlu0 %v232, 84
    %v3546 = vpop.permute.xlu0 %3545
    %v3557 = vsel %vm2395, %v3498, %v3528
    %v3558 = vsel %vm2395, %v3500, %v3530
    %v3559 = vsel %vm2395, %v3502, %v3532
    %v3560 = vsel %vm2395, %v3504, %v3534
    %v3561 = vsel %vm2395, %v3506, %v3536
    %v3562 = vsel %vm2395, %v3508, %v3538
    %v3563 = vsel %vm2395, %v3510, %v3540
    %v3564 = vsel %vm2395, %v3512, %v3542
    %v3565 = vsel %vm2395, %v3514, %v3544
    %v3566 = vsel %vm2395, %v3516, %v3546
    %v3567 = vsel %vm2406, %v3557, %v3498
    %v3568 = vsel %vm2406, %v3558, %v3500
    %v3569 = vsel %vm2406, %v3559, %v3502
    %v3570 = vsel %vm2406, %v3560, %v3504
    %v3571 = vsel %vm2406, %v3561, %v3506
    %v3572 = vsel %vm2406, %v3562, %v3508
    %v3573 = vsel %vm2406, %v3563, %v3510
    %v3574 = vsel %vm2406, %v3564, %v3512
    %v3575 = vsel %vm2406, %v3565, %v3514
    %v3576 = vsel %vm2406, %v3566, %v3516
    %v3577 = vsel %vm2417, %v3567, %v3528
    %v3578 = vsel %vm2417, %v3568, %v3530
    %v3579 = vsel %vm2417, %v3569, %v3532
    %v3580 = vsel %vm2417, %v3570, %v3534
    %v3581 = vsel %vm2417, %v3571, %v3536
    %v3582 = vsel %vm2417, %v3572, %v3538
    %v3583 = vsel %vm2417, %v3573, %v3540
    %v3584 = vsel %vm2417, %v3574, %v3542
    %v3585 = vsel %vm2417, %v3575, %v3544
    %v3586 = vsel %vm2417, %v3576, %v3546
    %3587 = vrot.lane.b32.xlu0 %v337, 48
    %v3588 = vpop.permute.xlu0 %3587
    %3589 = vrot.lane.b32.xlu0 %v440, 48
    %v3590 = vpop.permute.xlu0 %3589
    %3591 = vrot.lane.b32.xlu0 %v543, 48
    %v3592 = vpop.permute.xlu0 %3591
    %3593 = vrot.lane.b32.xlu0 %v646, 48
    %v3594 = vpop.permute.xlu0 %3593
    %3595 = vrot.lane.b32.xlu0 %v749, 48
    %v3596 = vpop.permute.xlu0 %3595
    %3597 = vrot.lane.b32.xlu0 %v852, 48
    %v3598 = vpop.permute.xlu0 %3597
    %3599 = vrot.lane.b32.xlu0 %v955, 48
    %v3600 = vpop.permute.xlu0 %3599
    %3601 = vrot.lane.b32.xlu0 %v1058, 48
    %v3602 = vpop.permute.xlu0 %3601
    %3603 = vrot.lane.b32.xlu0 %v1161, 48
    %v3604 = vpop.permute.xlu0 %3603
    %3605 = vrot.lane.b32.xlu0 %v1264, 48
    %v3606 = vpop.permute.xlu0 %3605
    %v3617 = vmul.f32 %v197, %v3588
    %v3618 = vmul.f32 %v200, %v3590
    %v3619 = vmul.f32 %v205, %v3592
    %v3620 = vmul.f32 %v208, %v3594
    %v3621 = vmul.f32 %v213, %v3596
    %v3622 = vmul.f32 %v216, %v3598
    %v3623 = vmul.f32 %v221, %v3600
    %v3624 = vmul.f32 %v224, %v3602
    %v3625 = vmul.f32 %v229, %v3604
    %v3626 = vmul.f32 %v232, %v3606
    %v3627 = vmul.f32 %v3577, %v1368
    %v3628 = vmul.f32 %v3578, %v1472
    %v3629 = vmul.f32 %v3579, %v1576
    %v3630 = vmul.f32 %v3580, %v1680
    %v3631 = vmul.f32 %v3581, %v1784
    %v3632 = vmul.f32 %v3582, %v1888
    %v3633 = vmul.f32 %v3583, %v1992
    %v3634 = vmul.f32 %v3584, %v2096
    %v3635 = vmul.f32 %v3585, %v2200
    %v3636 = vmul.f32 %v3586, %v2304
    %3647 = vrot.lane.b32.xlu0 %v3627, 48
    %v3648 = vpop.permute.xlu0 %3647
    %3649 = vrot.lane.b32.xlu0 %v3628, 48
    %v3650 = vpop.permute.xlu0 %3649
    %3651 = vrot.lane.b32.xlu0 %v3629, 48
    %v3652 = vpop.permute.xlu0 %3651
    %3653 = vrot.lane.b32.xlu0 %v3630, 48
    %v3654 = vpop.permute.xlu0 %3653
    %3655 = vrot.lane.b32.xlu0 %v3631, 48
    %v3656 = vpop.permute.xlu0 %3655
    %3657 = vrot.lane.b32.xlu0 %v3632, 48
    %v3658 = vpop.permute.xlu0 %3657
    %3659 = vrot.lane.b32.xlu0 %v3633, 48
    %v3660 = vpop.permute.xlu0 %3659
    %3661 = vrot.lane.b32.xlu0 %v3634, 48
    %v3662 = vpop.permute.xlu0 %3661
    %3663 = vrot.lane.b32.xlu0 %v3635, 48
    %v3664 = vpop.permute.xlu0 %3663
    %3665 = vrot.lane.b32.xlu0 %v3636, 48
    %v3666 = vpop.permute.xlu0 %3665
    %v3677 = vadd.f32 %v3617, %v3648
    %v3678 = vadd.f32 %v3618, %v3650
    %v3679 = vadd.f32 %v3619, %v3652
    %v3680 = vadd.f32 %v3620, %v3654
    %v3681 = vadd.f32 %v3621, %v3656
    %v3682 = vadd.f32 %v3622, %v3658
    %v3683 = vadd.f32 %v3623, %v3660
    %v3684 = vadd.f32 %v3624, %v3662
    %v3685 = vadd.f32 %v3625, %v3664
    %v3686 = vadd.f32 %v3626, %v3666
    %3689 = vrot.lane.b32.xlu0 %v3677, 96
    %v3690 = vpop.permute.xlu0 %3689
    %3691 = vrot.lane.b32.xlu0 %v3678, 96
    %v3692 = vpop.permute.xlu0 %3691
    %v3695 = vmul.f32 %v3487, %v3690
    %v3696 = vmul.f32 %v3488, %v3692
    %3699 = vrot.lane.b32.xlu0 %v3695, 112
    %v3700 = vpop.permute.xlu0 %3699
    %3701 = vrot.lane.b32.xlu0 %v3696, 112
    %v3702 = vpop.permute.xlu0 %3701
    %v3705 = vsel %vm2668, %v3700, 0.0
    %3706 = vadd.xlane.f32.xlu0 %v3705
    %v3707 = vpop.xlane.xlu0 %3706
    %v3708 = vsel %vm2668, %v3702, 0.0
    %3709 = vadd.xlane.f32.xlu0 %v3708
    %v3710 = vpop.xlane.xlu0 %3709
    %v3711 = vmul.f32 %v3707, 0.25
    %v3712 = vmul.f32 %v3710, 0.25
    %3715 = vrot.lane.b32.xlu0 %v3679, 96
    %v3716 = vpop.permute.xlu0 %3715
    %3717 = vrot.lane.b32.xlu0 %v3680, 96
    %v3718 = vpop.permute.xlu0 %3717
    %v3721 = vmul.f32 %v3487, %v3716
    %v3722 = vmul.f32 %v3488, %v3718
    %3725 = vrot.lane.b32.xlu0 %v3721, 112
    %v3726 = vpop.permute.xlu0 %3725
    %3727 = vrot.lane.b32.xlu0 %v3722, 112
    %v3728 = vpop.permute.xlu0 %3727
    %v3731 = vsel %vm2668, %v3726, 0.0
    %3732 = vadd.xlane.f32.xlu0 %v3731
    %v3733 = vpop.xlane.xlu0 %3732
    %v3734 = vsel %vm2668, %v3728, 0.0
    %3735 = vadd.xlane.f32.xlu0 %v3734
    %v3736 = vpop.xlane.xlu0 %3735
    %v3737 = vmul.f32 %v3733, 0.25
    %v3738 = vmul.f32 %v3736, 0.25
    %3741 = vrot.lane.b32.xlu0 %v3681, 96
    %v3742 = vpop.permute.xlu0 %3741
    %3743 = vrot.lane.b32.xlu0 %v3682, 96
    %v3744 = vpop.permute.xlu0 %3743
    %v3747 = vmul.f32 %v3487, %v3742
    %v3748 = vmul.f32 %v3488, %v3744
    %3751 = vrot.lane.b32.xlu0 %v3747, 112
    %v3752 = vpop.permute.xlu0 %3751
    %3753 = vrot.lane.b32.xlu0 %v3748, 112
    %v3754 = vpop.permute.xlu0 %3753
    %v3757 = vsel %vm2668, %v3752, 0.0
    %3758 = vadd.xlane.f32.xlu0 %v3757
    %v3759 = vpop.xlane.xlu0 %3758
    %v3760 = vsel %vm2668, %v3754, 0.0
    %3761 = vadd.xlane.f32.xlu0 %v3760
    %v3762 = vpop.xlane.xlu0 %3761
    %v3763 = vmul.f32 %v3759, 0.25
    %v3764 = vmul.f32 %v3762, 0.25
    %3767 = vrot.lane.b32.xlu0 %v3683, 96
    %v3768 = vpop.permute.xlu0 %3767
    %3769 = vrot.lane.b32.xlu0 %v3684, 96
    %v3770 = vpop.permute.xlu0 %3769
    %v3773 = vmul.f32 %v3487, %v3768
    %v3774 = vmul.f32 %v3488, %v3770
    %3777 = vrot.lane.b32.xlu0 %v3773, 112
    %v3778 = vpop.permute.xlu0 %3777
    %3779 = vrot.lane.b32.xlu0 %v3774, 112
    %v3780 = vpop.permute.xlu0 %3779
    %v3783 = vsel %vm2668, %v3778, 0.0
    %3784 = vadd.xlane.f32.xlu0 %v3783
    %v3785 = vpop.xlane.xlu0 %3784
    %v3786 = vsel %vm2668, %v3780, 0.0
    %3787 = vadd.xlane.f32.xlu0 %v3786
    %v3788 = vpop.xlane.xlu0 %3787
    %v3789 = vmul.f32 %v3785, 0.25
    %v3790 = vmul.f32 %v3788, 0.25
    %3793 = vrot.lane.b32.xlu0 %v3685, 96
    %v3794 = vpop.permute.xlu0 %3793
    %3795 = vrot.lane.b32.xlu0 %v3686, 96
    %v3796 = vpop.permute.xlu0 %3795
    %v3799 = vmul.f32 %v3487, %v3794
    %v3800 = vmul.f32 %v3488, %v3796
    %3803 = vrot.lane.b32.xlu0 %v3799, 112
    %v3804 = vpop.permute.xlu0 %3803
    %3805 = vrot.lane.b32.xlu0 %v3800, 112
    %v3806 = vpop.permute.xlu0 %3805
    %v3809 = vsel %vm2668, %v3804, 0.0
    %3810 = vadd.xlane.f32.xlu0 %v3809
    %v3811 = vpop.xlane.xlu0 %3810
    %v3812 = vsel %vm2668, %v3806, 0.0
    %3813 = vadd.xlane.f32.xlu0 %v3812
    %v3814 = vpop.xlane.xlu0 %3813
    %v3815 = vmul.f32 %v3811, 0.25
    %v3816 = vmul.f32 %v3814, 0.25
    %v3817 = vmax.f32 %v3711, %v3737
    %v3818 = vmax.f32 %v3712, %v3738
    %v3819 = vmax.f32 %v3817, %v3763
    %v3820 = vmax.f32 %v3818, %v3764
    %v3821 = vmax.f32 %v3819, %v3789
    %v3822 = vmax.f32 %v3820, %v3790
    %v3823 = vmax.f32 %v3821, %v3815
    %v3824 = vmax.f32 %v3822, %v3816
    %v3825 = vsub.f32 %v3711, %v3823
    %v3826 = vsub.f32 %v3712, %v3824
    %v3827 = vmul.f32 %v3825, 1.442695
    %v3828 = vpow.pop %v3827
    %v3829 = vmul.f32 %v3826, 1.442695
    %v3830 = vpow.pop %v3829
    %v3831 = vsub.f32 %v3737, %v3823
    %v3832 = vsub.f32 %v3738, %v3824
    %v3833 = vmul.f32 %v3831, 1.442695
    %v3834 = vpow.pop %v3833
    %v3835 = vmul.f32 %v3832, 1.442695
    %v3836 = vpow.pop %v3835
    %v3837 = vsub.f32 %v3763, %v3823
    %v3838 = vsub.f32 %v3764, %v3824
    %v3839 = vmul.f32 %v3837, 1.442695
    %v3840 = vpow.pop %v3839
    %v3841 = vmul.f32 %v3838, 1.442695
    %v3842 = vpow.pop %v3841
    %v3843 = vsub.f32 %v3789, %v3823
    %v3844 = vsub.f32 %v3790, %v3824
    %v3845 = vmul.f32 %v3843, 1.442695
    %v3846 = vpow.pop %v3845
    %v3847 = vmul.f32 %v3844, 1.442695
    %v3848 = vpow.pop %v3847
    %v3849 = vsub.f32 %v3815, %v3823
    %v3850 = vsub.f32 %v3816, %v3824
    %v3851 = vmul.f32 %v3849, 1.442695
    %v3852 = vpow.pop %v3851
    %v3853 = vmul.f32 %v3850, 1.442695
    %v3854 = vpow.pop %v3853
    %v3855 = vadd.f32 %v3828, %v3834
    %v3856 = vadd.f32 %v3830, %v3836
    %v3857 = vadd.f32 %v3855, %v3840
    %v3858 = vadd.f32 %v3856, %v3842
    %v3859 = vadd.f32 %v3857, %v3846
    %v3860 = vadd.f32 %v3858, %v3848
    %v3861 = vadd.f32 %v3859, %v3852
    %v3862 = vadd.f32 %v3860, %v3854
    %v3863 = vrcp.pop %v3861
    %v3864 = vrcp.pop %v3862
    %v3865 = vmul.f32 %v3828, %v3863
    %v3866 = vmul.f32 %v3830, %v3864
    %v3867 = vmul.f32 %v3834, %v3863
    %v3868 = vmul.f32 %v3836, %v3864
    %v3869 = vmul.f32 %v3840, %v3863
    %v3870 = vmul.f32 %v3842, %v3864
    %v3871 = vmul.f32 %v3846, %v3863
    %v3872 = vmul.f32 %v3848, %v3864
    %v3873 = vmul.f32 %v3852, %v3863
    %v3874 = vmul.f32 %v3854, %v3864
    %v3875 = vmul.f32 %v3489, %v3690
    %v3876 = vmul.f32 %v3490, %v3692
    %3879 = vrot.lane.b32.xlu0 %v3875, 112
    %v3880 = vpop.permute.xlu0 %3879
    %3881 = vrot.lane.b32.xlu0 %v3876, 112
    %v3882 = vpop.permute.xlu0 %3881
    %v3885 = vsel %vm2668, %v3880, 0.0
    %3886 = vadd.xlane.f32.xlu0 %v3885
    %v3887 = vpop.xlane.xlu0 %3886
    %v3888 = vsel %vm2668, %v3882, 0.0
    %3889 = vadd.xlane.f32.xlu0 %v3888
    %v3890 = vpop.xlane.xlu0 %3889
    %v3891 = vmul.f32 %v3887, 0.25
    %v3892 = vmul.f32 %v3890, 0.25
    %v3893 = vmul.f32 %v3489, %v3716
    %v3894 = vmul.f32 %v3490, %v3718
    %3897 = vrot.lane.b32.xlu0 %v3893, 112
    %v3898 = vpop.permute.xlu0 %3897
    %3899 = vrot.lane.b32.xlu0 %v3894, 112
    %v3900 = vpop.permute.xlu0 %3899
    %v3903 = vsel %vm2668, %v3898, 0.0
    %3904 = vadd.xlane.f32.xlu0 %v3903
    %v3905 = vpop.xlane.xlu0 %3904
    %v3906 = vsel %vm2668, %v3900, 0.0
    %3907 = vadd.xlane.f32.xlu0 %v3906
    %v3908 = vpop.xlane.xlu0 %3907
    %v3909 = vmul.f32 %v3905, 0.25
    %v3910 = vmul.f32 %v3908, 0.25
    %v3911 = vmul.f32 %v3489, %v3742
    %v3912 = vmul.f32 %v3490, %v3744
    %3915 = vrot.lane.b32.xlu0 %v3911, 112
    %v3916 = vpop.permute.xlu0 %3915
    %3917 = vrot.lane.b32.xlu0 %v3912, 112
    %v3918 = vpop.permute.xlu0 %3917
    %v3921 = vsel %vm2668, %v3916, 0.0
    %3922 = vadd.xlane.f32.xlu0 %v3921
    %v3923 = vpop.xlane.xlu0 %3922
    %v3924 = vsel %vm2668, %v3918, 0.0
    %3925 = vadd.xlane.f32.xlu0 %v3924
    %v3926 = vpop.xlane.xlu0 %3925
    %v3927 = vmul.f32 %v3923, 0.25
    %v3928 = vmul.f32 %v3926, 0.25
    %v3929 = vmul.f32 %v3489, %v3768
    %v3930 = vmul.f32 %v3490, %v3770
    %3933 = vrot.lane.b32.xlu0 %v3929, 112
    %v3934 = vpop.permute.xlu0 %3933
    %3935 = vrot.lane.b32.xlu0 %v3930, 112
    %v3936 = vpop.permute.xlu0 %3935
    %v3939 = vsel %vm2668, %v3934, 0.0
    %3940 = vadd.xlane.f32.xlu0 %v3939
    %v3941 = vpop.xlane.xlu0 %3940
    %v3942 = vsel %vm2668, %v3936, 0.0
    %3943 = vadd.xlane.f32.xlu0 %v3942
    %v3944 = vpop.xlane.xlu0 %3943
    %v3945 = vmul.f32 %v3941, 0.25
    %v3946 = vmul.f32 %v3944, 0.25
    %v3947 = vmul.f32 %v3489, %v3794
    %v3948 = vmul.f32 %v3490, %v3796
    %3951 = vrot.lane.b32.xlu0 %v3947, 112
    %v3952 = vpop.permute.xlu0 %3951
    %3953 = vrot.lane.b32.xlu0 %v3948, 112
    %v3954 = vpop.permute.xlu0 %3953
    %v3957 = vsel %vm2668, %v3952, 0.0
    %3958 = vadd.xlane.f32.xlu0 %v3957
    %v3959 = vpop.xlane.xlu0 %3958
    %v3960 = vsel %vm2668, %v3954, 0.0
    %3961 = vadd.xlane.f32.xlu0 %v3960
    %v3962 = vpop.xlane.xlu0 %3961
    %v3963 = vmul.f32 %v3959, 0.25
    %v3964 = vmul.f32 %v3962, 0.25
    %v3965 = vmax.f32 %v3891, %v3909
    %v3966 = vmax.f32 %v3892, %v3910
    %v3967 = vmax.f32 %v3965, %v3927
    %v3968 = vmax.f32 %v3966, %v3928
    %v3969 = vmax.f32 %v3967, %v3945
    %v3970 = vmax.f32 %v3968, %v3946
    %v3971 = vmax.f32 %v3969, %v3963
    %v3972 = vmax.f32 %v3970, %v3964
    %v3973 = vsub.f32 %v3891, %v3971
    %v3974 = vsub.f32 %v3892, %v3972
    %v3975 = vmul.f32 %v3973, 1.442695
    %v3976 = vpow.pop %v3975
    %v3977 = vmul.f32 %v3974, 1.442695
    %v3978 = vpow.pop %v3977
    %v3979 = vsub.f32 %v3909, %v3971
    %v3980 = vsub.f32 %v3910, %v3972
    %v3981 = vmul.f32 %v3979, 1.442695
    %v3982 = vpow.pop %v3981
    %v3983 = vmul.f32 %v3980, 1.442695
    %v3984 = vpow.pop %v3983
    %v3985 = vsub.f32 %v3927, %v3971
    %v3986 = vsub.f32 %v3928, %v3972
    %v3987 = vmul.f32 %v3985, 1.442695
    %v3988 = vpow.pop %v3987
    %v3989 = vmul.f32 %v3986, 1.442695
    %v3990 = vpow.pop %v3989
    %v3991 = vsub.f32 %v3945, %v3971
    %v3992 = vsub.f32 %v3946, %v3972
    %v3993 = vmul.f32 %v3991, 1.442695
    %v3994 = vpow.pop %v3993
    %v3995 = vmul.f32 %v3992, 1.442695
    %v3996 = vpow.pop %v3995
    %v3997 = vsub.f32 %v3963, %v3971
    %v3998 = vsub.f32 %v3964, %v3972
    %v3999 = vmul.f32 %v3997, 1.442695
    %v4000 = vpow.pop %v3999
    %v4001 = vmul.f32 %v3998, 1.442695
    %v4002 = vpow.pop %v4001
    %v4003 = vadd.f32 %v3976, %v3982
    %v4004 = vadd.f32 %v3978, %v3984
    %v4005 = vadd.f32 %v4003, %v3988
    %v4006 = vadd.f32 %v4004, %v3990
    %v4007 = vadd.f32 %v4005, %v3994
    %v4008 = vadd.f32 %v4006, %v3996
    %v4009 = vadd.f32 %v4007, %v4000
    %v4010 = vadd.f32 %v4008, %v4002
    %v4011 = vrcp.pop %v4009
    %v4012 = vrcp.pop %v4010
    %v4013 = vmul.f32 %v3976, %v4011
    %v4014 = vmul.f32 %v3978, %v4012
    %v4015 = vmul.f32 %v3982, %v4011
    %v4016 = vmul.f32 %v3984, %v4012
    %v4017 = vmul.f32 %v3988, %v4011
    %v4018 = vmul.f32 %v3990, %v4012
    %v4019 = vmul.f32 %v3994, %v4011
    %v4020 = vmul.f32 %v3996, %v4012
    %v4021 = vmul.f32 %v4000, %v4011
    %v4022 = vmul.f32 %v4002, %v4012
    %v4023 = vadd.f32 %v3865, %v4013
    %v4024 = vadd.f32 %v3866, %v4014
    %v4025 = vadd.f32 %v3867, %v4015
    %v4026 = vadd.f32 %v3868, %v4016
    %v4027 = vadd.f32 %v3869, %v4017
    %v4028 = vadd.f32 %v3870, %v4018
    %v4029 = vadd.f32 %v3871, %v4019
    %v4030 = vadd.f32 %v3872, %v4020
    %v4031 = vadd.f32 %v3873, %v4021
    %v4032 = vadd.f32 %v3874, %v4022
    %v4033 = vmul.f32 %v3491, %v3690
    %v4034 = vmul.f32 %v3492, %v3692
    %4037 = vrot.lane.b32.xlu0 %v4033, 112
    %v4038 = vpop.permute.xlu0 %4037
    %4039 = vrot.lane.b32.xlu0 %v4034, 112
    %v4040 = vpop.permute.xlu0 %4039
    %v4043 = vsel %vm2668, %v4038, 0.0
    %4044 = vadd.xlane.f32.xlu0 %v4043
    %v4045 = vpop.xlane.xlu0 %4044
    %v4046 = vsel %vm2668, %v4040, 0.0
    %4047 = vadd.xlane.f32.xlu0 %v4046
    %v4048 = vpop.xlane.xlu0 %4047
    %v4049 = vmul.f32 %v4045, 0.25
    %v4050 = vmul.f32 %v4048, 0.25
    %v4051 = vmul.f32 %v3491, %v3716
    %v4052 = vmul.f32 %v3492, %v3718
    %4055 = vrot.lane.b32.xlu0 %v4051, 112
    %v4056 = vpop.permute.xlu0 %4055
    %4057 = vrot.lane.b32.xlu0 %v4052, 112
    %v4058 = vpop.permute.xlu0 %4057
    %v4061 = vsel %vm2668, %v4056, 0.0
    %4062 = vadd.xlane.f32.xlu0 %v4061
    %v4063 = vpop.xlane.xlu0 %4062
    %v4064 = vsel %vm2668, %v4058, 0.0
    %4065 = vadd.xlane.f32.xlu0 %v4064
    %v4066 = vpop.xlane.xlu0 %4065
    %v4067 = vmul.f32 %v4063, 0.25
    %v4068 = vmul.f32 %v4066, 0.25
    %v4069 = vmul.f32 %v3491, %v3742
    %v4070 = vmul.f32 %v3492, %v3744
    %4073 = vrot.lane.b32.xlu0 %v4069, 112
    %v4074 = vpop.permute.xlu0 %4073
    %4075 = vrot.lane.b32.xlu0 %v4070, 112
    %v4076 = vpop.permute.xlu0 %4075
    %v4079 = vsel %vm2668, %v4074, 0.0
    %4080 = vadd.xlane.f32.xlu0 %v4079
    %v4081 = vpop.xlane.xlu0 %4080
    %v4082 = vsel %vm2668, %v4076, 0.0
    %4083 = vadd.xlane.f32.xlu0 %v4082
    %v4084 = vpop.xlane.xlu0 %4083
    %v4085 = vmul.f32 %v4081, 0.25
    %v4086 = vmul.f32 %v4084, 0.25
    %v4087 = vmul.f32 %v3491, %v3768
    %v4088 = vmul.f32 %v3492, %v3770
    %4091 = vrot.lane.b32.xlu0 %v4087, 112
    %v4092 = vpop.permute.xlu0 %4091
    %4093 = vrot.lane.b32.xlu0 %v4088, 112
    %v4094 = vpop.permute.xlu0 %4093
    %v4097 = vsel %vm2668, %v4092, 0.0
    %4098 = vadd.xlane.f32.xlu0 %v4097
    %v4099 = vpop.xlane.xlu0 %4098
    %v4100 = vsel %vm2668, %v4094, 0.0
    %4101 = vadd.xlane.f32.xlu0 %v4100
    %v4102 = vpop.xlane.xlu0 %4101
    %v4103 = vmul.f32 %v4099, 0.25
    %v4104 = vmul.f32 %v4102, 0.25
    %v4105 = vmul.f32 %v3491, %v3794
    %v4106 = vmul.f32 %v3492, %v3796
    %4109 = vrot.lane.b32.xlu0 %v4105, 112
    %v4110 = vpop.permute.xlu0 %4109
    %4111 = vrot.lane.b32.xlu0 %v4106, 112
    %v4112 = vpop.permute.xlu0 %4111
    %v4115 = vsel %vm2668, %v4110, 0.0
    %4116 = vadd.xlane.f32.xlu0 %v4115
    %v4117 = vpop.xlane.xlu0 %4116
    %v4118 = vsel %vm2668, %v4112, 0.0
    %4119 = vadd.xlane.f32.xlu0 %v4118
    %v4120 = vpop.xlane.xlu0 %4119
    %v4121 = vmul.f32 %v4117, 0.25
    %v4122 = vmul.f32 %v4120, 0.25
    %v4123 = vmax.f32 %v4049, %v4067
    %v4124 = vmax.f32 %v4050, %v4068
    %v4125 = vmax.f32 %v4123, %v4085
    %v4126 = vmax.f32 %v4124, %v4086
    %v4127 = vmax.f32 %v4125, %v4103
    %v4128 = vmax.f32 %v4126, %v4104
    %v4129 = vmax.f32 %v4127, %v4121
    %v4130 = vmax.f32 %v4128, %v4122
    %v4131 = vsub.f32 %v4049, %v4129
    %v4132 = vsub.f32 %v4050, %v4130
    %v4133 = vmul.f32 %v4131, 1.442695
    %v4134 = vpow.pop %v4133
    %v4135 = vmul.f32 %v4132, 1.442695
    %v4136 = vpow.pop %v4135
    %v4137 = vsub.f32 %v4067, %v4129
    %v4138 = vsub.f32 %v4068, %v4130
    %v4139 = vmul.f32 %v4137, 1.442695
    %v4140 = vpow.pop %v4139
    %v4141 = vmul.f32 %v4138, 1.442695
    %v4142 = vpow.pop %v4141
    %v4143 = vsub.f32 %v4085, %v4129
    %v4144 = vsub.f32 %v4086, %v4130
    %v4145 = vmul.f32 %v4143, 1.442695
    %v4146 = vpow.pop %v4145
    %v4147 = vmul.f32 %v4144, 1.442695
    %v4148 = vpow.pop %v4147
    %v4149 = vsub.f32 %v4103, %v4129
    %v4150 = vsub.f32 %v4104, %v4130
    %v4151 = vmul.f32 %v4149, 1.442695
    %v4152 = vpow.pop %v4151
    %v4153 = vmul.f32 %v4150, 1.442695
    %v4154 = vpow.pop %v4153
    %v4155 = vsub.f32 %v4121, %v4129
    %v4156 = vsub.f32 %v4122, %v4130
    %v4157 = vmul.f32 %v4155, 1.442695
    %v4158 = vpow.pop %v4157
    %v4159 = vmul.f32 %v4156, 1.442695
    %v4160 = vpow.pop %v4159
    %v4161 = vadd.f32 %v4134, %v4140
    %v4162 = vadd.f32 %v4136, %v4142
    %v4163 = vadd.f32 %v4161, %v4146
    %v4164 = vadd.f32 %v4162, %v4148
    %v4165 = vadd.f32 %v4163, %v4152
    %v4166 = vadd.f32 %v4164, %v4154
    %v4167 = vadd.f32 %v4165, %v4158
    %v4168 = vadd.f32 %v4166, %v4160
    %v4169 = vrcp.pop %v4167
    %v4170 = vrcp.pop %v4168
    %v4171 = vmul.f32 %v4134, %v4169
    %v4172 = vmul.f32 %v4136, %v4170
    %v4173 = vmul.f32 %v4140, %v4169
    %v4174 = vmul.f32 %v4142, %v4170
    %v4175 = vmul.f32 %v4146, %v4169
    %v4176 = vmul.f32 %v4148, %v4170
    %v4177 = vmul.f32 %v4152, %v4169
    %v4178 = vmul.f32 %v4154, %v4170
    %v4179 = vmul.f32 %v4158, %v4169
    %v4180 = vmul.f32 %v4160, %v4170
    %v4181 = vadd.f32 %v4023, %v4171
    %v4182 = vadd.f32 %v4024, %v4172
    %v4183 = vadd.f32 %v4025, %v4173
    %v4184 = vadd.f32 %v4026, %v4174
    %v4185 = vadd.f32 %v4027, %v4175
    %v4186 = vadd.f32 %v4028, %v4176
    %v4187 = vadd.f32 %v4029, %v4177
    %v4188 = vadd.f32 %v4030, %v4178
    %v4189 = vadd.f32 %v4031, %v4179
    %v4190 = vadd.f32 %v4032, %v4180
    %v4191 = vmul.f32 %v3493, %v3690
    %v4192 = vmul.f32 %v3494, %v3692
    %4195 = vrot.lane.b32.xlu0 %v4191, 112
    %v4196 = vpop.permute.xlu0 %4195
    %4197 = vrot.lane.b32.xlu0 %v4192, 112
    %v4198 = vpop.permute.xlu0 %4197
    %v4201 = vsel %vm2668, %v4196, 0.0
    %4202 = vadd.xlane.f32.xlu0 %v4201
    %v4203 = vpop.xlane.xlu0 %4202
    %v4204 = vsel %vm2668, %v4198, 0.0
    %4205 = vadd.xlane.f32.xlu0 %v4204
    %v4206 = vpop.xlane.xlu0 %4205
    %v4207 = vmul.f32 %v4203, 0.25
    %v4208 = vmul.f32 %v4206, 0.25
    %v4209 = vmul.f32 %v3493, %v3716
    %v4210 = vmul.f32 %v3494, %v3718
    %4213 = vrot.lane.b32.xlu0 %v4209, 112
    %v4214 = vpop.permute.xlu0 %4213
    %4215 = vrot.lane.b32.xlu0 %v4210, 112
    %v4216 = vpop.permute.xlu0 %4215
    %v4219 = vsel %vm2668, %v4214, 0.0
    %4220 = vadd.xlane.f32.xlu0 %v4219
    %v4221 = vpop.xlane.xlu0 %4220
    %v4222 = vsel %vm2668, %v4216, 0.0
    %4223 = vadd.xlane.f32.xlu0 %v4222
    %v4224 = vpop.xlane.xlu0 %4223
    %v4225 = vmul.f32 %v4221, 0.25
    %v4226 = vmul.f32 %v4224, 0.25
    %v4227 = vmul.f32 %v3493, %v3742
    %v4228 = vmul.f32 %v3494, %v3744
    %4231 = vrot.lane.b32.xlu0 %v4227, 112
    %v4232 = vpop.permute.xlu0 %4231
    %4233 = vrot.lane.b32.xlu0 %v4228, 112
    %v4234 = vpop.permute.xlu0 %4233
    %v4237 = vsel %vm2668, %v4232, 0.0
    %4238 = vadd.xlane.f32.xlu0 %v4237
    %v4239 = vpop.xlane.xlu0 %4238
    %v4240 = vsel %vm2668, %v4234, 0.0
    %4241 = vadd.xlane.f32.xlu0 %v4240
    %v4242 = vpop.xlane.xlu0 %4241
    %v4243 = vmul.f32 %v4239, 0.25
    %v4244 = vmul.f32 %v4242, 0.25
    %v4245 = vmul.f32 %v3493, %v3768
    %v4246 = vmul.f32 %v3494, %v3770
    %4249 = vrot.lane.b32.xlu0 %v4245, 112
    %v4250 = vpop.permute.xlu0 %4249
    %4251 = vrot.lane.b32.xlu0 %v4246, 112
    %v4252 = vpop.permute.xlu0 %4251
    %v4255 = vsel %vm2668, %v4250, 0.0
    %4256 = vadd.xlane.f32.xlu0 %v4255
    %v4257 = vpop.xlane.xlu0 %4256
    %v4258 = vsel %vm2668, %v4252, 0.0
    %4259 = vadd.xlane.f32.xlu0 %v4258
    %v4260 = vpop.xlane.xlu0 %4259
    %v4261 = vmul.f32 %v4257, 0.25
    %v4262 = vmul.f32 %v4260, 0.25
    %v4263 = vmul.f32 %v3493, %v3794
    %v4264 = vmul.f32 %v3494, %v3796
    %4267 = vrot.lane.b32.xlu0 %v4263, 112
    %v4268 = vpop.permute.xlu0 %4267
    %4269 = vrot.lane.b32.xlu0 %v4264, 112
    %v4270 = vpop.permute.xlu0 %4269
    %v4273 = vsel %vm2668, %v4268, 0.0
    %4274 = vadd.xlane.f32.xlu0 %v4273
    %v4275 = vpop.xlane.xlu0 %4274
    %v4276 = vsel %vm2668, %v4270, 0.0
    %4277 = vadd.xlane.f32.xlu0 %v4276
    %v4278 = vpop.xlane.xlu0 %4277
    %v4279 = vmul.f32 %v4275, 0.25
    %v4280 = vmul.f32 %v4278, 0.25
    %v4281 = vmax.f32 %v4207, %v4225
    %v4282 = vmax.f32 %v4208, %v4226
    %v4283 = vmax.f32 %v4281, %v4243
    %v4284 = vmax.f32 %v4282, %v4244
    %v4285 = vmax.f32 %v4283, %v4261
    %v4286 = vmax.f32 %v4284, %v4262
    %v4287 = vmax.f32 %v4285, %v4279
    %v4288 = vmax.f32 %v4286, %v4280
    %v4289 = vsub.f32 %v4207, %v4287
    %v4290 = vsub.f32 %v4208, %v4288
    %v4291 = vmul.f32 %v4289, 1.442695
    %v4292 = vpow.pop %v4291
    %v4293 = vmul.f32 %v4290, 1.442695
    %v4294 = vpow.pop %v4293
    %v4295 = vsub.f32 %v4225, %v4287
    %v4296 = vsub.f32 %v4226, %v4288
    %v4297 = vmul.f32 %v4295, 1.442695
    %v4298 = vpow.pop %v4297
    %v4299 = vmul.f32 %v4296, 1.442695
    %v4300 = vpow.pop %v4299
    %v4301 = vsub.f32 %v4243, %v4287
    %v4302 = vsub.f32 %v4244, %v4288
    %v4303 = vmul.f32 %v4301, 1.442695
    %v4304 = vpow.pop %v4303
    %v4305 = vmul.f32 %v4302, 1.442695
    %v4306 = vpow.pop %v4305
    %v4307 = vsub.f32 %v4261, %v4287
    %v4308 = vsub.f32 %v4262, %v4288
    %v4309 = vmul.f32 %v4307, 1.442695
    %v4310 = vpow.pop %v4309
    %v4311 = vmul.f32 %v4308, 1.442695
    %v4312 = vpow.pop %v4311
    %v4313 = vsub.f32 %v4279, %v4287
    %v4314 = vsub.f32 %v4280, %v4288
    %v4315 = vmul.f32 %v4313, 1.442695
    %v4316 = vpow.pop %v4315
    %v4317 = vmul.f32 %v4314, 1.442695
    %v4318 = vpow.pop %v4317
    %v4319 = vadd.f32 %v4292, %v4298
    %v4320 = vadd.f32 %v4294, %v4300
    %v4321 = vadd.f32 %v4319, %v4304
    %v4322 = vadd.f32 %v4320, %v4306
    %v4323 = vadd.f32 %v4321, %v4310
    %v4324 = vadd.f32 %v4322, %v4312
    %v4325 = vadd.f32 %v4323, %v4316
    %v4326 = vadd.f32 %v4324, %v4318
    %v4327 = vrcp.pop %v4325
    %v4328 = vrcp.pop %v4326
    %v4329 = vmul.f32 %v4292, %v4327
    %v4330 = vmul.f32 %v4294, %v4328
    %v4331 = vmul.f32 %v4298, %v4327
    %v4332 = vmul.f32 %v4300, %v4328
    %v4333 = vmul.f32 %v4304, %v4327
    %v4334 = vmul.f32 %v4306, %v4328
    %v4335 = vmul.f32 %v4310, %v4327
    %v4336 = vmul.f32 %v4312, %v4328
    %v4337 = vmul.f32 %v4316, %v4327
    %v4338 = vmul.f32 %v4318, %v4328
    %v4339 = vadd.f32 %v4181, %v4329
    %v4340 = vadd.f32 %v4182, %v4330
    %v4341 = vadd.f32 %v4183, %v4331
    %v4342 = vadd.f32 %v4184, %v4332
    %v4343 = vadd.f32 %v4185, %v4333
    %v4344 = vadd.f32 %v4186, %v4334
    %v4345 = vadd.f32 %v4187, %v4335
    %v4346 = vadd.f32 %v4188, %v4336
    %v4347 = vadd.f32 %v4189, %v4337
    %v4348 = vadd.f32 %v4190, %v4338
    %v4349 = vmul.f32 %v3495, %v3690
    %v4350 = vmul.f32 %v3496, %v3692
    %4353 = vrot.lane.b32.xlu0 %v4349, 112
    %v4354 = vpop.permute.xlu0 %4353
    %4355 = vrot.lane.b32.xlu0 %v4350, 112
    %v4356 = vpop.permute.xlu0 %4355
    %v4359 = vsel %vm2668, %v4354, 0.0
    %4360 = vadd.xlane.f32.xlu0 %v4359
    %v4361 = vpop.xlane.xlu0 %4360
    %v4362 = vsel %vm2668, %v4356, 0.0
    %4363 = vadd.xlane.f32.xlu0 %v4362
    %v4364 = vpop.xlane.xlu0 %4363
    %v4365 = vmul.f32 %v4361, 0.25
    %v4366 = vmul.f32 %v4364, 0.25
    %v4367 = vmul.f32 %v3495, %v3716
    %v4368 = vmul.f32 %v3496, %v3718
    %4371 = vrot.lane.b32.xlu0 %v4367, 112
    %v4372 = vpop.permute.xlu0 %4371
    %4373 = vrot.lane.b32.xlu0 %v4368, 112
    %v4374 = vpop.permute.xlu0 %4373
    %v4377 = vsel %vm2668, %v4372, 0.0
    %4378 = vadd.xlane.f32.xlu0 %v4377
    %v4379 = vpop.xlane.xlu0 %4378
    %v4380 = vsel %vm2668, %v4374, 0.0
    %4381 = vadd.xlane.f32.xlu0 %v4380
    %v4382 = vpop.xlane.xlu0 %4381
    %v4383 = vmul.f32 %v4379, 0.25
    %v4384 = vmul.f32 %v4382, 0.25
    %v4385 = vmul.f32 %v3495, %v3742
    %v4386 = vmul.f32 %v3496, %v3744
    %4389 = vrot.lane.b32.xlu0 %v4385, 112
    %v4390 = vpop.permute.xlu0 %4389
    %4391 = vrot.lane.b32.xlu0 %v4386, 112
    %v4392 = vpop.permute.xlu0 %4391
    %v4395 = vsel %vm2668, %v4390, 0.0
    %4396 = vadd.xlane.f32.xlu0 %v4395
    %v4397 = vpop.xlane.xlu0 %4396
    %v4398 = vsel %vm2668, %v4392, 0.0
    %4399 = vadd.xlane.f32.xlu0 %v4398
    %v4400 = vpop.xlane.xlu0 %4399
    %v4401 = vmul.f32 %v4397, 0.25
    %v4402 = vmul.f32 %v4400, 0.25
    %v4403 = vmul.f32 %v3495, %v3768
    %v4404 = vmul.f32 %v3496, %v3770
    %4407 = vrot.lane.b32.xlu0 %v4403, 112
    %v4408 = vpop.permute.xlu0 %4407
    %4409 = vrot.lane.b32.xlu0 %v4404, 112
    %v4410 = vpop.permute.xlu0 %4409
    %v4413 = vsel %vm2668, %v4408, 0.0
    %4414 = vadd.xlane.f32.xlu0 %v4413
    %v4415 = vpop.xlane.xlu0 %4414
    %v4416 = vsel %vm2668, %v4410, 0.0
    %4417 = vadd.xlane.f32.xlu0 %v4416
    %v4418 = vpop.xlane.xlu0 %4417
    %v4419 = vmul.f32 %v4415, 0.25
    %v4420 = vmul.f32 %v4418, 0.25
    %v4421 = vmul.f32 %v3495, %v3794
    %v4422 = vmul.f32 %v3496, %v3796
    %4425 = vrot.lane.b32.xlu0 %v4421, 112
    %v4426 = vpop.permute.xlu0 %4425
    %4427 = vrot.lane.b32.xlu0 %v4422, 112
    %v4428 = vpop.permute.xlu0 %4427
    %v4431 = vsel %vm2668, %v4426, 0.0
    %4432 = vadd.xlane.f32.xlu0 %v4431
    %v4433 = vpop.xlane.xlu0 %4432
    %v4434 = vsel %vm2668, %v4428, 0.0
    %4435 = vadd.xlane.f32.xlu0 %v4434
    %v4436 = vpop.xlane.xlu0 %4435
    %v4437 = vmul.f32 %v4433, 0.25
    %v4438 = vmul.f32 %v4436, 0.25
    %v4439 = vmax.f32 %v4365, %v4383
    %v4440 = vmax.f32 %v4366, %v4384
    %v4441 = vmax.f32 %v4439, %v4401
    %v4442 = vmax.f32 %v4440, %v4402
    %v4443 = vmax.f32 %v4441, %v4419
    %v4444 = vmax.f32 %v4442, %v4420
    %v4445 = vmax.f32 %v4443, %v4437
    %v4446 = vmax.f32 %v4444, %v4438
    %v4447 = vsub.f32 %v4365, %v4445
    %v4448 = vsub.f32 %v4366, %v4446
    %v4449 = vmul.f32 %v4447, 1.442695
    %v4450 = vpow.pop %v4449
    %v4451 = vmul.f32 %v4448, 1.442695
    %v4452 = vpow.pop %v4451
    %v4453 = vsub.f32 %v4383, %v4445
    %v4454 = vsub.f32 %v4384, %v4446
    %v4455 = vmul.f32 %v4453, 1.442695
    %v4456 = vpow.pop %v4455
    %v4457 = vmul.f32 %v4454, 1.442695
    %v4458 = vpow.pop %v4457
    %v4459 = vsub.f32 %v4401, %v4445
    %v4460 = vsub.f32 %v4402, %v4446
    %v4461 = vmul.f32 %v4459, 1.442695
    %v4462 = vpow.pop %v4461
    %v4463 = vmul.f32 %v4460, 1.442695
    %v4464 = vpow.pop %v4463
    %v4465 = vsub.f32 %v4419, %v4445
    %v4466 = vsub.f32 %v4420, %v4446
    %v4467 = vmul.f32 %v4465, 1.442695
    %v4468 = vpow.pop %v4467
    %v4469 = vmul.f32 %v4466, 1.442695
    %v4470 = vpow.pop %v4469
    %v4471 = vsub.f32 %v4437, %v4445
    %v4472 = vsub.f32 %v4438, %v4446
    %v4473 = vmul.f32 %v4471, 1.442695
    %v4474 = vpow.pop %v4473
    %v4475 = vmul.f32 %v4472, 1.442695
    %v4476 = vpow.pop %v4475
    %v4477 = vadd.f32 %v4450, %v4456
    %v4478 = vadd.f32 %v4452, %v4458
    %v4479 = vadd.f32 %v4477, %v4462
    %v4480 = vadd.f32 %v4478, %v4464
    %v4481 = vadd.f32 %v4479, %v4468
    %v4482 = vadd.f32 %v4480, %v4470
    %v4483 = vadd.f32 %v4481, %v4474
    %v4484 = vadd.f32 %v4482, %v4476
    %v4485 = vrcp.pop %v4483
    %v4486 = vrcp.pop %v4484
    %v4487 = vmul.f32 %v4450, %v4485
    %v4488 = vmul.f32 %v4452, %v4486
    %v4489 = vmul.f32 %v4456, %v4485
    %v4490 = vmul.f32 %v4458, %v4486
    %v4491 = vmul.f32 %v4462, %v4485
    %v4492 = vmul.f32 %v4464, %v4486
    %v4493 = vmul.f32 %v4468, %v4485
    %v4494 = vmul.f32 %v4470, %v4486
    %v4495 = vmul.f32 %v4474, %v4485
    %v4496 = vmul.f32 %v4476, %v4486
    %v4497 = vadd.f32 %v4339, %v4487
    %v4498 = vadd.f32 %v4340, %v4488
    %v4499 = vadd.f32 %v4341, %v4489
    %v4500 = vadd.f32 %v4342, %v4490
    %v4501 = vadd.f32 %v4343, %v4491
    %v4502 = vadd.f32 %v4344, %v4492
    %v4503 = vadd.f32 %v4345, %v4493
    %v4504 = vadd.f32 %v4346, %v4494
    %v4505 = vadd.f32 %v4347, %v4495
    %v4506 = vadd.f32 %v4348, %v4496
    %v4507 = vmul.f32 %v4497, 0.2
    %v4508 = vmul.f32 %v4498, 0.2
    %v4509 = vmul.f32 %v4507, %v197
    %v4510 = vmul.f32 %v4508, %v200
    %v4511 = vmul.f32 %v4499, 0.2
    %v4512 = vmul.f32 %v4500, 0.2
    %v4513 = vmul.f32 %v4511, %v205
    %v4514 = vmul.f32 %v4512, %v208
    %v4515 = vadd.f32 %v4509, %v4513
    %v4516 = vadd.f32 %v4510, %v4514
    %v4517 = vmul.f32 %v4501, 0.2
    %v4518 = vmul.f32 %v4502, 0.2
    %v4519 = vmul.f32 %v4517, %v213
    %v4520 = vmul.f32 %v4518, %v216
    %v4521 = vadd.f32 %v4515, %v4519
    %v4522 = vadd.f32 %v4516, %v4520
    %v4523 = vmul.f32 %v4503, 0.2
    %v4524 = vmul.f32 %v4504, 0.2
    %v4525 = vmul.f32 %v4523, %v221
    %v4526 = vmul.f32 %v4524, %v224
    %v4527 = vadd.f32 %v4521, %v4525
    %v4528 = vadd.f32 %v4522, %v4526
    %v4529 = vmul.f32 %v4505, 0.2
    %v4530 = vmul.f32 %v4506, 0.2
    %v4531 = vmul.f32 %v4529, %v229
    %v4532 = vmul.f32 %v4530, %v232
    %v4533 = vadd.f32 %v4527, %v4531
    %v4534 = vadd.f32 %v4528, %v4532
    %4537 = vrot.lane.b32.xlu0 %v3305, 64
    %v4538 = vpop.permute.xlu0 %4537
    %4539 = vrot.lane.b32.xlu0 %v3306, 64
    %v4540 = vpop.permute.xlu0 %4539
    %4545 = vrot.lane.b32.xlu0 %v4533, 64
    %v4546 = vpop.permute.xlu0 %4545
    %4547 = vrot.lane.b32.xlu0 %v4534, 64
    %v4548 = vpop.permute.xlu0 %4547
    %v4551 = vsel %vm2668, %v4538, %v4546
    %v4552 = vsel %vm2668, %v4540, %v4548
    %v4553 = vpack.c.bf16 %v4552, %v4551
    %v4554 = vld [vmem:[#allocation8] sm:$0xf]
    %v4555 = vld [vmem:[#allocation8 + $0x4] sm:$0xf]
    %v4556 = vld [vmem:[#allocation8 + $0x8] sm:$0xf]
    %v4557 = vld [vmem:[#allocation8 + $0xc] sm:$0xf]
    %v4558 = vld [vmem:[%s4] sm:$0x1]
    %v4560 = vlaneseq
    %v4561 = vshrl.u32 %v4560, 7
    %v4562 = vsub.s32 0, %v4561
    %v4563 = vrot.slane %v4558, %v4562
    %v4569 = vunpack.c.l.b16 %v4554
    %v4570 = vunpack.c.l.b16 %v4555
    %v4571 = vunpack.c.l.b16 %v4556
    %v4572 = vunpack.c.l.b16 %v4557
    %v4573 = vpack.c.b16 %v4570, %v4569
    %v4574 = vpack.c.b16 %v4572, %v4571
    %vm4577 = vcmask 261120
    %v4579 = vsel %vm4577, %v4553, 0
    %4581 = vmatprep.subr.bf16.mxu0 0
    %4582 = vmatpush1.bf16.msra.mxu0 %v4573
    %4583 = vmatprep.subr.bf16.mxu0 0
    %4584 = vmatpush1.bf16.msra.mxu0 %v4574
    %4585 = vmatprep.subr.bf16.mxu0 0
    %4586 = vmatpush1.bf16.msra.mxu0 0
    %4587 = vmatprep.subr.bf16.mxu0 0
    %4588 = vmatpush1.bf16.msra.mxu0 0
    %4589 = vmatprep.subr.bf16.mxu0 0
    %4590 = vmatpush1.bf16.msra.mxu0 0
    %4591 = vmatprep.subr.bf16.mxu0 0
    %4592 = vmatpush1.bf16.msra.mxu0 0
    %4593 = vmatprep.subr.bf16.mxu0 0
    %4594 = vmatpush1.bf16.msra.mxu0 0
    %4595 = vmatprep.subr.bf16.mxu0 0
    %4596 = vmatpush1.bf16.msra.mxu0 0
    %4597 = vmatprep.subr.bf16.mxu0 0
    %4598 = vmatpush1.bf16.msra.mxu0 0
    %4599 = vmatprep.subr.bf16.mxu0 0
    %4600 = vmatpush1.bf16.msra.mxu0 0
    %4601 = vmatprep.subr.bf16.mxu0 0
    %4602 = vmatpush1.bf16.msra.mxu0 0
    %4603 = vmatprep.subr.bf16.mxu0 0
    %4604 = vmatpush1.bf16.msra.mxu0 0
    %4605 = vmatprep.subr.bf16.mxu0 0
    %4606 = vmatpush1.bf16.msra.mxu0 0
    %4607 = vmatprep.subr.bf16.mxu0 0
    %4608 = vmatpush1.bf16.msra.mxu0 0
    %4609 = vmatprep.subr.bf16.mxu0 0
    %4610 = vmatpush1.bf16.msra.mxu0 0
    %4611 = vmatprep.subr.bf16.mxu0 0
    %4612 = vmatpush1.bf16.msra.mxu0 0
    %4613 = vmatprep.mubr.bf16.mxu0 0
    %4614 = vmatmul.mubr.bf16.gmra.mrb[0].mxu0 %v4579
    %v4615 = vpop.f32.mrb[0].mxu0
    %v4616 = vadd.f32 %v4563, %v4615
    %v4617 = vpop.f32.mrb[0].mxu0
    %v4618 = vpop.f32.mrb[0].mxu0
    %v4619 = vadd.f32 %v4563, %v4618
    %v4620 = vpop.f32.mrb[0].mxu0
    %4621 = vdwg.mxu0
    %4622 = vst.msk [vmem:[#allocation10] sm:$0xff] %vm4577, %v4616
    %4623 = vst.msk [vmem:[#allocation10 + $0x8] sm:$0xff] %vm4577, %v4619
    // Predicated region
    $region38: #{tpu_custom_call.1} parent=1 // pred_check
      _
    $region39: #{tpu_custom_call.1} parent=1 // pred_check_branch
      %4625 = sbr.rel (0) target = $region41
    $region40: #{tpu_custom_call.1} parent=1 // pred_region
      %s4627 = ssub.s32 256, 256
      %4628 = vsyncadd [#allocation4], %s4627
      %s4629 = sshll.u32 [#allocation10], 4
      %s4630 = int_to_ptr.vmem [resolvable:$true] %s4629
      %4635 = dma.vmem_to_hbm [thread:$0]  %s4630, 256, %s5, [#allocation4], 128, 128, 8
    $region41: #{tpu_custom_call.1} parent=1 // pred_fallthru
      _
    // Predicated region
    $region42: #{tpu_custom_call.1} parent=1 // pred_check
      _
    $region43: #{tpu_custom_call.1} parent=1 // pred_check_branch
      %4637 = sbr.rel (0) target = $region45
    $region44: #{tpu_custom_call.1} parent=1 // pred_region
      %4638 = dma.done [#allocation4], 256
    $region45: #{tpu_custom_call.1} parent=1 // pred_fallthru
      _
    %4639 = vsyncpa [#allocation3], 1
    %4640 = vsyncpa [#allocation6], 1
    %4641 = vsyncpa [#allocation9], 1
    %4642 = vsyncpa [#allocation4], 1

</llo_original>
